<compile_context>
chip_gen: v5e
topology: v5e:2x2
jax: 0.10.0
libtpu: 0.0.40
codegen_flags: <defaults>
</compile_context>

<pallas_src>
import functools

import jax
import jax.numpy as jnp
from jax.experimental import pallas as pl
from jax.experimental.pallas import tpu as pltpu


def _round_up(x, m):
    return ((x + m - 1) // m) * m


def _gcn_kernel(adj_ref, h_src_ref, h_dst_ref, w_self_ref, w_neigh_ref, b_ref,
                out_ref, acc_ref, deg_ref, *, tk, resident):
    k = pl.program_id(1)

    @pl.when(k == 0)
    def _():
        acc_ref[...] = jnp.zeros_like(acc_ref)
        deg_ref[...] = jnp.zeros_like(deg_ref)

    # int8 (0/1) adjacency tile -> bf16 upcast on the VPU (hides under DMA),
    # then bf16 x bf16 MXU matmul with f32 accumulation in VMEM scratch.
    adj_bf = adj_ref[...].astype(jnp.bfloat16)
    if resident:
        start = pl.multiple_of(k * tk, tk)
        h_blk = h_src_ref[pl.ds(start, tk), :]          # slice of VMEM-resident h_src
    else:
        h_blk = h_src_ref[...]                          # streamed (tk, F) tile
    acc_ref[...] += jnp.dot(adj_bf, h_blk, preferred_element_type=jnp.float32)

    # In-kernel degree accumulation (exact: padded adj entries are zero).
    deg_ref[...] += jnp.sum(adj_ref[...].astype(jnp.float32), axis=1, keepdims=True)

    @pl.when(k == pl.num_programs(1) - 1)
    def _():
        # mean = sum * 1/max(deg, 1); approx reciprocal goes to the EUP slot.
        inv = pl.reciprocal(jnp.maximum(deg_ref[...], 1.0), approx=True)
        neigh = acc_ref[...] * inv                      # [tm, F] f32
        # Linear(concat([h_dst, neigh])) == h_dst @ W_self + neigh @ W_neigh + b
        out = (jnp.dot(h_dst_ref[...], w_self_ref[...],
                       preferred_element_type=jnp.float32)
               + jnp.dot(neigh, w_neigh_ref[...],
                         preferred_element_type=jnp.float32)
               + b_ref[...])
        out_ref[...] = out.astype(out_ref.dtype)


@functools.partial(jax.jit, static_argnames=("tm", "tk"))
def gcn_layer(adj, h, weight, bias, *, tm=512, tk=2048):
    """adj: [Nd, Ns] (0/1), h: [Ns, F] f32,
    weight: [O, 2F] (PyTorch nn.Linear layout, concat order [h_dst, h_neigh]),
    bias: [O] f32.  Returns [Nd, O] f32."""
    num_dst, num_src = adj.shape
    _, in_feats = h.shape
    out_feats = weight.shape[0]

    # Clamp tiles to the (rounded-up) problem so small graphs stay single/few-tile.
    tm_eff = min(tm, _round_up(num_dst, 256))
    tk_eff = min(tk, _round_up(num_src, 512))

    nd_p = _round_up(num_dst, tm_eff)
    ns_p = _round_up(num_src, tk_eff)
    o_p = _round_up(out_feats, 128)          # lane-dense output slab

    # int8 adjacency in HBM (0/1 values), zero-padded.
    adj_p = jnp.zeros((nd_p, ns_p), jnp.int8)
    adj_p = adj_p.at[:num_dst, :num_src].set(adj.astype(jnp.int8))
    # bf16 source features (halves the h_src stream); zero pad rows are
    # multiplied by zero adjacency columns, so exact.
    h_src_p = jnp.zeros((ns_p, in_feats), jnp.bfloat16)
    h_src_p = h_src_p.at[:num_src].set(h.astype(jnp.bfloat16))
    # f32 destination ("self") features.
    h_dst_p = jnp.zeros((nd_p, in_feats), jnp.float32)
    h_dst_p = h_dst_p.at[:num_dst].set(h[:num_dst])
    # Split weight: W_self acts on h_dst, W_neigh on the neighbor mean.
    w_self = jnp.zeros((in_feats, o_p), jnp.float32)
    w_self = w_self.at[:, :out_feats].set(weight[:, :in_feats].T)
    w_neigh = jnp.zeros((in_feats, o_p), jnp.float32)
    w_neigh = w_neigh.at[:, :out_feats].set(weight[:, in_feats:].T)
    b_p = jnp.zeros((1, o_p), jnp.float32)
    b_p = b_p.at[0, :out_feats].set(bias)

    # Keep h_src VMEM-resident (DMA'd once) if it fits a conservative budget
    # (double-buffer-safe even on v7x's 64 MiB VMEM); otherwise stream tiles.
    h_src_bytes = ns_p * in_feats * 2
    resident = h_src_bytes <= 12 * 1024 * 1024
    if resident:
        h_src_spec = pl.BlockSpec((ns_p, in_feats), lambda i, k: (0, 0))
    else:
        h_src_spec = pl.BlockSpec((tk_eff, in_feats), lambda i, k: (k, 0))

    grid = (nd_p // tm_eff, ns_p // tk_eff)
    kernel = functools.partial(_gcn_kernel, tk=tk_eff, resident=resident)

    out = pl.pallas_call(
        kernel,
        out_shape=jax.ShapeDtypeStruct((nd_p, o_p), jnp.float32),
        grid_spec=pltpu.PrefetchScalarGridSpec(
            num_scalar_prefetch=0,
            grid=grid,
            in_specs=[
                pl.BlockSpec((tm_eff, tk_eff), lambda i, k: (i, k)),     # adj tile (int8)
                h_src_spec,                                              # src features (bf16)
                pl.BlockSpec((tm_eff, in_feats), lambda i, k: (i, 0)),   # dst features (f32)
                pl.BlockSpec((in_feats, o_p), lambda i, k: (0, 0)),      # W_self
                pl.BlockSpec((in_feats, o_p), lambda i, k: (0, 0)),      # W_neigh
                pl.BlockSpec((1, o_p), lambda i, k: (0, 0)),             # bias
            ],
            out_specs=pl.BlockSpec((tm_eff, o_p), lambda i, k: (i, 0)),
            scratch_shapes=[
                pltpu.VMEM((tm_eff, in_feats), jnp.float32),   # aggregation accumulator
                pltpu.VMEM((tm_eff, 1), jnp.float32),          # degree accumulator
            ],
        ),
        compiler_params=pltpu.CompilerParams(
            dimension_semantics=("parallel", "arbitrary"),
            vmem_limit_bytes=48 * 1024 * 1024),
    )(adj_p, h_src_p, h_dst_p, w_self, w_neigh, b_p)

    return out[:num_dst, :out_feats]


if __name__ == "__main__":
    # Small synthetic problem consistent with the module; tile sizes chosen so
    # the test exercises a multi-tile (2 x 2) grid.
    num_src, num_dst = 2048, 512      # src nodes, dst nodes (dst nodes are h[:num_dst])
    in_feats, out_feats = 32, 32

    key = jax.random.PRNGKey(0)
    k_h, k_adj, k_w, k_b = jax.random.split(key, 4)

    # Node features.
    h = jax.random.normal(k_h, (num_src, in_feats), dtype=jnp.float32)

    # Random bipartite block adjacency (dst x src), ~10% density.
    adj = (jax.random.uniform(k_adj, (num_dst, num_src)) < 0.10).astype(jnp.float32)

    # nn.Linear(in_feats * 2, out_feats): W [O, 2F], b [O]; PyTorch default uniform init.
    fan_in = 2 * in_feats
    bound = 1.0 / jnp.sqrt(fan_in)
    W = jax.random.uniform(k_w, (out_feats, 2 * in_feats),
                           minval=-bound, maxval=bound, dtype=jnp.float32)
    b = jax.random.uniform(k_b, (out_feats,),
                           minval=-bound, maxval=bound, dtype=jnp.float32)

    out = gcn_layer(adj, h, W, b, tm=256, tk=1024)
    out = jax.block_until_ready(out)

    # Pure-JAX reference.  The kernel aggregates bf16 source features with f32
    # accumulation, so the reference applies the same bf16 rounding to h for the
    # neighbor path (adjacency is 0/1 -> exact in bf16/int8); self path stays f32.
    h_bf = h.astype(jnp.bfloat16).astype(jnp.float32)
    deg = jnp.maximum(adj.sum(axis=1, keepdims=True), 1.0)
    neigh_ref = (adj @ h_bf) / deg
    ref = jnp.concatenate([h[:num_dst], neigh_ref], axis=1) @ W.T + b

    assert out.shape == (num_dst, out_feats)
    err = float(jnp.max(jnp.abs(out - ref)))
    assert jnp.allclose(out, ref, atol=3e-3, rtol=3e-3), err

    print("KERNEL_OK")
</pallas_src>

<mosaic_0001>
module attributes {stable_mosaic.version = 11 : i64} {
  func.func @_gcn_kernel(%arg0: i32, %arg1: i32, %arg2: memref<256x1024xi8, #tpu.memory_space<vmem>>, %arg3: memref<2048x32xbf16, #tpu.memory_space<vmem>>, %arg4: memref<256x32xf32, #tpu.memory_space<vmem>>, %arg5: memref<32x128xf32, #tpu.memory_space<vmem>>, %arg6: memref<32x128xf32, #tpu.memory_space<vmem>>, %arg7: memref<1x128xf32, #tpu.memory_space<vmem>>, %arg8: memref<256x128xf32, #tpu.memory_space<vmem>>, %arg9: memref<256x32xf32, #tpu.memory_space<vmem>>, %arg10: memref<256x1xf32, #tpu.memory_space<vmem>>) attributes {dimension_semantics = [#tpu.dimension_semantics<parallel>, #tpu.dimension_semantics<arbitrary>], iteration_bounds = array<i64: 2, 2>, scalar_prefetch = 0 : i64, scratch_operands = 2 : i64, tpu.core_type = #tpu.core_type<tc>, window_params = [{transform_indices = @transform_0, window_bounds = array<i64: 256, 1024>}, {pipeline_mode = #tpu.pipeline_mode<synchronous>, transform_indices = @transform_1, window_bounds = array<i64: 2048, 32>}, {transform_indices = @transform_2, window_bounds = array<i64: 256, 32>}, {pipeline_mode = #tpu.pipeline_mode<synchronous>, transform_indices = @transform_3, window_bounds = array<i64: 32, 128>}, {pipeline_mode = #tpu.pipeline_mode<synchronous>, transform_indices = @transform_4, window_bounds = array<i64: 32, 128>}, {pipeline_mode = #tpu.pipeline_mode<synchronous>, transform_indices = @transform_5, window_bounds = array<i64: 1, 128>}, {transform_indices = @transform_6, window_bounds = array<i64: 256, 128>}]} {
    %c0_i32 = arith.constant 0 : i32
    %0 = arith.cmpi eq, %arg1, %c0_i32 : i32
    %1 = arith.extui %0 : i1 to i32
    %c0_i32_0 = arith.constant 0 : i32
    %2 = arith.cmpi ne, %1, %c0_i32_0 : i32
    scf.if %2 {
      %cst_15 = arith.constant 0.000000e+00 : f32
      %23 = vector.broadcast %cst_15 : f32 to vector<256x32xf32>
      %c0_16 = arith.constant 0 : index
      %c0_17 = arith.constant 0 : index
      %24 = vector.load %arg9[%c0_16, %c0_17] : memref<256x32xf32, #tpu.memory_space<vmem>>, vector<256x32xf32>
      tpu.vector_store %arg9[%c0_16, %c0_17], %23 {strides = array<i32>} : memref<256x32xf32, #tpu.memory_space<vmem>>, vector<256x32xf32>,
      %cst_18 = arith.constant 0.000000e+00 : f32
      %25 = vector.broadcast %cst_18 : f32 to vector<256x1xf32>
      %c0_19 = arith.constant 0 : index
      %c0_20 = arith.constant 0 : index
      %26 = vector.load %arg10[%c0_19, %c0_20] : memref<256x1xf32, #tpu.memory_space<vmem>>, vector<256x1xf32>
      tpu.vector_store %arg10[%c0_19, %c0_20], %25 {strides = array<i32>} : memref<256x1xf32, #tpu.memory_space<vmem>>, vector<256x1xf32>,
    } else {
    }
    %c0 = arith.constant 0 : index
    %c0_1 = arith.constant 0 : index
    %3 = vector.load %arg2[%c0, %c0_1] : memref<256x1024xi8, #tpu.memory_space<vmem>>, vector<256x1024xi8>
    %4 = arith.sitofp %3 : vector<256x1024xi8> to vector<256x1024xbf16>
    %c1024_i32 = arith.constant 1024 : i32
    %5 = arith.muli %arg1, %c1024_i32 : i32
    %6 = tpu.assume_multiple %5, 1024 : i32
    %7 = arith.index_cast %6 : i32 to index
    %c0_2 = arith.constant 0 : index
    %8 = vector.load %arg3[%7, %c0_2] : memref<2048x32xbf16, #tpu.memory_space<vmem>>, vector<1024x32xbf16>
    %c0_3 = arith.constant 0 : index
    %c0_4 = arith.constant 0 : index
    %9 = vector.load %arg9[%c0_3, %c0_4] : memref<256x32xf32, #tpu.memory_space<vmem>>, vector<256x32xf32>
    %cst = arith.constant dense<0.000000e+00> : vector<256x32xf32>
    %10 = tpu.matmul %4, %8, %cst {dimension_numbers = #tpu.dot_dimension_numbers<[1], [0], [0], [1], [0, 0, 1, 1], [], []>} : vector<256x1024xbf16>, vector<1024x32xbf16>, vector<256x32xf32> -> vector<256x32xf32>
    %11 = arith.addf %9, %10 : vector<256x32xf32>
    %c0_5 = arith.constant 0 : index
    %c0_6 = arith.constant 0 : index
    %12 = vector.load %arg9[%c0_5, %c0_6] : memref<256x32xf32, #tpu.memory_space<vmem>>, vector<256x32xf32>
    tpu.vector_store %arg9[%c0_5, %c0_6], %11 {strides = array<i32>} : memref<256x32xf32, #tpu.memory_space<vmem>>, vector<256x32xf32>,
    %c0_7 = arith.constant 0 : index
    %c0_8 = arith.constant 0 : index
    %13 = vector.load %arg10[%c0_7, %c0_8] : memref<256x1xf32, #tpu.memory_space<vmem>>, vector<256x1xf32>
    %c0_9 = arith.constant 0 : index
    %c0_10 = arith.constant 0 : index
    %14 = vector.load %arg2[%c0_9, %c0_10] : memref<256x1024xi8, #tpu.memory_space<vmem>>, vector<256x1024xi8>
    %15 = arith.sitofp %14 : vector<256x1024xi8> to vector<256x1024xf32>
    %cst_11 = arith.constant dense<0.000000e+00> : vector<256xf32>
    %16 = vector.multi_reduction <add>, %15, %cst_11 [1] : vector<256x1024xf32> to vector<256xf32>
    %17 = vector.shape_cast %16 : vector<256xf32> to vector<256x1xf32>
    %18 = arith.addf %13, %17 : vector<256x1xf32>
    %c0_12 = arith.constant 0 : index
    %c0_13 = arith.constant 0 : index
    %19 = vector.load %arg10[%c0_12, %c0_13] : memref<256x1xf32, #tpu.memory_space<vmem>>, vector<256x1xf32>
    tpu.vector_store %arg10[%c0_12, %c0_13], %18 {strides = array<i32>} : memref<256x1xf32, #tpu.memory_space<vmem>>, vector<256x1xf32>,
    %c1_i32 = arith.constant 1 : i32
    %20 = arith.cmpi eq, %arg1, %c1_i32 : i32
    %21 = arith.extui %20 : i1 to i32
    %c0_i32_14 = arith.constant 0 : i32
    %22 = arith.cmpi ne, %21, %c0_i32_14 : i32
    scf.if %22 {
      %c0_15 = arith.constant 0 : index
      %c0_16 = arith.constant 0 : index
      %23 = vector.load %arg10[%c0_15, %c0_16] : memref<256x1xf32, #tpu.memory_space<vmem>>, vector<256x1xf32>
      %cst_17 = arith.constant 1.000000e+00 : f32
      %24 = vector.broadcast %cst_17 : f32 to vector<256x1xf32>
      %25 = arith.maximumf %23, %24 : vector<256x1xf32>
      %26 = tpu.reciprocal %25 {approx = true} : vector<256x1xf32> -> vector<256x1xf32>
      %c0_18 = arith.constant 0 : index
      %c0_19 = arith.constant 0 : index
      %27 = vector.load %arg9[%c0_18, %c0_19] : memref<256x32xf32, #tpu.memory_space<vmem>>, vector<256x32xf32>
      %28 = vector.broadcast %26 : vector<256x1xf32> to vector<256x32xf32>
      %29 = arith.mulf %27, %28 : vector<256x32xf32>
      %c0_20 = arith.constant 0 : index
      %c0_21 = arith.constant 0 : index
      %30 = vector.load %arg4[%c0_20, %c0_21] : memref<256x32xf32, #tpu.memory_space<vmem>>, vector<256x32xf32>
      %c0_22 = arith.constant 0 : index
      %c0_23 = arith.constant 0 : index
      %31 = vector.load %arg5[%c0_22, %c0_23] : memref<32x128xf32, #tpu.memory_space<vmem>>, vector<32x128xf32>
      %cst_24 = arith.constant dense<0.000000e+00> : vector<256x128xf32>
      %32 = tpu.matmul %30, %31, %cst_24 {dimension_numbers = #tpu.dot_dimension_numbers<[1], [0], [0], [1], [0, 0, 1, 1], [], []>} : vector<256x32xf32>, vector<32x128xf32>, vector<256x128xf32> -> vector<256x128xf32>
      %c0_25 = arith.constant 0 : index
      %c0_26 = arith.constant 0 : index
      %33 = vector.load %arg6[%c0_25, %c0_26] : memref<32x128xf32, #tpu.memory_space<vmem>>, vector<32x128xf32>
      %cst_27 = arith.constant dense<0.000000e+00> : vector<256x128xf32>
      %34 = tpu.matmul %29, %33, %cst_27 {dimension_numbers = #tpu.dot_dimension_numbers<[1], [0], [0], [1], [0, 0, 1, 1], [], []>} : vector<256x32xf32>, vector<32x128xf32>, vector<256x128xf32> -> vector<256x128xf32>
      %35 = arith.addf %32, %34 : vector<256x128xf32>
      %c0_28 = arith.constant 0 : index
      %c0_29 = arith.constant 0 : index
      %36 = vector.load %arg7[%c0_28, %c0_29] : memref<1x128xf32, #tpu.memory_space<vmem>>, vector<1x128xf32>
      %37 = vector.broadcast %36 : vector<1x128xf32> to vector<256x128xf32>
      %38 = arith.addf %35, %37 : vector<256x128xf32>
      %c0_30 = arith.constant 0 : index
      %c0_31 = arith.constant 0 : index
      %39 = vector.load %arg8[%c0_30, %c0_31] : memref<256x128xf32, #tpu.memory_space<vmem>>, vector<256x128xf32>
      tpu.vector_store %arg8[%c0_30, %c0_31], %38 {strides = array<i32>} : memref<256x128xf32, #tpu.memory_space<vmem>>, vector<256x128xf32>,
    } else {
    }
    return
  }
  func.func @transform_0(%arg0: i32, %arg1: i32) -> (i32, i32) {
    %c0_i32 = arith.constant 0 : i32
    return %arg0, %arg1 : i32, i32
  }
  func.func @transform_1(%arg0: i32, %arg1: i32) -> (i32, i32) {
    %c0_i32 = arith.constant 0 : i32
    %c0_i32_0 = arith.constant 0 : i32
    %c0_i32_1 = arith.constant 0 : i32
    return %c0_i32, %c0_i32_0 : i32, i32
  }
  func.func @transform_2(%arg0: i32, %arg1: i32) -> (i32, i32) {
    %c0_i32 = arith.constant 0 : i32
    %c0_i32_0 = arith.constant 0 : i32
    return %arg0, %c0_i32 : i32, i32
  }
  func.func @transform_3(%arg0: i32, %arg1: i32) -> (i32, i32) {
    %c0_i32 = arith.constant 0 : i32
    %c0_i32_0 = arith.constant 0 : i32
    %c0_i32_1 = arith.constant 0 : i32
    return %c0_i32, %c0_i32_0 : i32, i32
  }
  func.func @transform_4(%arg0: i32, %arg1: i32) -> (i32, i32) {
    %c0_i32 = arith.constant 0 : i32
    %c0_i32_0 = arith.constant 0 : i32
    %c0_i32_1 = arith.constant 0 : i32
    return %c0_i32, %c0_i32_0 : i32, i32
  }
  func.func @transform_5(%arg0: i32, %arg1: i32) -> (i32, i32) {
    %c0_i32 = arith.constant 0 : i32
    %c0_i32_0 = arith.constant 0 : i32
    %c0_i32_1 = arith.constant 0 : i32
    return %c0_i32, %c0_i32_0 : i32, i32
  }
  func.func @transform_6(%arg0: i32, %arg1: i32) -> (i32, i32) {
    %c0_i32 = arith.constant 0 : i32
    %c0_i32_0 = arith.constant 0 : i32
    return %arg0, %c0_i32 : i32, i32
  }
}

</mosaic_0001>

<llo_original>
// kernel: gcn_layer.1
$region0: #{gcn_layer.1}
  #allocation0 [shape = 'u32[]', space=smem, size = 0x4, offset = 0x4, fixed_abs, tag = 'smem constant byte address 0x4 - core index']
  #allocation1 [shape = 'u32[72,128]{1,0:T(1,128)}', space=vmem, size = 0x9000, scoped, tag = 'internal scratch']
  #allocation2 [shape = 'f32[256,32]{1,0:T(8,128)}', space=vmem, size = 0x20000, scoped, tag = 'scratch operand']
  #allocation3 [shape = 'f32[256,1]{1,0:T(8,128)}', space=vmem, size = 0x20000, scoped, tag = 'scratch operand']
  %s0 = inlined_call_operand.vmem [shape: s8[512,2048], index: 0, kind: input, shape index: {}]
  %s1 = inlined_call_operand.vmem [shape: bf16[2048,32], index: 1, kind: input, shape index: {}]
  %s2 = inlined_call_operand.vmem [shape: f32[512,32], index: 2, kind: input, shape index: {}]
  %s3 = inlined_call_operand.vmem [shape: f32[32,128], index: 3, kind: input, shape index: {}]
  %s4 = inlined_call_operand.vmem [shape: f32[32,128], index: 4, kind: input, shape index: {}]
  %s5 = inlined_call_operand.vmem [shape: f32[1,128], index: 5, kind: input, shape index: {}]
  %s6 = inlined_call_operand.vmem [shape: f32[512,128], index: 6, kind: output, shape index: {}]
  %s7 = sld [smem:[#allocation0]]
  $region88: #{gcn_layer.1} parent=0
    _
  %s9 = ssub.s32 1, %s7
  %s10 = scalar_select 0, %s9, %s7
  $region1: #{gcn_layer.1} parent=0
    #allocation4 [shape = 'u8[524288]{0}', space=vmem, size = 0x80000, scoped, tag = 'input window, operand 0']
    loop: start=0, step=1, limit=6
    $region2: #{gcn_layer.1} parent=1 // loop_pre_header
      _
    $region3: #{gcn_layer.1} parent=1 // loop_header
      %s12 = sphi 0, %s16
      %p13 = scmp.ge.s32.totalorder %s12, 6
      %s19 = sphi 0, %s31
      %s20 = sphi 0, %s27
      %s21 = sphi 0, %s19
      %s22 = sphi 0, %s20
      %s23 = sphi 0, %s21
      %s24 = sphi 0, %s22
      %s36 = sphi 0, %s38
      %s39 = sphi 0, %s36
      %s40 = sphi 0, %s39
      %s56 = sphi 0, %s40
      %s60 = sphi 0, %s60
      %s62 = sphi 0, %s60
      %s63 = sphi 0, %s62
      %s77 = sphi 0, %s63
      %s83 = sphi 0, %s85
      %s86 = sphi 0, %s83
      %s87 = sphi 0, %s86
      %s103 = sphi 0, %s87
      %s107 = sphi 0, %s107
      %s109 = sphi 0, %s107
      %s110 = sphi 0, %s109
      %s124 = sphi 0, %s110
      %s128 = sphi 0, %s128
      %s130 = sphi 0, %s128
      %s131 = sphi 0, %s130
      %s145 = sphi 0, %s131
      %s149 = sphi 0, %s149
      %s151 = sphi 0, %s149
      %s152 = sphi 0, %s151
      %s166 = sphi 0, %s152
      %s172 = sphi 0, %s174
      %s175 = sphi 0, %s172
      %s176 = sphi 0, %s175
      %s192 = sphi 0, %s176
    $region4: #{gcn_layer.1} parent=1 // loop_header_branch
      %15 = sbr.rel (%p13) target = $region8
    $region5: #{gcn_layer.1} parent=1 // loop_body
      %s17 = ssub.s32 %s12, 1
      %s18 = ssub.s32 %s12, 2
      %s25 = sadd.s32 1, %s20
      %p26 = scmp.ge.s32.totalorder %s25, 2
      %s27 = scalar_select %p26, 0, %s25
      %s28 = sadd.s32 1, %s19
      %s29 = scalar_select %p26, %s28, %s19
      %p30 = scmp.ge.s32.totalorder %s29, 2
      %s31 = scalar_select %p30, 0, %s29
      %s32 = ssub.s32 %s19, %s31
      %s33 = ssub.s32 %s20, %s27
      %s34 = sor.u32 %s32, %s33
      %p35 = scmp.eq.s32.totalorder %s34, 0
      %s37 = sadd.s32 %s36, 1
      %s38 = scalar_select %p35, %s36, %s37
      %p41 = pneg %p35
      %p42 = scmp.eq.s32.totalorder %s12, 3
      %p43 = por %p41, %p42
      %p44 = scmp.ne.s32.totalorder %s36, %s39
      %p45 = scmp.eq.s32.totalorder %s12, 0
      %p46 = por %p44, %p45
      %p47 = scmp.ne.s32.totalorder %s36, %s39
      %p48 = scmp.eq.s32.totalorder %s17, 3
      %p49 = por %p47, %p48
      %p50 = scmp.ne.s32.totalorder %s39, %s40
      %p51 = scmp.eq.s32.totalorder %s17, 0
      %p52 = por %p50, %p51
      %p53 = scmp.ne.s32.totalorder %s39, %s40
      %p54 = scmp.eq.s32.totalorder %s18, 3
      %p55 = por %p53, %p54
      %p57 = scmp.ne.s32.totalorder %s40, %s56
      %p58 = scmp.eq.s32.totalorder %s18, 0
      %p59 = por %p57, %p58
      %s61 = sadd.s32 %s60, 1
      %p64 = scmp.eq.s32.totalorder %s12, 3
      %p65 = scmp.ne.s32.totalorder %s60, %s62
      %p66 = scmp.eq.s32.totalorder %s12, 0
      %p67 = por %p65, %p66
      %p68 = scmp.ne.s32.totalorder %s60, %s62
      %p69 = scmp.eq.s32.totalorder %s17, 3
      %p70 = por %p68, %p69
      %p71 = scmp.ne.s32.totalorder %s62, %s63
      %p72 = scmp.eq.s32.totalorder %s17, 0
      %p73 = por %p71, %p72
      %p74 = scmp.ne.s32.totalorder %s62, %s63
      %p75 = scmp.eq.s32.totalorder %s18, 3
      %p76 = por %p74, %p75
      %p78 = scmp.ne.s32.totalorder %s63, %s77
      %p79 = scmp.eq.s32.totalorder %s18, 0
      %p80 = por %p78, %p79
      %s81 = ssub.s32 %s19, %s31
      %p82 = scmp.eq.s32.totalorder %s81, 0
      %s84 = sadd.s32 %s83, 1
      %s85 = scalar_select %p82, %s83, %s84
      %p88 = pneg %p82
      %p89 = scmp.eq.s32.totalorder %s12, 3
      %p90 = por %p88, %p89
      %p91 = scmp.ne.s32.totalorder %s83, %s86
      %p92 = scmp.eq.s32.totalorder %s12, 0
      %p93 = por %p91, %p92
      %p94 = scmp.ne.s32.totalorder %s83, %s86
      %p95 = scmp.eq.s32.totalorder %s17, 3
      %p96 = por %p94, %p95
      %p97 = scmp.ne.s32.totalorder %s86, %s87
      %p98 = scmp.eq.s32.totalorder %s17, 0
      %p99 = por %p97, %p98
      %p100 = scmp.ne.s32.totalorder %s86, %s87
      %p101 = scmp.eq.s32.totalorder %s18, 3
      %p102 = por %p100, %p101
      %p104 = scmp.ne.s32.totalorder %s87, %s103
      %p105 = scmp.eq.s32.totalorder %s18, 0
      %p106 = por %p104, %p105
      %s108 = sadd.s32 %s107, 1
      %p111 = scmp.eq.s32.totalorder %s12, 3
      %p112 = scmp.ne.s32.totalorder %s107, %s109
      %p113 = scmp.eq.s32.totalorder %s12, 0
      %p114 = por %p112, %p113
      %p115 = scmp.ne.s32.totalorder %s107, %s109
      %p116 = scmp.eq.s32.totalorder %s17, 3
      %p117 = por %p115, %p116
      %p118 = scmp.ne.s32.totalorder %s109, %s110
      %p119 = scmp.eq.s32.totalorder %s17, 0
      %p120 = por %p118, %p119
      %p121 = scmp.ne.s32.totalorder %s109, %s110
      %p122 = scmp.eq.s32.totalorder %s18, 3
      %p123 = por %p121, %p122
      %p125 = scmp.ne.s32.totalorder %s110, %s124
      %p126 = scmp.eq.s32.totalorder %s18, 0
      %p127 = por %p125, %p126
      %s129 = sadd.s32 %s128, 1
      %p132 = scmp.eq.s32.totalorder %s12, 3
      %p133 = scmp.ne.s32.totalorder %s128, %s130
      %p134 = scmp.eq.s32.totalorder %s12, 0
      %p135 = por %p133, %p134
      %p136 = scmp.ne.s32.totalorder %s128, %s130
      %p137 = scmp.eq.s32.totalorder %s17, 3
      %p138 = por %p136, %p137
      %p139 = scmp.ne.s32.totalorder %s130, %s131
      %p140 = scmp.eq.s32.totalorder %s17, 0
      %p141 = por %p139, %p140
      %p142 = scmp.ne.s32.totalorder %s130, %s131
      %p143 = scmp.eq.s32.totalorder %s18, 3
      %p144 = por %p142, %p143
      %p146 = scmp.ne.s32.totalorder %s131, %s145
      %p147 = scmp.eq.s32.totalorder %s18, 0
      %p148 = por %p146, %p147
      %s150 = sadd.s32 %s149, 1
      %p153 = scmp.eq.s32.totalorder %s12, 3
      %p154 = scmp.ne.s32.totalorder %s149, %s151
      %p155 = scmp.eq.s32.totalorder %s12, 0
      %p156 = por %p154, %p155
      %p157 = scmp.ne.s32.totalorder %s149, %s151
      %p158 = scmp.eq.s32.totalorder %s17, 3
      %p159 = por %p157, %p158
      %p160 = scmp.ne.s32.totalorder %s151, %s152
      %p161 = scmp.eq.s32.totalorder %s17, 0
      %p162 = por %p160, %p161
      %p163 = scmp.ne.s32.totalorder %s151, %s152
      %p164 = scmp.eq.s32.totalorder %s18, 3
      %p165 = por %p163, %p164
      %p167 = scmp.ne.s32.totalorder %s152, %s166
      %p168 = scmp.eq.s32.totalorder %s18, 0
      %p169 = por %p167, %p168
      %s170 = ssub.s32 %s19, %s31
      %p171 = scmp.eq.s32.totalorder %s170, 0
      %s173 = sadd.s32 %s172, 1
      %s174 = scalar_select %p171, %s172, %s173
      %p177 = pneg %p171
      %p178 = scmp.eq.s32.totalorder %s12, 3
      %p179 = por %p177, %p178
      %p180 = scmp.ne.s32.totalorder %s172, %s175
      %p181 = scmp.eq.s32.totalorder %s12, 0
      %p182 = por %p180, %p181
      %p183 = scmp.ne.s32.totalorder %s172, %s175
      %p184 = scmp.eq.s32.totalorder %s17, 3
      %p185 = por %p183, %p184
      %p186 = scmp.ne.s32.totalorder %s175, %s176
      %p187 = scmp.eq.s32.totalorder %s17, 0
      %p188 = por %p186, %p187
      %p189 = scmp.ne.s32.totalorder %s175, %s176
      %p190 = scmp.eq.s32.totalorder %s18, 3
      %p191 = por %p189, %p190
      %p193 = scmp.ne.s32.totalorder %s176, %s192
      %p194 = scmp.eq.s32.totalorder %s18, 0
      %p195 = por %p193, %p194
      %p196 = scmp.le.s32.totalorder 1, %s12
      %p197 = scmp.lt.s32.totalorder %s12, 5
      %p198 = pnand %p196, %p197
      %p199 = pneg %p198
      // Predicated region
      $region9: #{gcn_layer.1} parent=5 // pred_check
        _
      $region10: #{gcn_layer.1} parent=5 // pred_check_branch
        %201 = sbr.rel (%p198) target = $region12
      $region11: #{gcn_layer.1} parent=5 // pred_region
        %s202 = ssub.s32 %s12, 1
        // Predicated region
        $region13: #{gcn_layer.1} parent=11 // pred_check
          %p203 = pneg %p73
        $region14: #{gcn_layer.1} parent=11 // pred_check_branch
          %205 = sbr.rel (%p203) target = $region16
        $region15: #{gcn_layer.1} parent=11 // pred_region
          _
        $region16: #{gcn_layer.1} parent=11 // pred_fallthru
          _
        // Predicated region
        $region17: #{gcn_layer.1} parent=11 // pred_check
          %p206 = pneg %p120
        $region18: #{gcn_layer.1} parent=11 // pred_check_branch
          %208 = sbr.rel (%p206) target = $region20
        $region19: #{gcn_layer.1} parent=11 // pred_region
          _
        $region20: #{gcn_layer.1} parent=11 // pred_fallthru
          _
        // Predicated region
        $region21: #{gcn_layer.1} parent=11 // pred_check
          %p209 = pneg %p141
        $region22: #{gcn_layer.1} parent=11 // pred_check_branch
          %211 = sbr.rel (%p209) target = $region24
        $region23: #{gcn_layer.1} parent=11 // pred_region
          _
        $region24: #{gcn_layer.1} parent=11 // pred_fallthru
          _
        // Predicated region
        $region25: #{gcn_layer.1} parent=11 // pred_check
          %p212 = pneg %p162
        $region26: #{gcn_layer.1} parent=11 // pred_check_branch
          %214 = sbr.rel (%p212) target = $region28
        $region27: #{gcn_layer.1} parent=11 // pred_region
          _
        $region28: #{gcn_layer.1} parent=11 // pred_fallthru
          _
      $region12: #{gcn_layer.1} parent=5 // pred_fallthru
        _
      %p215 = scmp.lt.s32.totalorder %s12, 4
      // Predicated region
      $region29: #{gcn_layer.1} parent=5 // pred_check
        %p216 = pneg %p215
      $region30: #{gcn_layer.1} parent=5 // pred_check_branch
        %218 = sbr.rel (%p216) target = $region32
      $region31: #{gcn_layer.1} parent=5 // pred_region
        // Predicated region
        $region33: #{gcn_layer.1} parent=31 // pred_check
          %p219 = pneg %p46
        $region34: #{gcn_layer.1} parent=31 // pred_check_branch
          %221 = sbr.rel (%p219) target = $region36
        $region35: #{gcn_layer.1} parent=31 // pred_region
          %s222 = sand.u32 %s36, 1
          %s223 = sand.u32 %s36, 1
          %s224 = smul.addr %s223, 512
          %s225 = scalar_lea.vmem [#allocation4], %s224
          %s226 = smul.u32 8, %s19
          %s227 = smul.u32 8, %s20
          %s228 = smul.addr %s226, 16
          %s229 = sadd.s32 %s227, %s228
          %s230 = smul.addr %s229, 8
          %s231 = scalar_lea.vmem %s0, %s230
          // Predicated region
          $region37: #{gcn_layer.1} parent=35 // pred_check
            _
          $region38: #{gcn_layer.1} parent=35 // pred_check_branch
            %233 = sbr.rel (0) target = $region40
          $region39: #{gcn_layer.1} parent=35 // pred_region
            // Predicated region
            $region41: #{gcn_layer.1} parent=39 // pred_check
              _
            $region42: #{gcn_layer.1} parent=39 // pred_check_branch
              %235 = sbr.rel (0) target = $region44
            $region43: #{gcn_layer.1} parent=39 // pred_region
              loop: start=0, step=1, limit=1
              $region45: #{gcn_layer.1} parent=43 // loop_pre_header
                _
              $region46: #{gcn_layer.1} parent=43 // loop_header
                %s237 = sphi 0, %s241
                %p238 = scmp.ge.s32.totalorder %s237, 1
                %s242 = sphi %s231, %s231
                %s243 = sphi %s225, %s225
              $region47: #{gcn_layer.1} parent=43 // loop_header_branch
                %240 = sbr.rel (%p238) target = $region51
              $region48: #{gcn_layer.1} parent=43 // loop_body
                %v244 = vld [vmem:[%s242] sm:$0xff]
                %245 = vst [vmem:[%s243] sm:$0xff] %v244
                %v246 = vld [vmem:[%s242 + $0x8] sm:$0xff]
                %247 = vst [vmem:[%s243 + $0x8] sm:$0xff] %v246
                %v248 = vld [vmem:[%s242 + $0x10] sm:$0xff]
                %249 = vst [vmem:[%s243 + $0x10] sm:$0xff] %v248
                %v250 = vld [vmem:[%s242 + $0x18] sm:$0xff]
                %251 = vst [vmem:[%s243 + $0x18] sm:$0xff] %v250
                %v252 = vld [vmem:[%s242 + $0x20] sm:$0xff]
                %253 = vst [vmem:[%s243 + $0x20] sm:$0xff] %v252
                %v254 = vld [vmem:[%s242 + $0x28] sm:$0xff]
                %255 = vst [vmem:[%s243 + $0x28] sm:$0xff] %v254
                %v256 = vld [vmem:[%s242 + $0x30] sm:$0xff]
                %257 = vst [vmem:[%s243 + $0x30] sm:$0xff] %v256
                %v258 = vld [vmem:[%s242 + $0x38] sm:$0xff]
                %259 = vst [vmem:[%s243 + $0x38] sm:$0xff] %v258
                %v260 = vld [vmem:[%s242 + $0x80] sm:$0xff]
                %261 = vst [vmem:[%s243 + $0x40] sm:$0xff] %v260
                %v262 = vld [vmem:[%s242 + $0x88] sm:$0xff]
                %263 = vst [vmem:[%s243 + $0x48] sm:$0xff] %v262
                %v264 = vld [vmem:[%s242 + $0x90] sm:$0xff]
                %265 = vst [vmem:[%s243 + $0x50] sm:$0xff] %v264
                %v266 = vld [vmem:[%s242 + $0x98] sm:$0xff]
                %267 = vst [vmem:[%s243 + $0x58] sm:$0xff] %v266
                %v268 = vld [vmem:[%s242 + $0xa0] sm:$0xff]
                %269 = vst [vmem:[%s243 + $0x60] sm:$0xff] %v268
                %v270 = vld [vmem:[%s242 + $0xa8] sm:$0xff]
                %271 = vst [vmem:[%s243 + $0x68] sm:$0xff] %v270
                %v272 = vld [vmem:[%s242 + $0xb0] sm:$0xff]
                %273 = vst [vmem:[%s243 + $0x70] sm:$0xff] %v272
                %v274 = vld [vmem:[%s242 + $0xb8] sm:$0xff]
                %275 = vst [vmem:[%s243 + $0x78] sm:$0xff] %v274
                %v276 = vld [vmem:[%s242 + $0x100] sm:$0xff]
                %277 = vst [vmem:[%s243 + $0x80] sm:$0xff] %v276
                %v278 = vld [vmem:[%s242 + $0x108] sm:$0xff]
                %279 = vst [vmem:[%s243 + $0x88] sm:$0xff] %v278
                %v280 = vld [vmem:[%s242 + $0x110] sm:$0xff]
                %281 = vst [vmem:[%s243 + $0x90] sm:$0xff] %v280
                %v282 = vld [vmem:[%s242 + $0x118] sm:$0xff]
                %283 = vst [vmem:[%s243 + $0x98] sm:$0xff] %v282
                %v284 = vld [vmem:[%s242 + $0x120] sm:$0xff]
                %285 = vst [vmem:[%s243 + $0xa0] sm:$0xff] %v284
                %v286 = vld [vmem:[%s242 + $0x128] sm:$0xff]
                %287 = vst [vmem:[%s243 + $0xa8] sm:$0xff] %v286
                %v288 = vld [vmem:[%s242 + $0x130] sm:$0xff]
                %289 = vst [vmem:[%s243 + $0xb0] sm:$0xff] %v288
                %v290 = vld [vmem:[%s242 + $0x138] sm:$0xff]
                %291 = vst [vmem:[%s243 + $0xb8] sm:$0xff] %v290
                %v292 = vld [vmem:[%s242 + $0x180] sm:$0xff]
                %293 = vst [vmem:[%s243 + $0xc0] sm:$0xff] %v292
                %v294 = vld [vmem:[%s242 + $0x188] sm:$0xff]
                %295 = vst [vmem:[%s243 + $0xc8] sm:$0xff] %v294
                %v296 = vld [vmem:[%s242 + $0x190] sm:$0xff]
                %297 = vst [vmem:[%s243 + $0xd0] sm:$0xff] %v296
                %v298 = vld [vmem:[%s242 + $0x198] sm:$0xff]
                %299 = vst [vmem:[%s243 + $0xd8] sm:$0xff] %v298
                %v300 = vld [vmem:[%s242 + $0x1a0] sm:$0xff]
                %301 = vst [vmem:[%s243 + $0xe0] sm:$0xff] %v300
                %v302 = vld [vmem:[%s242 + $0x1a8] sm:$0xff]
                %303 = vst [vmem:[%s243 + $0xe8] sm:$0xff] %v302
                %v304 = vld [vmem:[%s242 + $0x1b0] sm:$0xff]
                %305 = vst [vmem:[%s243 + $0xf0] sm:$0xff] %v304
                %v306 = vld [vmem:[%s242 + $0x1b8] sm:$0xff]
                %307 = vst [vmem:[%s243 + $0xf8] sm:$0xff] %v306
                %v308 = vld [vmem:[%s242 + $0x200] sm:$0xff]
                %309 = vst [vmem:[%s243 + $0x100] sm:$0xff] %v308
                %v310 = vld [vmem:[%s242 + $0x208] sm:$0xff]
                %311 = vst [vmem:[%s243 + $0x108] sm:$0xff] %v310
                %v312 = vld [vmem:[%s242 + $0x210] sm:$0xff]
                %313 = vst [vmem:[%s243 + $0x110] sm:$0xff] %v312
                %v314 = vld [vmem:[%s242 + $0x218] sm:$0xff]
                %315 = vst [vmem:[%s243 + $0x118] sm:$0xff] %v314
                %v316 = vld [vmem:[%s242 + $0x220] sm:$0xff]
                %317 = vst [vmem:[%s243 + $0x120] sm:$0xff] %v316
                %v318 = vld [vmem:[%s242 + $0x228] sm:$0xff]
                %319 = vst [vmem:[%s243 + $0x128] sm:$0xff] %v318
                %v320 = vld [vmem:[%s242 + $0x230] sm:$0xff]
                %321 = vst [vmem:[%s243 + $0x130] sm:$0xff] %v320
                %v322 = vld [vmem:[%s242 + $0x238] sm:$0xff]
                %323 = vst [vmem:[%s243 + $0x138] sm:$0xff] %v322
                %v324 = vld [vmem:[%s242 + $0x280] sm:$0xff]
                %325 = vst [vmem:[%s243 + $0x140] sm:$0xff] %v324
                %v326 = vld [vmem:[%s242 + $0x288] sm:$0xff]
                %327 = vst [vmem:[%s243 + $0x148] sm:$0xff] %v326
                %v328 = vld [vmem:[%s242 + $0x290] sm:$0xff]
                %329 = vst [vmem:[%s243 + $0x150] sm:$0xff] %v328
                %v330 = vld [vmem:[%s242 + $0x298] sm:$0xff]
                %331 = vst [vmem:[%s243 + $0x158] sm:$0xff] %v330
                %v332 = vld [vmem:[%s242 + $0x2a0] sm:$0xff]
                %333 = vst [vmem:[%s243 + $0x160] sm:$0xff] %v332
                %v334 = vld [vmem:[%s242 + $0x2a8] sm:$0xff]
                %335 = vst [vmem:[%s243 + $0x168] sm:$0xff] %v334
                %v336 = vld [vmem:[%s242 + $0x2b0] sm:$0xff]
                %337 = vst [vmem:[%s243 + $0x170] sm:$0xff] %v336
                %v338 = vld [vmem:[%s242 + $0x2b8] sm:$0xff]
                %339 = vst [vmem:[%s243 + $0x178] sm:$0xff] %v338
                %v340 = vld [vmem:[%s242 + $0x300] sm:$0xff]
                %341 = vst [vmem:[%s243 + $0x180] sm:$0xff] %v340
                %v342 = vld [vmem:[%s242 + $0x308] sm:$0xff]
                %343 = vst [vmem:[%s243 + $0x188] sm:$0xff] %v342
                %v344 = vld [vmem:[%s242 + $0x310] sm:$0xff]
                %345 = vst [vmem:[%s243 + $0x190] sm:$0xff] %v344
                %v346 = vld [vmem:[%s242 + $0x318] sm:$0xff]
                %347 = vst [vmem:[%s243 + $0x198] sm:$0xff] %v346
                %v348 = vld [vmem:[%s242 + $0x320] sm:$0xff]
                %349 = vst [vmem:[%s243 + $0x1a0] sm:$0xff] %v348
                %v350 = vld [vmem:[%s242 + $0x328] sm:$0xff]
                %351 = vst [vmem:[%s243 + $0x1a8] sm:$0xff] %v350
                %v352 = vld [vmem:[%s242 + $0x330] sm:$0xff]
                %353 = vst [vmem:[%s243 + $0x1b0] sm:$0xff] %v352
                %v354 = vld [vmem:[%s242 + $0x338] sm:$0xff]
                %355 = vst [vmem:[%s243 + $0x1b8] sm:$0xff] %v354
                %v356 = vld [vmem:[%s242 + $0x380] sm:$0xff]
                %357 = vst [vmem:[%s243 + $0x1c0] sm:$0xff] %v356
                %v358 = vld [vmem:[%s242 + $0x388] sm:$0xff]
                %359 = vst [vmem:[%s243 + $0x1c8] sm:$0xff] %v358
                %v360 = vld [vmem:[%s242 + $0x390] sm:$0xff]
                %361 = vst [vmem:[%s243 + $0x1d0] sm:$0xff] %v360
                %v362 = vld [vmem:[%s242 + $0x398] sm:$0xff]
                %363 = vst [vmem:[%s243 + $0x1d8] sm:$0xff] %v362
                %v364 = vld [vmem:[%s242 + $0x3a0] sm:$0xff]
                %365 = vst [vmem:[%s243 + $0x1e0] sm:$0xff] %v364
                %v366 = vld [vmem:[%s242 + $0x3a8] sm:$0xff]
                %367 = vst [vmem:[%s243 + $0x1e8] sm:$0xff] %v366
                %v368 = vld [vmem:[%s242 + $0x3b0] sm:$0xff]
                %369 = vst [vmem:[%s243 + $0x1f0] sm:$0xff] %v368
                %v370 = vld [vmem:[%s242 + $0x3b8] sm:$0xff]
                %371 = vst [vmem:[%s243 + $0x1f8] sm:$0xff] %v370
              $region49: #{gcn_layer.1} parent=43 // loop_footer
                %s241 = sadd.s32 1, %s237
              $region50: #{gcn_layer.1} parent=43 // loop_footer_branch
                %236 = sbr.rel target = $region46
              $region51: #{gcn_layer.1} parent=43 // loop_exit
                _
            $region44: #{gcn_layer.1} parent=39 // pred_fallthru
              _
            // Predicated region
            $region52: #{gcn_layer.1} parent=39 // pred_check
              _
            $region53: #{gcn_layer.1} parent=39 // pred_check_branch
              %373 = sbr.rel target = $region55
            $region54: #{gcn_layer.1} parent=39 // pred_region
              _
            $region55: #{gcn_layer.1} parent=39 // pred_fallthru
              _
          $region40: #{gcn_layer.1} parent=35 // pred_fallthru
            _
          %374 = vnop
        $region36: #{gcn_layer.1} parent=31 // pred_fallthru
          _
        // Predicated region
        $region56: #{gcn_layer.1} parent=31 // pred_check
          %p375 = pneg %p93
        $region57: #{gcn_layer.1} parent=31 // pred_check_branch
          %377 = sbr.rel (%p375) target = $region59
        $region58: #{gcn_layer.1} parent=31 // pred_region
          %s378 = smul.u32 32, %s19
          %p379 = scmp.lt.s32.totalorder %s378, 63
          %s380 = scalar_select %p379, %s378, 63
          %s381 = smul.addr %s380, 8
          %s382 = scalar_lea.vmem %s2, %s381
          %s383 = smul.u32 32, %s19
        $region59: #{gcn_layer.1} parent=31 // pred_fallthru
          _
      $region32: #{gcn_layer.1} parent=5 // pred_fallthru
        _
      %p384 = scmp.le.s32.totalorder 1, %s12
      %p385 = scmp.lt.s32.totalorder %s12, 5
      %p386 = pnand %p384, %p385
      %p387 = pneg %p386
      // Predicated region
      $region60: #{gcn_layer.1} parent=5 // pred_check
        _
      $region61: #{gcn_layer.1} parent=5 // pred_check_branch
        %389 = sbr.rel (%p386) target = $region63
      $region62: #{gcn_layer.1} parent=5 // pred_region
        %s390 = ssub.s32 %s12, 1
        %s391 = sand.u32 %s39, 1
        %s392 = sand.u32 %s39, 1
        %s393 = smul.addr %s392, 512
        %s394 = scalar_lea.vmem [#allocation4], %s393
        // Predicated region
        $region64: #{gcn_layer.1} parent=62 // pred_check
          %p395 = pneg %p52
        $region65: #{gcn_layer.1} parent=62 // pred_check_branch
          %397 = sbr.rel (%p395) target = $region67
        $region66: #{gcn_layer.1} parent=62 // pred_region
          _
        $region67: #{gcn_layer.1} parent=62 // pred_fallthru
          _
        %s398 = sand.u32 %s39, 1
        %s399 = sand.u32 %s39, 1
        %s400 = smul.addr %s399, 512
        %s401 = scalar_lea.vmem [#allocation4], %s400
        %p402 = pneg %p52
        %p403 = pneg %p49
        %p404 = pneg %p73
        %p405 = pneg %p70
        %s406 = smul.u32 32, %s21
        %p407 = scmp.lt.s32.totalorder %s406, 63
        %s408 = scalar_select %p407, %s406, 63
        %s409 = smul.addr %s408, 8
        %s410 = scalar_lea.vmem %s2, %s409
        %p411 = pneg %p99
        %p412 = pneg %p96
        %p413 = pneg %p120
        %p414 = pneg %p117
        %p415 = pneg %p141
        %p416 = pneg %p138
        %p417 = pneg %p162
        %p418 = pneg %p159
        %p419 = pneg %p188
        %p420 = pneg %p185
        %s421 = smul.u32 32, %s21
        %p422 = scmp.lt.s32.totalorder %s421, 63
        %s423 = scalar_select %p422, %s421, 63
        %s424 = smul.addr %s423, 8
        %s425 = scalar_lea.vmem %s6, %s424
        %s426 = smul.u32 8, %s21
        %s427 = smul.u32 8, %s22
        %s428 = smul.u32 32, %s21
        %p429 = scmp.lt.s32.totalorder %s428, 63
        %s430 = scalar_select %p429, %s428, 63
        %s431 = smul.addr %s430, 8
        %s432 = scalar_lea.vmem %s2, %s431
        %s433 = smul.u32 32, %s21
        %s434 = smul.u32 32, %s21
        %p435 = scmp.lt.s32.totalorder %s434, 63
        %s436 = scalar_select %p435, %s434, 63
        %s437 = smul.addr %s436, 8
        %s438 = scalar_lea.vmem %s6, %s437
        %s439 = smul.u32 32, %s21
        %p440 = scmp.eq.s32.totalorder %s22, 0
        // Predicated region
        $region68: #{gcn_layer.1} parent=62 // pred_check
          %p441 = pneg %p440
        $region69: #{gcn_layer.1} parent=62 // pred_check_branch
          %443 = sbr.rel (%p441) target = $region71
        $region70: #{gcn_layer.1} parent=62 // pred_region
          %vm444 = vcmask 261120
          %445 = vst.msk [vmem:[#allocation2] sm:$0xff] %vm444, 0.0
          %446 = vst.msk [vmem:[#allocation2 + $0x8] sm:$0xff] %vm444, 0.0
          %447 = vst.msk [vmem:[#allocation2 + $0x10] sm:$0xff] %vm444, 0.0
          %448 = vst.msk [vmem:[#allocation2 + $0x18] sm:$0xff] %vm444, 0.0
          %449 = vst.msk [vmem:[#allocation2 + $0x20] sm:$0xff] %vm444, 0.0
          %450 = vst.msk [vmem:[#allocation2 + $0x28] sm:$0xff] %vm444, 0.0
          %451 = vst.msk [vmem:[#allocation2 + $0x30] sm:$0xff] %vm444, 0.0
          %452 = vst.msk [vmem:[#allocation2 + $0x38] sm:$0xff] %vm444, 0.0
          %453 = vst.msk [vmem:[#allocation2 + $0x40] sm:$0xff] %vm444, 0.0
          %454 = vst.msk [vmem:[#allocation2 + $0x48] sm:$0xff] %vm444, 0.0
          %455 = vst.msk [vmem:[#allocation2 + $0x50] sm:$0xff] %vm444, 0.0
          %456 = vst.msk [vmem:[#allocation2 + $0x58] sm:$0xff] %vm444, 0.0
          %457 = vst.msk [vmem:[#allocation2 + $0x60] sm:$0xff] %vm444, 0.0
          %458 = vst.msk [vmem:[#allocation2 + $0x68] sm:$0xff] %vm444, 0.0
          %459 = vst.msk [vmem:[#allocation2 + $0x70] sm:$0xff] %vm444, 0.0
          %460 = vst.msk [vmem:[#allocation2 + $0x78] sm:$0xff] %vm444, 0.0
          %461 = vst.msk [vmem:[#allocation2 + $0x80] sm:$0xff] %vm444, 0.0
          %462 = vst.msk [vmem:[#allocation2 + $0x88] sm:$0xff] %vm444, 0.0
          %463 = vst.msk [vmem:[#allocation2 + $0x90] sm:$0xff] %vm444, 0.0
          %464 = vst.msk [vmem:[#allocation2 + $0x98] sm:$0xff] %vm444, 0.0
          %465 = vst.msk [vmem:[#allocation2 + $0xa0] sm:$0xff] %vm444, 0.0
          %466 = vst.msk [vmem:[#allocation2 + $0xa8] sm:$0xff] %vm444, 0.0
          %467 = vst.msk [vmem:[#allocation2 + $0xb0] sm:$0xff] %vm444, 0.0
          %468 = vst.msk [vmem:[#allocation2 + $0xb8] sm:$0xff] %vm444, 0.0
          %469 = vst.msk [vmem:[#allocation2 + $0xc0] sm:$0xff] %vm444, 0.0
          %470 = vst.msk [vmem:[#allocation2 + $0xc8] sm:$0xff] %vm444, 0.0
          %471 = vst.msk [vmem:[#allocation2 + $0xd0] sm:$0xff] %vm444, 0.0
          %472 = vst.msk [vmem:[#allocation2 + $0xd8] sm:$0xff] %vm444, 0.0
          %473 = vst.msk [vmem:[#allocation2 + $0xe0] sm:$0xff] %vm444, 0.0
          %474 = vst.msk [vmem:[#allocation2 + $0xe8] sm:$0xff] %vm444, 0.0
          %475 = vst.msk [vmem:[#allocation2 + $0xf0] sm:$0xff] %vm444, 0.0
          %476 = vst.msk [vmem:[#allocation2 + $0xf8] sm:$0xff] %vm444, 0.0
          %vm477 = vcmask 7168
          %478 = vst.msk [vmem:[#allocation3] sm:$0xff] %vm477, 0.0
          %479 = vst.msk [vmem:[#allocation3 + $0x8] sm:$0xff] %vm477, 0.0
          %480 = vst.msk [vmem:[#allocation3 + $0x10] sm:$0xff] %vm477, 0.0
          %481 = vst.msk [vmem:[#allocation3 + $0x18] sm:$0xff] %vm477, 0.0
          %482 = vst.msk [vmem:[#allocation3 + $0x20] sm:$0xff] %vm477, 0.0
          %483 = vst.msk [vmem:[#allocation3 + $0x28] sm:$0xff] %vm477, 0.0
          %484 = vst.msk [vmem:[#allocation3 + $0x30] sm:$0xff] %vm477, 0.0
          %485 = vst.msk [vmem:[#allocation3 + $0x38] sm:$0xff] %vm477, 0.0
          %486 = vst.msk [vmem:[#allocation3 + $0x40] sm:$0xff] %vm477, 0.0
          %487 = vst.msk [vmem:[#allocation3 + $0x48] sm:$0xff] %vm477, 0.0
          %488 = vst.msk [vmem:[#allocation3 + $0x50] sm:$0xff] %vm477, 0.0
          %489 = vst.msk [vmem:[#allocation3 + $0x58] sm:$0xff] %vm477, 0.0
          %490 = vst.msk [vmem:[#allocation3 + $0x60] sm:$0xff] %vm477, 0.0
          %491 = vst.msk [vmem:[#allocation3 + $0x68] sm:$0xff] %vm477, 0.0
          %492 = vst.msk [vmem:[#allocation3 + $0x70] sm:$0xff] %vm477, 0.0
          %493 = vst.msk [vmem:[#allocation3 + $0x78] sm:$0xff] %vm477, 0.0
          %494 = vst.msk [vmem:[#allocation3 + $0x80] sm:$0xff] %vm477, 0.0
          %495 = vst.msk [vmem:[#allocation3 + $0x88] sm:$0xff] %vm477, 0.0
          %496 = vst.msk [vmem:[#allocation3 + $0x90] sm:$0xff] %vm477, 0.0
          %497 = vst.msk [vmem:[#allocation3 + $0x98] sm:$0xff] %vm477, 0.0
          %498 = vst.msk [vmem:[#allocation3 + $0xa0] sm:$0xff] %vm477, 0.0
          %499 = vst.msk [vmem:[#allocation3 + $0xa8] sm:$0xff] %vm477, 0.0
          %500 = vst.msk [vmem:[#allocation3 + $0xb0] sm:$0xff] %vm477, 0.0
          %501 = vst.msk [vmem:[#allocation3 + $0xb8] sm:$0xff] %vm477, 0.0
          %502 = vst.msk [vmem:[#allocation3 + $0xc0] sm:$0xff] %vm477, 0.0
          %503 = vst.msk [vmem:[#allocation3 + $0xc8] sm:$0xff] %vm477, 0.0
          %504 = vst.msk [vmem:[#allocation3 + $0xd0] sm:$0xff] %vm477, 0.0
          %505 = vst.msk [vmem:[#allocation3 + $0xd8] sm:$0xff] %vm477, 0.0
          %506 = vst.msk [vmem:[#allocation3 + $0xe0] sm:$0xff] %vm477, 0.0
          %507 = vst.msk [vmem:[#allocation3 + $0xe8] sm:$0xff] %vm477, 0.0
          %508 = vst.msk [vmem:[#allocation3 + $0xf0] sm:$0xff] %vm477, 0.0
          %509 = vst.msk [vmem:[#allocation3 + $0xf8] sm:$0xff] %vm477, 0.0
        $region71: #{gcn_layer.1} parent=62 // pred_fallthru
          _
        %v510 = vld [vmem:[%s394] sm:$0xff]
        %v511 = vld [vmem:[%s394 + $0x8] sm:$0xff]
        %v512 = vld [vmem:[%s394 + $0x10] sm:$0xff]
        %v513 = vld [vmem:[%s394 + $0x18] sm:$0xff]
        %v514 = vld [vmem:[%s394 + $0x20] sm:$0xff]
        %v515 = vld [vmem:[%s394 + $0x28] sm:$0xff]
        %v516 = vld [vmem:[%s394 + $0x30] sm:$0xff]
        %v517 = vld [vmem:[%s394 + $0x38] sm:$0xff]
        %v518 = vld [vmem:[%s394 + $0x40] sm:$0xff]
        %v519 = vld [vmem:[%s394 + $0x48] sm:$0xff]
        %v520 = vld [vmem:[%s394 + $0x50] sm:$0xff]
        %v521 = vld [vmem:[%s394 + $0x58] sm:$0xff]
        %v522 = vld [vmem:[%s394 + $0x60] sm:$0xff]
        %v523 = vld [vmem:[%s394 + $0x68] sm:$0xff]
        %v524 = vld [vmem:[%s394 + $0x70] sm:$0xff]
        %v525 = vld [vmem:[%s394 + $0x78] sm:$0xff]
        %v526 = vld [vmem:[%s394 + $0x80] sm:$0xff]
        %v527 = vld [vmem:[%s394 + $0x88] sm:$0xff]
        %v528 = vld [vmem:[%s394 + $0x90] sm:$0xff]
        %v529 = vld [vmem:[%s394 + $0x98] sm:$0xff]
        %v530 = vld [vmem:[%s394 + $0xa0] sm:$0xff]
        %v531 = vld [vmem:[%s394 + $0xa8] sm:$0xff]
        %v532 = vld [vmem:[%s394 + $0xb0] sm:$0xff]
        %v533 = vld [vmem:[%s394 + $0xb8] sm:$0xff]
        %v534 = vld [vmem:[%s394 + $0xc0] sm:$0xff]
        %v535 = vld [vmem:[%s394 + $0xc8] sm:$0xff]
        %v536 = vld [vmem:[%s394 + $0xd0] sm:$0xff]
        %v537 = vld [vmem:[%s394 + $0xd8] sm:$0xff]
        %v538 = vld [vmem:[%s394 + $0xe0] sm:$0xff]
        %v539 = vld [vmem:[%s394 + $0xe8] sm:$0xff]
        %v540 = vld [vmem:[%s394 + $0xf0] sm:$0xff]
        %v541 = vld [vmem:[%s394 + $0xf8] sm:$0xff]
        %v542 = vld [vmem:[%s394 + $0x100] sm:$0xff]
        %v543 = vld [vmem:[%s394 + $0x108] sm:$0xff]
        %v544 = vld [vmem:[%s394 + $0x110] sm:$0xff]
        %v545 = vld [vmem:[%s394 + $0x118] sm:$0xff]
        %v546 = vld [vmem:[%s394 + $0x120] sm:$0xff]
        %v547 = vld [vmem:[%s394 + $0x128] sm:$0xff]
        %v548 = vld [vmem:[%s394 + $0x130] sm:$0xff]
        %v549 = vld [vmem:[%s394 + $0x138] sm:$0xff]
        %v550 = vld [vmem:[%s394 + $0x140] sm:$0xff]
        %v551 = vld [vmem:[%s394 + $0x148] sm:$0xff]
        %v552 = vld [vmem:[%s394 + $0x150] sm:$0xff]
        %v553 = vld [vmem:[%s394 + $0x158] sm:$0xff]
        %v554 = vld [vmem:[%s394 + $0x160] sm:$0xff]
        %v555 = vld [vmem:[%s394 + $0x168] sm:$0xff]
        %v556 = vld [vmem:[%s394 + $0x170] sm:$0xff]
        %v557 = vld [vmem:[%s394 + $0x178] sm:$0xff]
        %v558 = vld [vmem:[%s394 + $0x180] sm:$0xff]
        %v559 = vld [vmem:[%s394 + $0x188] sm:$0xff]
        %v560 = vld [vmem:[%s394 + $0x190] sm:$0xff]
        %v561 = vld [vmem:[%s394 + $0x198] sm:$0xff]
        %v562 = vld [vmem:[%s394 + $0x1a0] sm:$0xff]
        %v563 = vld [vmem:[%s394 + $0x1a8] sm:$0xff]
        %v564 = vld [vmem:[%s394 + $0x1b0] sm:$0xff]
        %v565 = vld [vmem:[%s394 + $0x1b8] sm:$0xff]
        %v566 = vld [vmem:[%s394 + $0x1c0] sm:$0xff]
        %v567 = vld [vmem:[%s394 + $0x1c8] sm:$0xff]
        %v568 = vld [vmem:[%s394 + $0x1d0] sm:$0xff]
        %v569 = vld [vmem:[%s394 + $0x1d8] sm:$0xff]
        %v570 = vld [vmem:[%s394 + $0x1e0] sm:$0xff]
        %v571 = vld [vmem:[%s394 + $0x1e8] sm:$0xff]
        %v572 = vld [vmem:[%s394 + $0x1f0] sm:$0xff]
        %v573 = vld [vmem:[%s394 + $0x1f8] sm:$0xff]
        %v574 = vunpack.c.0.s8 %v510
        %v575 = vunpack.c.0.s8 %v511
        %v576 = vunpack.c.0.s8 %v512
        %v577 = vunpack.c.0.s8 %v513
        %v578 = vunpack.c.0.s8 %v514
        %v579 = vunpack.c.0.s8 %v515
        %v580 = vunpack.c.0.s8 %v516
        %v581 = vunpack.c.0.s8 %v517
        %v582 = vunpack.c.1.s8 %v510
        %v583 = vunpack.c.1.s8 %v511
        %v584 = vunpack.c.1.s8 %v512
        %v585 = vunpack.c.1.s8 %v513
        %v586 = vunpack.c.1.s8 %v514
        %v587 = vunpack.c.1.s8 %v515
        %v588 = vunpack.c.1.s8 %v516
        %v589 = vunpack.c.1.s8 %v517
        %v590 = vunpack.c.2.s8 %v510
        %v591 = vunpack.c.2.s8 %v511
        %v592 = vunpack.c.2.s8 %v512
        %v593 = vunpack.c.2.s8 %v513
        %v594 = vunpack.c.2.s8 %v514
        %v595 = vunpack.c.2.s8 %v515
        %v596 = vunpack.c.2.s8 %v516
        %v597 = vunpack.c.2.s8 %v517
        %v598 = vunpack.c.3.s8 %v510
        %v599 = vunpack.c.3.s8 %v511
        %v600 = vunpack.c.3.s8 %v512
        %v601 = vunpack.c.3.s8 %v513
        %v602 = vunpack.c.3.s8 %v514
        %v603 = vunpack.c.3.s8 %v515
        %v604 = vunpack.c.3.s8 %v516
        %v605 = vunpack.c.3.s8 %v517
        %v606 = vunpack.c.0.s8 %v518
        %v607 = vunpack.c.0.s8 %v519
        %v608 = vunpack.c.0.s8 %v520
        %v609 = vunpack.c.0.s8 %v521
        %v610 = vunpack.c.0.s8 %v522
        %v611 = vunpack.c.0.s8 %v523
        %v612 = vunpack.c.0.s8 %v524
        %v613 = vunpack.c.0.s8 %v525
        %v614 = vunpack.c.1.s8 %v518
        %v615 = vunpack.c.1.s8 %v519
        %v616 = vunpack.c.1.s8 %v520
        %v617 = vunpack.c.1.s8 %v521
        %v618 = vunpack.c.1.s8 %v522
        %v619 = vunpack.c.1.s8 %v523
        %v620 = vunpack.c.1.s8 %v524
        %v621 = vunpack.c.1.s8 %v525
        %v622 = vunpack.c.2.s8 %v518
        %v623 = vunpack.c.2.s8 %v519
        %v624 = vunpack.c.2.s8 %v520
        %v625 = vunpack.c.2.s8 %v521
        %v626 = vunpack.c.2.s8 %v522
        %v627 = vunpack.c.2.s8 %v523
        %v628 = vunpack.c.2.s8 %v524
        %v629 = vunpack.c.2.s8 %v525
        %v630 = vunpack.c.3.s8 %v518
        %v631 = vunpack.c.3.s8 %v519
        %v632 = vunpack.c.3.s8 %v520
        %v633 = vunpack.c.3.s8 %v521
        %v634 = vunpack.c.3.s8 %v522
        %v635 = vunpack.c.3.s8 %v523
        %v636 = vunpack.c.3.s8 %v524
        %v637 = vunpack.c.3.s8 %v525
        %v638 = vunpack.c.0.s8 %v526
        %v639 = vunpack.c.0.s8 %v527
        %v640 = vunpack.c.0.s8 %v528
        %v641 = vunpack.c.0.s8 %v529
        %v642 = vunpack.c.0.s8 %v530
        %v643 = vunpack.c.0.s8 %v531
        %v644 = vunpack.c.0.s8 %v532
        %v645 = vunpack.c.0.s8 %v533
        %v646 = vunpack.c.1.s8 %v526
        %v647 = vunpack.c.1.s8 %v527
        %v648 = vunpack.c.1.s8 %v528
        %v649 = vunpack.c.1.s8 %v529
        %v650 = vunpack.c.1.s8 %v530
        %v651 = vunpack.c.1.s8 %v531
        %v652 = vunpack.c.1.s8 %v532
        %v653 = vunpack.c.1.s8 %v533
        %v654 = vunpack.c.2.s8 %v526
        %v655 = vunpack.c.2.s8 %v527
        %v656 = vunpack.c.2.s8 %v528
        %v657 = vunpack.c.2.s8 %v529
        %v658 = vunpack.c.2.s8 %v530
        %v659 = vunpack.c.2.s8 %v531
        %v660 = vunpack.c.2.s8 %v532
        %v661 = vunpack.c.2.s8 %v533
        %v662 = vunpack.c.3.s8 %v526
        %v663 = vunpack.c.3.s8 %v527
        %v664 = vunpack.c.3.s8 %v528
        %v665 = vunpack.c.3.s8 %v529
        %v666 = vunpack.c.3.s8 %v530
        %v667 = vunpack.c.3.s8 %v531
        %v668 = vunpack.c.3.s8 %v532
        %v669 = vunpack.c.3.s8 %v533
        %v670 = vunpack.c.0.s8 %v534
        %v671 = vunpack.c.0.s8 %v535
        %v672 = vunpack.c.0.s8 %v536
        %v673 = vunpack.c.0.s8 %v537
        %v674 = vunpack.c.0.s8 %v538
        %v675 = vunpack.c.0.s8 %v539
        %v676 = vunpack.c.0.s8 %v540
        %v677 = vunpack.c.0.s8 %v541
        %v678 = vunpack.c.1.s8 %v534
        %v679 = vunpack.c.1.s8 %v535
        %v680 = vunpack.c.1.s8 %v536
        %v681 = vunpack.c.1.s8 %v537
        %v682 = vunpack.c.1.s8 %v538
        %v683 = vunpack.c.1.s8 %v539
        %v684 = vunpack.c.1.s8 %v540
        %v685 = vunpack.c.1.s8 %v541
        %v686 = vunpack.c.2.s8 %v534
        %v687 = vunpack.c.2.s8 %v535
        %v688 = vunpack.c.2.s8 %v536
        %v689 = vunpack.c.2.s8 %v537
        %v690 = vunpack.c.2.s8 %v538
        %v691 = vunpack.c.2.s8 %v539
        %v692 = vunpack.c.2.s8 %v540
        %v693 = vunpack.c.2.s8 %v541
        %v694 = vunpack.c.3.s8 %v534
        %v695 = vunpack.c.3.s8 %v535
        %v696 = vunpack.c.3.s8 %v536
        %v697 = vunpack.c.3.s8 %v537
        %v698 = vunpack.c.3.s8 %v538
        %v699 = vunpack.c.3.s8 %v539
        %v700 = vunpack.c.3.s8 %v540
        %v701 = vunpack.c.3.s8 %v541
        %v702 = vunpack.c.0.s8 %v542
        %v703 = vunpack.c.0.s8 %v543
        %v704 = vunpack.c.0.s8 %v544
        %v705 = vunpack.c.0.s8 %v545
        %v706 = vunpack.c.0.s8 %v546
        %v707 = vunpack.c.0.s8 %v547
        %v708 = vunpack.c.0.s8 %v548
        %v709 = vunpack.c.0.s8 %v549
        %v710 = vunpack.c.1.s8 %v542
        %v711 = vunpack.c.1.s8 %v543
        %v712 = vunpack.c.1.s8 %v544
        %v713 = vunpack.c.1.s8 %v545
        %v714 = vunpack.c.1.s8 %v546
        %v715 = vunpack.c.1.s8 %v547
        %v716 = vunpack.c.1.s8 %v548
        %v717 = vunpack.c.1.s8 %v549
        %v718 = vunpack.c.2.s8 %v542
        %v719 = vunpack.c.2.s8 %v543
        %v720 = vunpack.c.2.s8 %v544
        %v721 = vunpack.c.2.s8 %v545
        %v722 = vunpack.c.2.s8 %v546
        %v723 = vunpack.c.2.s8 %v547
        %v724 = vunpack.c.2.s8 %v548
        %v725 = vunpack.c.2.s8 %v549
        %v726 = vunpack.c.3.s8 %v542
        %v727 = vunpack.c.3.s8 %v543
        %v728 = vunpack.c.3.s8 %v544
        %v729 = vunpack.c.3.s8 %v545
        %v730 = vunpack.c.3.s8 %v546
        %v731 = vunpack.c.3.s8 %v547
        %v732 = vunpack.c.3.s8 %v548
        %v733 = vunpack.c.3.s8 %v549
        %v734 = vunpack.c.0.s8 %v550
        %v735 = vunpack.c.0.s8 %v551
        %v736 = vunpack.c.0.s8 %v552
        %v737 = vunpack.c.0.s8 %v553
        %v738 = vunpack.c.0.s8 %v554
        %v739 = vunpack.c.0.s8 %v555
        %v740 = vunpack.c.0.s8 %v556
        %v741 = vunpack.c.0.s8 %v557
        %v742 = vunpack.c.1.s8 %v550
        %v743 = vunpack.c.1.s8 %v551
        %v744 = vunpack.c.1.s8 %v552
        %v745 = vunpack.c.1.s8 %v553
        %v746 = vunpack.c.1.s8 %v554
        %v747 = vunpack.c.1.s8 %v555
        %v748 = vunpack.c.1.s8 %v556
        %v749 = vunpack.c.1.s8 %v557
        %v750 = vunpack.c.2.s8 %v550
        %v751 = vunpack.c.2.s8 %v551
        %v752 = vunpack.c.2.s8 %v552
        %v753 = vunpack.c.2.s8 %v553
        %v754 = vunpack.c.2.s8 %v554
        %v755 = vunpack.c.2.s8 %v555
        %v756 = vunpack.c.2.s8 %v556
        %v757 = vunpack.c.2.s8 %v557
        %v758 = vunpack.c.3.s8 %v550
        %v759 = vunpack.c.3.s8 %v551
        %v760 = vunpack.c.3.s8 %v552
        %v761 = vunpack.c.3.s8 %v553
        %v762 = vunpack.c.3.s8 %v554
        %v763 = vunpack.c.3.s8 %v555
        %v764 = vunpack.c.3.s8 %v556
        %v765 = vunpack.c.3.s8 %v557
        %v766 = vunpack.c.0.s8 %v558
        %v767 = vunpack.c.0.s8 %v559
        %v768 = vunpack.c.0.s8 %v560
        %v769 = vunpack.c.0.s8 %v561
        %v770 = vunpack.c.0.s8 %v562
        %v771 = vunpack.c.0.s8 %v563
        %v772 = vunpack.c.0.s8 %v564
        %v773 = vunpack.c.0.s8 %v565
        %v774 = vunpack.c.1.s8 %v558
        %v775 = vunpack.c.1.s8 %v559
        %v776 = vunpack.c.1.s8 %v560
        %v777 = vunpack.c.1.s8 %v561
        %v778 = vunpack.c.1.s8 %v562
        %v779 = vunpack.c.1.s8 %v563
        %v780 = vunpack.c.1.s8 %v564
        %v781 = vunpack.c.1.s8 %v565
        %v782 = vunpack.c.2.s8 %v558
        %v783 = vunpack.c.2.s8 %v559
        %v784 = vunpack.c.2.s8 %v560
        %v785 = vunpack.c.2.s8 %v561
        %v786 = vunpack.c.2.s8 %v562
        %v787 = vunpack.c.2.s8 %v563
        %v788 = vunpack.c.2.s8 %v564
        %v789 = vunpack.c.2.s8 %v565
        %v790 = vunpack.c.3.s8 %v558
        %v791 = vunpack.c.3.s8 %v559
        %v792 = vunpack.c.3.s8 %v560
        %v793 = vunpack.c.3.s8 %v561
        %v794 = vunpack.c.3.s8 %v562
        %v795 = vunpack.c.3.s8 %v563
        %v796 = vunpack.c.3.s8 %v564
        %v797 = vunpack.c.3.s8 %v565
        %v798 = vunpack.c.0.s8 %v566
        %v799 = vunpack.c.0.s8 %v567
        %v800 = vunpack.c.0.s8 %v568
        %v801 = vunpack.c.0.s8 %v569
        %v802 = vunpack.c.0.s8 %v570
        %v803 = vunpack.c.0.s8 %v571
        %v804 = vunpack.c.0.s8 %v572
        %v805 = vunpack.c.0.s8 %v573
        %v806 = vunpack.c.1.s8 %v566
        %v807 = vunpack.c.1.s8 %v567
        %v808 = vunpack.c.1.s8 %v568
        %v809 = vunpack.c.1.s8 %v569
        %v810 = vunpack.c.1.s8 %v570
        %v811 = vunpack.c.1.s8 %v571
        %v812 = vunpack.c.1.s8 %v572
        %v813 = vunpack.c.1.s8 %v573
        %v814 = vunpack.c.2.s8 %v566
        %v815 = vunpack.c.2.s8 %v567
        %v816 = vunpack.c.2.s8 %v568
        %v817 = vunpack.c.2.s8 %v569
        %v818 = vunpack.c.2.s8 %v570
        %v819 = vunpack.c.2.s8 %v571
        %v820 = vunpack.c.2.s8 %v572
        %v821 = vunpack.c.2.s8 %v573
        %v822 = vunpack.c.3.s8 %v566
        %v823 = vunpack.c.3.s8 %v567
        %v824 = vunpack.c.3.s8 %v568
        %v825 = vunpack.c.3.s8 %v569
        %v826 = vunpack.c.3.s8 %v570
        %v827 = vunpack.c.3.s8 %v571
        %v828 = vunpack.c.3.s8 %v572
        %v829 = vunpack.c.3.s8 %v573
        %v830 = vcvt.s32.f32 %v574
        %v831 = vcvt.s32.f32 %v575
        %v832 = vcvt.s32.f32 %v576
        %v833 = vcvt.s32.f32 %v577
        %v834 = vcvt.s32.f32 %v578
        %v835 = vcvt.s32.f32 %v579
        %v836 = vcvt.s32.f32 %v580
        %v837 = vcvt.s32.f32 %v581
        %v838 = vcvt.s32.f32 %v582
        %v839 = vcvt.s32.f32 %v583
        %v840 = vcvt.s32.f32 %v584
        %v841 = vcvt.s32.f32 %v585
        %v842 = vcvt.s32.f32 %v586
        %v843 = vcvt.s32.f32 %v587
        %v844 = vcvt.s32.f32 %v588
        %v845 = vcvt.s32.f32 %v589
        %v846 = vcvt.s32.f32 %v590
        %v847 = vcvt.s32.f32 %v591
        %v848 = vcvt.s32.f32 %v592
        %v849 = vcvt.s32.f32 %v593
        %v850 = vcvt.s32.f32 %v594
        %v851 = vcvt.s32.f32 %v595
        %v852 = vcvt.s32.f32 %v596
        %v853 = vcvt.s32.f32 %v597
        %v854 = vcvt.s32.f32 %v598
        %v855 = vcvt.s32.f32 %v599
        %v856 = vcvt.s32.f32 %v600
        %v857 = vcvt.s32.f32 %v601
        %v858 = vcvt.s32.f32 %v602
        %v859 = vcvt.s32.f32 %v603
        %v860 = vcvt.s32.f32 %v604
        %v861 = vcvt.s32.f32 %v605
        %v862 = vcvt.s32.f32 %v606
        %v863 = vcvt.s32.f32 %v607
        %v864 = vcvt.s32.f32 %v608
        %v865 = vcvt.s32.f32 %v609
        %v866 = vcvt.s32.f32 %v610
        %v867 = vcvt.s32.f32 %v611
        %v868 = vcvt.s32.f32 %v612
        %v869 = vcvt.s32.f32 %v613
        %v870 = vcvt.s32.f32 %v614
        %v871 = vcvt.s32.f32 %v615
        %v872 = vcvt.s32.f32 %v616
        %v873 = vcvt.s32.f32 %v617
        %v874 = vcvt.s32.f32 %v618
        %v875 = vcvt.s32.f32 %v619
        %v876 = vcvt.s32.f32 %v620
        %v877 = vcvt.s32.f32 %v621
        %v878 = vcvt.s32.f32 %v622
        %v879 = vcvt.s32.f32 %v623
        %v880 = vcvt.s32.f32 %v624
        %v881 = vcvt.s32.f32 %v625
        %v882 = vcvt.s32.f32 %v626
        %v883 = vcvt.s32.f32 %v627
        %v884 = vcvt.s32.f32 %v628
        %v885 = vcvt.s32.f32 %v629
        %v886 = vcvt.s32.f32 %v630
        %v887 = vcvt.s32.f32 %v631
        %v888 = vcvt.s32.f32 %v632
        %v889 = vcvt.s32.f32 %v633
        %v890 = vcvt.s32.f32 %v634
        %v891 = vcvt.s32.f32 %v635
        %v892 = vcvt.s32.f32 %v636
        %v893 = vcvt.s32.f32 %v637
        %v894 = vcvt.s32.f32 %v638
        %v895 = vcvt.s32.f32 %v639
        %v896 = vcvt.s32.f32 %v640
        %v897 = vcvt.s32.f32 %v641
        %v898 = vcvt.s32.f32 %v642
        %v899 = vcvt.s32.f32 %v643
        %v900 = vcvt.s32.f32 %v644
        %v901 = vcvt.s32.f32 %v645
        %v902 = vcvt.s32.f32 %v646
        %v903 = vcvt.s32.f32 %v647
        %v904 = vcvt.s32.f32 %v648
        %v905 = vcvt.s32.f32 %v649
        %v906 = vcvt.s32.f32 %v650
        %v907 = vcvt.s32.f32 %v651
        %v908 = vcvt.s32.f32 %v652
        %v909 = vcvt.s32.f32 %v653
        %v910 = vcvt.s32.f32 %v654
        %v911 = vcvt.s32.f32 %v655
        %v912 = vcvt.s32.f32 %v656
        %v913 = vcvt.s32.f32 %v657
        %v914 = vcvt.s32.f32 %v658
        %v915 = vcvt.s32.f32 %v659
        %v916 = vcvt.s32.f32 %v660
        %v917 = vcvt.s32.f32 %v661
        %v918 = vcvt.s32.f32 %v662
        %v919 = vcvt.s32.f32 %v663
        %v920 = vcvt.s32.f32 %v664
        %v921 = vcvt.s32.f32 %v665
        %v922 = vcvt.s32.f32 %v666
        %v923 = vcvt.s32.f32 %v667
        %v924 = vcvt.s32.f32 %v668
        %v925 = vcvt.s32.f32 %v669
        %v926 = vcvt.s32.f32 %v670
        %v927 = vcvt.s32.f32 %v671
        %v928 = vcvt.s32.f32 %v672
        %v929 = vcvt.s32.f32 %v673
        %v930 = vcvt.s32.f32 %v674
        %v931 = vcvt.s32.f32 %v675
        %v932 = vcvt.s32.f32 %v676
        %v933 = vcvt.s32.f32 %v677
        %v934 = vcvt.s32.f32 %v678
        %v935 = vcvt.s32.f32 %v679
        %v936 = vcvt.s32.f32 %v680
        %v937 = vcvt.s32.f32 %v681
        %v938 = vcvt.s32.f32 %v682
        %v939 = vcvt.s32.f32 %v683
        %v940 = vcvt.s32.f32 %v684
        %v941 = vcvt.s32.f32 %v685
        %v942 = vcvt.s32.f32 %v686
        %v943 = vcvt.s32.f32 %v687
        %v944 = vcvt.s32.f32 %v688
        %v945 = vcvt.s32.f32 %v689
        %v946 = vcvt.s32.f32 %v690
        %v947 = vcvt.s32.f32 %v691
        %v948 = vcvt.s32.f32 %v692
        %v949 = vcvt.s32.f32 %v693
        %v950 = vcvt.s32.f32 %v694
        %v951 = vcvt.s32.f32 %v695
        %v952 = vcvt.s32.f32 %v696
        %v953 = vcvt.s32.f32 %v697
        %v954 = vcvt.s32.f32 %v698
        %v955 = vcvt.s32.f32 %v699
        %v956 = vcvt.s32.f32 %v700
        %v957 = vcvt.s32.f32 %v701
        %v958 = vcvt.s32.f32 %v702
        %v959 = vcvt.s32.f32 %v703
        %v960 = vcvt.s32.f32 %v704
        %v961 = vcvt.s32.f32 %v705
        %v962 = vcvt.s32.f32 %v706
        %v963 = vcvt.s32.f32 %v707
        %v964 = vcvt.s32.f32 %v708
        %v965 = vcvt.s32.f32 %v709
        %v966 = vcvt.s32.f32 %v710
        %v967 = vcvt.s32.f32 %v711
        %v968 = vcvt.s32.f32 %v712
        %v969 = vcvt.s32.f32 %v713
        %v970 = vcvt.s32.f32 %v714
        %v971 = vcvt.s32.f32 %v715
        %v972 = vcvt.s32.f32 %v716
        %v973 = vcvt.s32.f32 %v717
        %v974 = vcvt.s32.f32 %v718
        %v975 = vcvt.s32.f32 %v719
        %v976 = vcvt.s32.f32 %v720
        %v977 = vcvt.s32.f32 %v721
        %v978 = vcvt.s32.f32 %v722
        %v979 = vcvt.s32.f32 %v723
        %v980 = vcvt.s32.f32 %v724
        %v981 = vcvt.s32.f32 %v725
        %v982 = vcvt.s32.f32 %v726
        %v983 = vcvt.s32.f32 %v727
        %v984 = vcvt.s32.f32 %v728
        %v985 = vcvt.s32.f32 %v729
        %v986 = vcvt.s32.f32 %v730
        %v987 = vcvt.s32.f32 %v731
        %v988 = vcvt.s32.f32 %v732
        %v989 = vcvt.s32.f32 %v733
        %v990 = vcvt.s32.f32 %v734
        %v991 = vcvt.s32.f32 %v735
        %v992 = vcvt.s32.f32 %v736
        %v993 = vcvt.s32.f32 %v737
        %v994 = vcvt.s32.f32 %v738
        %v995 = vcvt.s32.f32 %v739
        %v996 = vcvt.s32.f32 %v740
        %v997 = vcvt.s32.f32 %v741
        %v998 = vcvt.s32.f32 %v742
        %v999 = vcvt.s32.f32 %v743
        %v1000 = vcvt.s32.f32 %v744
        %v1001 = vcvt.s32.f32 %v745
        %v1002 = vcvt.s32.f32 %v746
        %v1003 = vcvt.s32.f32 %v747
        %v1004 = vcvt.s32.f32 %v748
        %v1005 = vcvt.s32.f32 %v749
        %v1006 = vcvt.s32.f32 %v750
        %v1007 = vcvt.s32.f32 %v751
        %v1008 = vcvt.s32.f32 %v752
        %v1009 = vcvt.s32.f32 %v753
        %v1010 = vcvt.s32.f32 %v754
        %v1011 = vcvt.s32.f32 %v755
        %v1012 = vcvt.s32.f32 %v756
        %v1013 = vcvt.s32.f32 %v757
        %v1014 = vcvt.s32.f32 %v758
        %v1015 = vcvt.s32.f32 %v759
        %v1016 = vcvt.s32.f32 %v760
        %v1017 = vcvt.s32.f32 %v761
        %v1018 = vcvt.s32.f32 %v762
        %v1019 = vcvt.s32.f32 %v763
        %v1020 = vcvt.s32.f32 %v764
        %v1021 = vcvt.s32.f32 %v765
        %v1022 = vcvt.s32.f32 %v766
        %v1023 = vcvt.s32.f32 %v767
        %v1024 = vcvt.s32.f32 %v768
        %v1025 = vcvt.s32.f32 %v769
        %v1026 = vcvt.s32.f32 %v770
        %v1027 = vcvt.s32.f32 %v771
        %v1028 = vcvt.s32.f32 %v772
        %v1029 = vcvt.s32.f32 %v773
        %v1030 = vcvt.s32.f32 %v774
        %v1031 = vcvt.s32.f32 %v775
        %v1032 = vcvt.s32.f32 %v776
        %v1033 = vcvt.s32.f32 %v777
        %v1034 = vcvt.s32.f32 %v778
        %v1035 = vcvt.s32.f32 %v779
        %v1036 = vcvt.s32.f32 %v780
        %v1037 = vcvt.s32.f32 %v781
        %v1038 = vcvt.s32.f32 %v782
        %v1039 = vcvt.s32.f32 %v783
        %v1040 = vcvt.s32.f32 %v784
        %v1041 = vcvt.s32.f32 %v785
        %v1042 = vcvt.s32.f32 %v786
        %v1043 = vcvt.s32.f32 %v787
        %v1044 = vcvt.s32.f32 %v788
        %v1045 = vcvt.s32.f32 %v789
        %v1046 = vcvt.s32.f32 %v790
        %v1047 = vcvt.s32.f32 %v791
        %v1048 = vcvt.s32.f32 %v792
        %v1049 = vcvt.s32.f32 %v793
        %v1050 = vcvt.s32.f32 %v794
        %v1051 = vcvt.s32.f32 %v795
        %v1052 = vcvt.s32.f32 %v796
        %v1053 = vcvt.s32.f32 %v797
        %v1054 = vcvt.s32.f32 %v798
        %v1055 = vcvt.s32.f32 %v799
        %v1056 = vcvt.s32.f32 %v800
        %v1057 = vcvt.s32.f32 %v801
        %v1058 = vcvt.s32.f32 %v802
        %v1059 = vcvt.s32.f32 %v803
        %v1060 = vcvt.s32.f32 %v804
        %v1061 = vcvt.s32.f32 %v805
        %v1062 = vcvt.s32.f32 %v806
        %v1063 = vcvt.s32.f32 %v807
        %v1064 = vcvt.s32.f32 %v808
        %v1065 = vcvt.s32.f32 %v809
        %v1066 = vcvt.s32.f32 %v810
        %v1067 = vcvt.s32.f32 %v811
        %v1068 = vcvt.s32.f32 %v812
        %v1069 = vcvt.s32.f32 %v813
        %v1070 = vcvt.s32.f32 %v814
        %v1071 = vcvt.s32.f32 %v815
        %v1072 = vcvt.s32.f32 %v816
        %v1073 = vcvt.s32.f32 %v817
        %v1074 = vcvt.s32.f32 %v818
        %v1075 = vcvt.s32.f32 %v819
        %v1076 = vcvt.s32.f32 %v820
        %v1077 = vcvt.s32.f32 %v821
        %v1078 = vcvt.s32.f32 %v822
        %v1079 = vcvt.s32.f32 %v823
        %v1080 = vcvt.s32.f32 %v824
        %v1081 = vcvt.s32.f32 %v825
        %v1082 = vcvt.s32.f32 %v826
        %v1083 = vcvt.s32.f32 %v827
        %v1084 = vcvt.s32.f32 %v828
        %v1085 = vcvt.s32.f32 %v829
        %v1086 = vpack.c.bf16 %v838, %v830
        %v1087 = vpack.c.bf16 %v839, %v831
        %v1088 = vpack.c.bf16 %v840, %v832
        %v1089 = vpack.c.bf16 %v841, %v833
        %v1090 = vpack.c.bf16 %v842, %v834
        %v1091 = vpack.c.bf16 %v843, %v835
        %v1092 = vpack.c.bf16 %v844, %v836
        %v1093 = vpack.c.bf16 %v845, %v837
        %v1094 = vpack.c.bf16 %v854, %v846
        %v1095 = vpack.c.bf16 %v855, %v847
        %v1096 = vpack.c.bf16 %v856, %v848
        %v1097 = vpack.c.bf16 %v857, %v849
        %v1098 = vpack.c.bf16 %v858, %v850
        %v1099 = vpack.c.bf16 %v859, %v851
        %v1100 = vpack.c.bf16 %v860, %v852
        %v1101 = vpack.c.bf16 %v861, %v853
        %v1102 = vpack.c.bf16 %v870, %v862
        %v1103 = vpack.c.bf16 %v871, %v863
        %v1104 = vpack.c.bf16 %v872, %v864
        %v1105 = vpack.c.bf16 %v873, %v865
        %v1106 = vpack.c.bf16 %v874, %v866
        %v1107 = vpack.c.bf16 %v875, %v867
        %v1108 = vpack.c.bf16 %v876, %v868
        %v1109 = vpack.c.bf16 %v877, %v869
        %v1110 = vpack.c.bf16 %v886, %v878
        %v1111 = vpack.c.bf16 %v887, %v879
        %v1112 = vpack.c.bf16 %v888, %v880
        %v1113 = vpack.c.bf16 %v889, %v881
        %v1114 = vpack.c.bf16 %v890, %v882
        %v1115 = vpack.c.bf16 %v891, %v883
        %v1116 = vpack.c.bf16 %v892, %v884
        %v1117 = vpack.c.bf16 %v893, %v885
        %v1118 = vpack.c.bf16 %v902, %v894
        %v1119 = vpack.c.bf16 %v903, %v895
        %v1120 = vpack.c.bf16 %v904, %v896
        %v1121 = vpack.c.bf16 %v905, %v897
        %v1122 = vpack.c.bf16 %v906, %v898
        %v1123 = vpack.c.bf16 %v907, %v899
        %v1124 = vpack.c.bf16 %v908, %v900
        %v1125 = vpack.c.bf16 %v909, %v901
        %v1126 = vpack.c.bf16 %v918, %v910
        %v1127 = vpack.c.bf16 %v919, %v911
        %v1128 = vpack.c.bf16 %v920, %v912
        %v1129 = vpack.c.bf16 %v921, %v913
        %v1130 = vpack.c.bf16 %v922, %v914
        %v1131 = vpack.c.bf16 %v923, %v915
        %v1132 = vpack.c.bf16 %v924, %v916
        %v1133 = vpack.c.bf16 %v925, %v917
        %v1134 = vpack.c.bf16 %v934, %v926
        %v1135 = vpack.c.bf16 %v935, %v927
        %v1136 = vpack.c.bf16 %v936, %v928
        %v1137 = vpack.c.bf16 %v937, %v929
        %v1138 = vpack.c.bf16 %v938, %v930
        %v1139 = vpack.c.bf16 %v939, %v931
        %v1140 = vpack.c.bf16 %v940, %v932
        %v1141 = vpack.c.bf16 %v941, %v933
        %v1142 = vpack.c.bf16 %v950, %v942
        %v1143 = vpack.c.bf16 %v951, %v943
        %v1144 = vpack.c.bf16 %v952, %v944
        %v1145 = vpack.c.bf16 %v953, %v945
        %v1146 = vpack.c.bf16 %v954, %v946
        %v1147 = vpack.c.bf16 %v955, %v947
        %v1148 = vpack.c.bf16 %v956, %v948
        %v1149 = vpack.c.bf16 %v957, %v949
        %v1150 = vpack.c.bf16 %v966, %v958
        %v1151 = vpack.c.bf16 %v967, %v959
        %v1152 = vpack.c.bf16 %v968, %v960
        %v1153 = vpack.c.bf16 %v969, %v961
        %v1154 = vpack.c.bf16 %v970, %v962
        %v1155 = vpack.c.bf16 %v971, %v963
        %v1156 = vpack.c.bf16 %v972, %v964
        %v1157 = vpack.c.bf16 %v973, %v965
        %v1158 = vpack.c.bf16 %v982, %v974
        %v1159 = vpack.c.bf16 %v983, %v975
        %v1160 = vpack.c.bf16 %v984, %v976
        %v1161 = vpack.c.bf16 %v985, %v977
        %v1162 = vpack.c.bf16 %v986, %v978
        %v1163 = vpack.c.bf16 %v987, %v979
        %v1164 = vpack.c.bf16 %v988, %v980
        %v1165 = vpack.c.bf16 %v989, %v981
        %v1166 = vpack.c.bf16 %v998, %v990
        %v1167 = vpack.c.bf16 %v999, %v991
        %v1168 = vpack.c.bf16 %v1000, %v992
        %v1169 = vpack.c.bf16 %v1001, %v993
        %v1170 = vpack.c.bf16 %v1002, %v994
        %v1171 = vpack.c.bf16 %v1003, %v995
        %v1172 = vpack.c.bf16 %v1004, %v996
        %v1173 = vpack.c.bf16 %v1005, %v997
        %v1174 = vpack.c.bf16 %v1014, %v1006
        %v1175 = vpack.c.bf16 %v1015, %v1007
        %v1176 = vpack.c.bf16 %v1016, %v1008
        %v1177 = vpack.c.bf16 %v1017, %v1009
        %v1178 = vpack.c.bf16 %v1018, %v1010
        %v1179 = vpack.c.bf16 %v1019, %v1011
        %v1180 = vpack.c.bf16 %v1020, %v1012
        %v1181 = vpack.c.bf16 %v1021, %v1013
        %v1182 = vpack.c.bf16 %v1030, %v1022
        %v1183 = vpack.c.bf16 %v1031, %v1023
        %v1184 = vpack.c.bf16 %v1032, %v1024
        %v1185 = vpack.c.bf16 %v1033, %v1025
        %v1186 = vpack.c.bf16 %v1034, %v1026
        %v1187 = vpack.c.bf16 %v1035, %v1027
        %v1188 = vpack.c.bf16 %v1036, %v1028
        %v1189 = vpack.c.bf16 %v1037, %v1029
        %v1190 = vpack.c.bf16 %v1046, %v1038
        %v1191 = vpack.c.bf16 %v1047, %v1039
        %v1192 = vpack.c.bf16 %v1048, %v1040
        %v1193 = vpack.c.bf16 %v1049, %v1041
        %v1194 = vpack.c.bf16 %v1050, %v1042
        %v1195 = vpack.c.bf16 %v1051, %v1043
        %v1196 = vpack.c.bf16 %v1052, %v1044
        %v1197 = vpack.c.bf16 %v1053, %v1045
        %v1198 = vpack.c.bf16 %v1062, %v1054
        %v1199 = vpack.c.bf16 %v1063, %v1055
        %v1200 = vpack.c.bf16 %v1064, %v1056
        %v1201 = vpack.c.bf16 %v1065, %v1057
        %v1202 = vpack.c.bf16 %v1066, %v1058
        %v1203 = vpack.c.bf16 %v1067, %v1059
        %v1204 = vpack.c.bf16 %v1068, %v1060
        %v1205 = vpack.c.bf16 %v1069, %v1061
        %v1206 = vpack.c.bf16 %v1078, %v1070
        %v1207 = vpack.c.bf16 %v1079, %v1071
        %v1208 = vpack.c.bf16 %v1080, %v1072
        %v1209 = vpack.c.bf16 %v1081, %v1073
        %v1210 = vpack.c.bf16 %v1082, %v1074
        %v1211 = vpack.c.bf16 %v1083, %v1075
        %v1212 = vpack.c.bf16 %v1084, %v1076
        %v1213 = vpack.c.bf16 %v1085, %v1077
        %s1214 = smul.u32 %s22, 1024
        %s1215 = sshra.s32 %s1214, 3
        %s1216 = sand.u32 %s1214, 7
        %s1217 = smul.addr %s1215, 4
        %s1218 = scalar_lea.vmem %s1, %s1217
        %v1219 = vld [vmem:[%s1218] sm:$0xf]
        %v1220 = vld [vmem:[%s1218 + $0x4] sm:$0xf]
        %v1221 = vld [vmem:[%s1218 + $0x8] sm:$0xf]
        %v1222 = vld [vmem:[%s1218 + $0xc] sm:$0xf]
        %v1223 = vld [vmem:[%s1218 + $0x10] sm:$0xf]
        %v1224 = vld [vmem:[%s1218 + $0x14] sm:$0xf]
        %v1225 = vld [vmem:[%s1218 + $0x18] sm:$0xf]
        %v1226 = vld [vmem:[%s1218 + $0x1c] sm:$0xf]
        %v1227 = vld [vmem:[%s1218 + $0x20] sm:$0xf]
        %v1228 = vld [vmem:[%s1218 + $0x24] sm:$0xf]
        %v1229 = vld [vmem:[%s1218 + $0x28] sm:$0xf]
        %v1230 = vld [vmem:[%s1218 + $0x2c] sm:$0xf]
        %v1231 = vld [vmem:[%s1218 + $0x30] sm:$0xf]
        %v1232 = vld [vmem:[%s1218 + $0x34] sm:$0xf]
        %v1233 = vld [vmem:[%s1218 + $0x38] sm:$0xf]
        %v1234 = vld [vmem:[%s1218 + $0x3c] sm:$0xf]
        %v1235 = vld [vmem:[%s1218 + $0x40] sm:$0xf]
        %v1236 = vld [vmem:[%s1218 + $0x44] sm:$0xf]
        %v1237 = vld [vmem:[%s1218 + $0x48] sm:$0xf]
        %v1238 = vld [vmem:[%s1218 + $0x4c] sm:$0xf]
        %v1239 = vld [vmem:[%s1218 + $0x50] sm:$0xf]
        %v1240 = vld [vmem:[%s1218 + $0x54] sm:$0xf]
        %v1241 = vld [vmem:[%s1218 + $0x58] sm:$0xf]
        %v1242 = vld [vmem:[%s1218 + $0x5c] sm:$0xf]
        %v1243 = vld [vmem:[%s1218 + $0x60] sm:$0xf]
        %v1244 = vld [vmem:[%s1218 + $0x64] sm:$0xf]
        %v1245 = vld [vmem:[%s1218 + $0x68] sm:$0xf]
        %v1246 = vld [vmem:[%s1218 + $0x6c] sm:$0xf]
        %v1247 = vld [vmem:[%s1218 + $0x70] sm:$0xf]
        %v1248 = vld [vmem:[%s1218 + $0x74] sm:$0xf]
        %v1249 = vld [vmem:[%s1218 + $0x78] sm:$0xf]
        %v1250 = vld [vmem:[%s1218 + $0x7c] sm:$0xf]
        %v1251 = vld [vmem:[%s1218 + $0x80] sm:$0xf]
        %v1252 = vld [vmem:[%s1218 + $0x84] sm:$0xf]
        %v1253 = vld [vmem:[%s1218 + $0x88] sm:$0xf]
        %v1254 = vld [vmem:[%s1218 + $0x8c] sm:$0xf]
        %v1255 = vld [vmem:[%s1218 + $0x90] sm:$0xf]
        %v1256 = vld [vmem:[%s1218 + $0x94] sm:$0xf]
        %v1257 = vld [vmem:[%s1218 + $0x98] sm:$0xf]
        %v1258 = vld [vmem:[%s1218 + $0x9c] sm:$0xf]
        %v1259 = vld [vmem:[%s1218 + $0xa0] sm:$0xf]
        %v1260 = vld [vmem:[%s1218 + $0xa4] sm:$0xf]
        %v1261 = vld [vmem:[%s1218 + $0xa8] sm:$0xf]
        %v1262 = vld [vmem:[%s1218 + $0xac] sm:$0xf]
        %v1263 = vld [vmem:[%s1218 + $0xb0] sm:$0xf]
        %v1264 = vld [vmem:[%s1218 + $0xb4] sm:$0xf]
        %v1265 = vld [vmem:[%s1218 + $0xb8] sm:$0xf]
        %v1266 = vld [vmem:[%s1218 + $0xbc] sm:$0xf]
        %v1267 = vld [vmem:[%s1218 + $0xc0] sm:$0xf]
        %v1268 = vld [vmem:[%s1218 + $0xc4] sm:$0xf]
        %v1269 = vld [vmem:[%s1218 + $0xc8] sm:$0xf]
        %v1270 = vld [vmem:[%s1218 + $0xcc] sm:$0xf]
        %v1271 = vld [vmem:[%s1218 + $0xd0] sm:$0xf]
        %v1272 = vld [vmem:[%s1218 + $0xd4] sm:$0xf]
        %v1273 = vld [vmem:[%s1218 + $0xd8] sm:$0xf]
        %v1274 = vld [vmem:[%s1218 + $0xdc] sm:$0xf]
        %v1275 = vld [vmem:[%s1218 + $0xe0] sm:$0xf]
        %v1276 = vld [vmem:[%s1218 + $0xe4] sm:$0xf]
        %v1277 = vld [vmem:[%s1218 + $0xe8] sm:$0xf]
        %v1278 = vld [vmem:[%s1218 + $0xec] sm:$0xf]
        %v1279 = vld [vmem:[%s1218 + $0xf0] sm:$0xf]
        %v1280 = vld [vmem:[%s1218 + $0xf4] sm:$0xf]
        %v1281 = vld [vmem:[%s1218 + $0xf8] sm:$0xf]
        %v1282 = vld [vmem:[%s1218 + $0xfc] sm:$0xf]
        %v1283 = vld [vmem:[%s1218 + $0x100] sm:$0xf]
        %v1284 = vld [vmem:[%s1218 + $0x104] sm:$0xf]
        %v1285 = vld [vmem:[%s1218 + $0x108] sm:$0xf]
        %v1286 = vld [vmem:[%s1218 + $0x10c] sm:$0xf]
        %v1287 = vld [vmem:[%s1218 + $0x110] sm:$0xf]
        %v1288 = vld [vmem:[%s1218 + $0x114] sm:$0xf]
        %v1289 = vld [vmem:[%s1218 + $0x118] sm:$0xf]
        %v1290 = vld [vmem:[%s1218 + $0x11c] sm:$0xf]
        %v1291 = vld [vmem:[%s1218 + $0x120] sm:$0xf]
        %v1292 = vld [vmem:[%s1218 + $0x124] sm:$0xf]
        %v1293 = vld [vmem:[%s1218 + $0x128] sm:$0xf]
        %v1294 = vld [vmem:[%s1218 + $0x12c] sm:$0xf]
        %v1295 = vld [vmem:[%s1218 + $0x130] sm:$0xf]
        %v1296 = vld [vmem:[%s1218 + $0x134] sm:$0xf]
        %v1297 = vld [vmem:[%s1218 + $0x138] sm:$0xf]
        %v1298 = vld [vmem:[%s1218 + $0x13c] sm:$0xf]
        %v1299 = vld [vmem:[%s1218 + $0x140] sm:$0xf]
        %v1300 = vld [vmem:[%s1218 + $0x144] sm:$0xf]
        %v1301 = vld [vmem:[%s1218 + $0x148] sm:$0xf]
        %v1302 = vld [vmem:[%s1218 + $0x14c] sm:$0xf]
        %v1303 = vld [vmem:[%s1218 + $0x150] sm:$0xf]
        %v1304 = vld [vmem:[%s1218 + $0x154] sm:$0xf]
        %v1305 = vld [vmem:[%s1218 + $0x158] sm:$0xf]
        %v1306 = vld [vmem:[%s1218 + $0x15c] sm:$0xf]
        %v1307 = vld [vmem:[%s1218 + $0x160] sm:$0xf]
        %v1308 = vld [vmem:[%s1218 + $0x164] sm:$0xf]
        %v1309 = vld [vmem:[%s1218 + $0x168] sm:$0xf]
        %v1310 = vld [vmem:[%s1218 + $0x16c] sm:$0xf]
        %v1311 = vld [vmem:[%s1218 + $0x170] sm:$0xf]
        %v1312 = vld [vmem:[%s1218 + $0x174] sm:$0xf]
        %v1313 = vld [vmem:[%s1218 + $0x178] sm:$0xf]
        %v1314 = vld [vmem:[%s1218 + $0x17c] sm:$0xf]
        %v1315 = vld [vmem:[%s1218 + $0x180] sm:$0xf]
        %v1316 = vld [vmem:[%s1218 + $0x184] sm:$0xf]
        %v1317 = vld [vmem:[%s1218 + $0x188] sm:$0xf]
        %v1318 = vld [vmem:[%s1218 + $0x18c] sm:$0xf]
        %v1319 = vld [vmem:[%s1218 + $0x190] sm:$0xf]
        %v1320 = vld [vmem:[%s1218 + $0x194] sm:$0xf]
        %v1321 = vld [vmem:[%s1218 + $0x198] sm:$0xf]
        %v1322 = vld [vmem:[%s1218 + $0x19c] sm:$0xf]
        %v1323 = vld [vmem:[%s1218 + $0x1a0] sm:$0xf]
        %v1324 = vld [vmem:[%s1218 + $0x1a4] sm:$0xf]
        %v1325 = vld [vmem:[%s1218 + $0x1a8] sm:$0xf]
        %v1326 = vld [vmem:[%s1218 + $0x1ac] sm:$0xf]
        %v1327 = vld [vmem:[%s1218 + $0x1b0] sm:$0xf]
        %v1328 = vld [vmem:[%s1218 + $0x1b4] sm:$0xf]
        %v1329 = vld [vmem:[%s1218 + $0x1b8] sm:$0xf]
        %v1330 = vld [vmem:[%s1218 + $0x1bc] sm:$0xf]
        %v1331 = vld [vmem:[%s1218 + $0x1c0] sm:$0xf]
        %v1332 = vld [vmem:[%s1218 + $0x1c4] sm:$0xf]
        %v1333 = vld [vmem:[%s1218 + $0x1c8] sm:$0xf]
        %v1334 = vld [vmem:[%s1218 + $0x1cc] sm:$0xf]
        %v1335 = vld [vmem:[%s1218 + $0x1d0] sm:$0xf]
        %v1336 = vld [vmem:[%s1218 + $0x1d4] sm:$0xf]
        %v1337 = vld [vmem:[%s1218 + $0x1d8] sm:$0xf]
        %v1338 = vld [vmem:[%s1218 + $0x1dc] sm:$0xf]
        %v1339 = vld [vmem:[%s1218 + $0x1e0] sm:$0xf]
        %v1340 = vld [vmem:[%s1218 + $0x1e4] sm:$0xf]
        %v1341 = vld [vmem:[%s1218 + $0x1e8] sm:$0xf]
        %v1342 = vld [vmem:[%s1218 + $0x1ec] sm:$0xf]
        %v1343 = vld [vmem:[%s1218 + $0x1f0] sm:$0xf]
        %v1344 = vld [vmem:[%s1218 + $0x1f4] sm:$0xf]
        %v1345 = vld [vmem:[%s1218 + $0x1f8] sm:$0xf]
        %v1346 = vld [vmem:[%s1218 + $0x1fc] sm:$0xf]
        %v1347 = vld [vmem:[#allocation2] sm:$0xff]
        %v1348 = vld [vmem:[#allocation2 + $0x8] sm:$0xff]
        %v1349 = vld [vmem:[#allocation2 + $0x10] sm:$0xff]
        %v1350 = vld [vmem:[#allocation2 + $0x18] sm:$0xff]
        %v1351 = vld [vmem:[#allocation2 + $0x20] sm:$0xff]
        %v1352 = vld [vmem:[#allocation2 + $0x28] sm:$0xff]
        %v1353 = vld [vmem:[#allocation2 + $0x30] sm:$0xff]
        %v1354 = vld [vmem:[#allocation2 + $0x38] sm:$0xff]
        %v1355 = vld [vmem:[#allocation2 + $0x40] sm:$0xff]
        %v1356 = vld [vmem:[#allocation2 + $0x48] sm:$0xff]
        %v1357 = vld [vmem:[#allocation2 + $0x50] sm:$0xff]
        %v1358 = vld [vmem:[#allocation2 + $0x58] sm:$0xff]
        %v1359 = vld [vmem:[#allocation2 + $0x60] sm:$0xff]
        %v1360 = vld [vmem:[#allocation2 + $0x68] sm:$0xff]
        %v1361 = vld [vmem:[#allocation2 + $0x70] sm:$0xff]
        %v1362 = vld [vmem:[#allocation2 + $0x78] sm:$0xff]
        %v1363 = vld [vmem:[#allocation2 + $0x80] sm:$0xff]
        %v1364 = vld [vmem:[#allocation2 + $0x88] sm:$0xff]
        %v1365 = vld [vmem:[#allocation2 + $0x90] sm:$0xff]
        %v1366 = vld [vmem:[#allocation2 + $0x98] sm:$0xff]
        %v1367 = vld [vmem:[#allocation2 + $0xa0] sm:$0xff]
        %v1368 = vld [vmem:[#allocation2 + $0xa8] sm:$0xff]
        %v1369 = vld [vmem:[#allocation2 + $0xb0] sm:$0xff]
        %v1370 = vld [vmem:[#allocation2 + $0xb8] sm:$0xff]
        %v1371 = vld [vmem:[#allocation2 + $0xc0] sm:$0xff]
        %v1372 = vld [vmem:[#allocation2 + $0xc8] sm:$0xff]
        %v1373 = vld [vmem:[#allocation2 + $0xd0] sm:$0xff]
        %v1374 = vld [vmem:[#allocation2 + $0xd8] sm:$0xff]
        %v1375 = vld [vmem:[#allocation2 + $0xe0] sm:$0xff]
        %v1376 = vld [vmem:[#allocation2 + $0xe8] sm:$0xff]
        %v1377 = vld [vmem:[#allocation2 + $0xf0] sm:$0xff]
        %v1378 = vld [vmem:[#allocation2 + $0xf8] sm:$0xff]
        %v1507 = vunpack.c.l.b16 %v1219
        %v1508 = vunpack.c.l.b16 %v1220
        %v1509 = vunpack.c.l.b16 %v1221
        %v1510 = vunpack.c.l.b16 %v1222
        %v1511 = vunpack.c.l.b16 %v1223
        %v1512 = vunpack.c.l.b16 %v1224
        %v1513 = vunpack.c.l.b16 %v1225
        %v1514 = vunpack.c.l.b16 %v1226
        %v1515 = vunpack.c.l.b16 %v1227
        %v1516 = vunpack.c.l.b16 %v1228
        %v1517 = vunpack.c.l.b16 %v1229
        %v1518 = vunpack.c.l.b16 %v1230
        %v1519 = vunpack.c.l.b16 %v1231
        %v1520 = vunpack.c.l.b16 %v1232
        %v1521 = vunpack.c.l.b16 %v1233
        %v1522 = vunpack.c.l.b16 %v1234
        %v1523 = vunpack.c.l.b16 %v1235
        %v1524 = vunpack.c.l.b16 %v1236
        %v1525 = vunpack.c.l.b16 %v1237
        %v1526 = vunpack.c.l.b16 %v1238
        %v1527 = vunpack.c.l.b16 %v1239
        %v1528 = vunpack.c.l.b16 %v1240
        %v1529 = vunpack.c.l.b16 %v1241
        %v1530 = vunpack.c.l.b16 %v1242
        %v1531 = vunpack.c.l.b16 %v1243
        %v1532 = vunpack.c.l.b16 %v1244
        %v1533 = vunpack.c.l.b16 %v1245
        %v1534 = vunpack.c.l.b16 %v1246
        %v1535 = vunpack.c.l.b16 %v1247
        %v1536 = vunpack.c.l.b16 %v1248
        %v1537 = vunpack.c.l.b16 %v1249
        %v1538 = vunpack.c.l.b16 %v1250
        %v1539 = vunpack.c.l.b16 %v1251
        %v1540 = vunpack.c.l.b16 %v1252
        %v1541 = vunpack.c.l.b16 %v1253
        %v1542 = vunpack.c.l.b16 %v1254
        %v1543 = vunpack.c.l.b16 %v1255
        %v1544 = vunpack.c.l.b16 %v1256
        %v1545 = vunpack.c.l.b16 %v1257
        %v1546 = vunpack.c.l.b16 %v1258
        %v1547 = vunpack.c.l.b16 %v1259
        %v1548 = vunpack.c.l.b16 %v1260
        %v1549 = vunpack.c.l.b16 %v1261
        %v1550 = vunpack.c.l.b16 %v1262
        %v1551 = vunpack.c.l.b16 %v1263
        %v1552 = vunpack.c.l.b16 %v1264
        %v1553 = vunpack.c.l.b16 %v1265
        %v1554 = vunpack.c.l.b16 %v1266
        %v1555 = vunpack.c.l.b16 %v1267
        %v1556 = vunpack.c.l.b16 %v1268
        %v1557 = vunpack.c.l.b16 %v1269
        %v1558 = vunpack.c.l.b16 %v1270
        %v1559 = vunpack.c.l.b16 %v1271
        %v1560 = vunpack.c.l.b16 %v1272
        %v1561 = vunpack.c.l.b16 %v1273
        %v1562 = vunpack.c.l.b16 %v1274
        %v1563 = vunpack.c.l.b16 %v1275
        %v1564 = vunpack.c.l.b16 %v1276
        %v1565 = vunpack.c.l.b16 %v1277
        %v1566 = vunpack.c.l.b16 %v1278
        %v1567 = vunpack.c.l.b16 %v1279
        %v1568 = vunpack.c.l.b16 %v1280
        %v1569 = vunpack.c.l.b16 %v1281
        %v1570 = vunpack.c.l.b16 %v1282
        %v1571 = vunpack.c.l.b16 %v1283
        %v1572 = vunpack.c.l.b16 %v1284
        %v1573 = vunpack.c.l.b16 %v1285
        %v1574 = vunpack.c.l.b16 %v1286
        %v1575 = vunpack.c.l.b16 %v1287
        %v1576 = vunpack.c.l.b16 %v1288
        %v1577 = vunpack.c.l.b16 %v1289
        %v1578 = vunpack.c.l.b16 %v1290
        %v1579 = vunpack.c.l.b16 %v1291
        %v1580 = vunpack.c.l.b16 %v1292
        %v1581 = vunpack.c.l.b16 %v1293
        %v1582 = vunpack.c.l.b16 %v1294
        %v1583 = vunpack.c.l.b16 %v1295
        %v1584 = vunpack.c.l.b16 %v1296
        %v1585 = vunpack.c.l.b16 %v1297
        %v1586 = vunpack.c.l.b16 %v1298
        %v1587 = vunpack.c.l.b16 %v1299
        %v1588 = vunpack.c.l.b16 %v1300
        %v1589 = vunpack.c.l.b16 %v1301
        %v1590 = vunpack.c.l.b16 %v1302
        %v1591 = vunpack.c.l.b16 %v1303
        %v1592 = vunpack.c.l.b16 %v1304
        %v1593 = vunpack.c.l.b16 %v1305
        %v1594 = vunpack.c.l.b16 %v1306
        %v1595 = vunpack.c.l.b16 %v1307
        %v1596 = vunpack.c.l.b16 %v1308
        %v1597 = vunpack.c.l.b16 %v1309
        %v1598 = vunpack.c.l.b16 %v1310
        %v1599 = vunpack.c.l.b16 %v1311
        %v1600 = vunpack.c.l.b16 %v1312
        %v1601 = vunpack.c.l.b16 %v1313
        %v1602 = vunpack.c.l.b16 %v1314
        %v1603 = vunpack.c.l.b16 %v1315
        %v1604 = vunpack.c.l.b16 %v1316
        %v1605 = vunpack.c.l.b16 %v1317
        %v1606 = vunpack.c.l.b16 %v1318
        %v1607 = vunpack.c.l.b16 %v1319
        %v1608 = vunpack.c.l.b16 %v1320
        %v1609 = vunpack.c.l.b16 %v1321
        %v1610 = vunpack.c.l.b16 %v1322
        %v1611 = vunpack.c.l.b16 %v1323
        %v1612 = vunpack.c.l.b16 %v1324
        %v1613 = vunpack.c.l.b16 %v1325
        %v1614 = vunpack.c.l.b16 %v1326
        %v1615 = vunpack.c.l.b16 %v1327
        %v1616 = vunpack.c.l.b16 %v1328
        %v1617 = vunpack.c.l.b16 %v1329
        %v1618 = vunpack.c.l.b16 %v1330
        %v1619 = vunpack.c.l.b16 %v1331
        %v1620 = vunpack.c.l.b16 %v1332
        %v1621 = vunpack.c.l.b16 %v1333
        %v1622 = vunpack.c.l.b16 %v1334
        %v1623 = vunpack.c.l.b16 %v1335
        %v1624 = vunpack.c.l.b16 %v1336
        %v1625 = vunpack.c.l.b16 %v1337
        %v1626 = vunpack.c.l.b16 %v1338
        %v1627 = vunpack.c.l.b16 %v1339
        %v1628 = vunpack.c.l.b16 %v1340
        %v1629 = vunpack.c.l.b16 %v1341
        %v1630 = vunpack.c.l.b16 %v1342
        %v1631 = vunpack.c.l.b16 %v1343
        %v1632 = vunpack.c.l.b16 %v1344
        %v1633 = vunpack.c.l.b16 %v1345
        %v1634 = vunpack.c.l.b16 %v1346
        %v1635 = vpack.c.b16 %v1508, %v1507
        %v1636 = vpack.c.b16 %v1510, %v1509
        %v1637 = vpack.c.b16 %v1512, %v1511
        %v1638 = vpack.c.b16 %v1514, %v1513
        %v1639 = vpack.c.b16 %v1516, %v1515
        %v1640 = vpack.c.b16 %v1518, %v1517
        %v1641 = vpack.c.b16 %v1520, %v1519
        %v1642 = vpack.c.b16 %v1522, %v1521
        %v1643 = vpack.c.b16 %v1524, %v1523
        %v1644 = vpack.c.b16 %v1526, %v1525
        %v1645 = vpack.c.b16 %v1528, %v1527
        %v1646 = vpack.c.b16 %v1530, %v1529
        %v1647 = vpack.c.b16 %v1532, %v1531
        %v1648 = vpack.c.b16 %v1534, %v1533
        %v1649 = vpack.c.b16 %v1536, %v1535
        %v1650 = vpack.c.b16 %v1538, %v1537
        %v1651 = vpack.c.b16 %v1540, %v1539
        %v1652 = vpack.c.b16 %v1542, %v1541
        %v1653 = vpack.c.b16 %v1544, %v1543
        %v1654 = vpack.c.b16 %v1546, %v1545
        %v1655 = vpack.c.b16 %v1548, %v1547
        %v1656 = vpack.c.b16 %v1550, %v1549
        %v1657 = vpack.c.b16 %v1552, %v1551
        %v1658 = vpack.c.b16 %v1554, %v1553
        %v1659 = vpack.c.b16 %v1556, %v1555
        %v1660 = vpack.c.b16 %v1558, %v1557
        %v1661 = vpack.c.b16 %v1560, %v1559
        %v1662 = vpack.c.b16 %v1562, %v1561
        %v1663 = vpack.c.b16 %v1564, %v1563
        %v1664 = vpack.c.b16 %v1566, %v1565
        %v1665 = vpack.c.b16 %v1568, %v1567
        %v1666 = vpack.c.b16 %v1570, %v1569
        %v1667 = vpack.c.b16 %v1572, %v1571
        %v1668 = vpack.c.b16 %v1574, %v1573
        %v1669 = vpack.c.b16 %v1576, %v1575
        %v1670 = vpack.c.b16 %v1578, %v1577
        %v1671 = vpack.c.b16 %v1580, %v1579
        %v1672 = vpack.c.b16 %v1582, %v1581
        %v1673 = vpack.c.b16 %v1584, %v1583
        %v1674 = vpack.c.b16 %v1586, %v1585
        %v1675 = vpack.c.b16 %v1588, %v1587
        %v1676 = vpack.c.b16 %v1590, %v1589
        %v1677 = vpack.c.b16 %v1592, %v1591
        %v1678 = vpack.c.b16 %v1594, %v1593
        %v1679 = vpack.c.b16 %v1596, %v1595
        %v1680 = vpack.c.b16 %v1598, %v1597
        %v1681 = vpack.c.b16 %v1600, %v1599
        %v1682 = vpack.c.b16 %v1602, %v1601
        %v1683 = vpack.c.b16 %v1604, %v1603
        %v1684 = vpack.c.b16 %v1606, %v1605
        %v1685 = vpack.c.b16 %v1608, %v1607
        %v1686 = vpack.c.b16 %v1610, %v1609
        %v1687 = vpack.c.b16 %v1612, %v1611
        %v1688 = vpack.c.b16 %v1614, %v1613
        %v1689 = vpack.c.b16 %v1616, %v1615
        %v1690 = vpack.c.b16 %v1618, %v1617
        %v1691 = vpack.c.b16 %v1620, %v1619
        %v1692 = vpack.c.b16 %v1622, %v1621
        %v1693 = vpack.c.b16 %v1624, %v1623
        %v1694 = vpack.c.b16 %v1626, %v1625
        %v1695 = vpack.c.b16 %v1628, %v1627
        %v1696 = vpack.c.b16 %v1630, %v1629
        %v1697 = vpack.c.b16 %v1632, %v1631
        %v1698 = vpack.c.b16 %v1634, %v1633
        %1763 = vmatpush.bf16.msra.mxu0 %v1642
        %1764 = vmatpush.bf16.msra.mxu0 %v1641
        %1765 = vmatpush.bf16.msra.mxu0 %v1640
        %1766 = vmatpush.bf16.msra.mxu0 %v1639
        %1767 = vmatpush.bf16.msra.mxu0 %v1638
        %1768 = vmatpush.bf16.msra.mxu0 %v1637
        %1769 = vmatpush.bf16.msra.mxu0 %v1636
        %1770 = vmatpush.bf16.msra.mxu0 %v1635
        %1771 = vmatmul.bf16.gmra.mxu0 %v1086
        %v1772 = vpop.f32.mrf.mxu0
        %v1773 = vadd.f32 0.0, %v1772
        %v1774 = vpop.f32.mrf.mxu0
        %v1775 = vadd.f32 0.0, %v1774
        %1776 = vmatmul.bf16.gmra.mxu0 %v1094
        %v1777 = vpop.f32.mrf.mxu0
        %v1778 = vadd.f32 0.0, %v1777
        %v1779 = vpop.f32.mrf.mxu0
        %v1780 = vadd.f32 0.0, %v1779
        %1781 = vmatmul.bf16.gmra.mxu0 %v1102
        %v1782 = vpop.f32.mrf.mxu0
        %v1783 = vadd.f32 0.0, %v1782
        %v1784 = vpop.f32.mrf.mxu0
        %v1785 = vadd.f32 0.0, %v1784
        %1786 = vmatmul.bf16.gmra.mxu0 %v1110
        %v1787 = vpop.f32.mrf.mxu0
        %v1788 = vadd.f32 0.0, %v1787
        %v1789 = vpop.f32.mrf.mxu0
        %v1790 = vadd.f32 0.0, %v1789
        %1791 = vmatmul.bf16.gmra.mxu0 %v1118
        %v1792 = vpop.f32.mrf.mxu0
        %v1793 = vadd.f32 0.0, %v1792
        %v1794 = vpop.f32.mrf.mxu0
        %v1795 = vadd.f32 0.0, %v1794
        %1796 = vmatmul.bf16.gmra.mxu0 %v1126
        %v1797 = vpop.f32.mrf.mxu0
        %v1798 = vadd.f32 0.0, %v1797
        %v1799 = vpop.f32.mrf.mxu0
        %v1800 = vadd.f32 0.0, %v1799
        %1801 = vmatmul.bf16.gmra.mxu0 %v1134
        %v1802 = vpop.f32.mrf.mxu0
        %v1803 = vadd.f32 0.0, %v1802
        %v1804 = vpop.f32.mrf.mxu0
        %v1805 = vadd.f32 0.0, %v1804
        %1806 = vmatmul.bf16.gmra.mxu0 %v1142
        %v1807 = vpop.f32.mrf.mxu0
        %v1808 = vadd.f32 0.0, %v1807
        %v1809 = vpop.f32.mrf.mxu0
        %v1810 = vadd.f32 0.0, %v1809
        %1811 = vmatmul.bf16.gmra.mxu0 %v1150
        %v1812 = vpop.f32.mrf.mxu0
        %v1813 = vadd.f32 0.0, %v1812
        %v1814 = vpop.f32.mrf.mxu0
        %v1815 = vadd.f32 0.0, %v1814
        %1816 = vmatmul.bf16.gmra.mxu0 %v1158
        %v1817 = vpop.f32.mrf.mxu0
        %v1818 = vadd.f32 0.0, %v1817
        %v1819 = vpop.f32.mrf.mxu0
        %v1820 = vadd.f32 0.0, %v1819
        %1821 = vmatmul.bf16.gmra.mxu0 %v1166
        %v1822 = vpop.f32.mrf.mxu0
        %v1823 = vadd.f32 0.0, %v1822
        %v1824 = vpop.f32.mrf.mxu0
        %v1825 = vadd.f32 0.0, %v1824
        %1826 = vmatmul.bf16.gmra.mxu0 %v1174
        %v1827 = vpop.f32.mrf.mxu0
        %v1828 = vadd.f32 0.0, %v1827
        %v1829 = vpop.f32.mrf.mxu0
        %v1830 = vadd.f32 0.0, %v1829
        %1831 = vmatmul.bf16.gmra.mxu0 %v1182
        %v1832 = vpop.f32.mrf.mxu0
        %v1833 = vadd.f32 0.0, %v1832
        %v1834 = vpop.f32.mrf.mxu0
        %v1835 = vadd.f32 0.0, %v1834
        %1836 = vmatmul.bf16.gmra.mxu0 %v1190
        %v1837 = vpop.f32.mrf.mxu0
        %v1838 = vadd.f32 0.0, %v1837
        %v1839 = vpop.f32.mrf.mxu0
        %v1840 = vadd.f32 0.0, %v1839
        %1841 = vmatmul.bf16.gmra.mxu0 %v1198
        %v1842 = vpop.f32.mrf.mxu0
        %v1843 = vadd.f32 0.0, %v1842
        %v1844 = vpop.f32.mrf.mxu0
        %v1845 = vadd.f32 0.0, %v1844
        %1846 = vmatmul.bf16.gmra.mxu0 %v1206
        %v1847 = vpop.f32.mrf.mxu0
        %v1848 = vadd.f32 0.0, %v1847
        %v1849 = vpop.f32.mrf.mxu0
        %v1850 = vadd.f32 0.0, %v1849
        %1851 = vdwg.mxu0
        %1852 = vmatpush.bf16.msra.mxu0 %v1650
        %1853 = vmatpush.bf16.msra.mxu0 %v1649
        %1854 = vmatpush.bf16.msra.mxu0 %v1648
        %1855 = vmatpush.bf16.msra.mxu0 %v1647
        %1856 = vmatpush.bf16.msra.mxu0 %v1646
        %1857 = vmatpush.bf16.msra.mxu0 %v1645
        %1858 = vmatpush.bf16.msra.mxu0 %v1644
        %1859 = vmatpush.bf16.msra.mxu0 %v1643
        %1860 = vmatmul.bf16.gmra.mxu0 %v1087
        %v1861 = vpop.f32.mrf.mxu0
        %v1862 = vadd.f32 %v1773, %v1861
        %v1863 = vpop.f32.mrf.mxu0
        %v1864 = vadd.f32 %v1775, %v1863
        %1865 = vmatmul.bf16.gmra.mxu0 %v1095
        %v1866 = vpop.f32.mrf.mxu0
        %v1867 = vadd.f32 %v1778, %v1866
        %v1868 = vpop.f32.mrf.mxu0
        %v1869 = vadd.f32 %v1780, %v1868
        %1870 = vmatmul.bf16.gmra.mxu0 %v1103
        %v1871 = vpop.f32.mrf.mxu0
        %v1872 = vadd.f32 %v1783, %v1871
        %v1873 = vpop.f32.mrf.mxu0
        %v1874 = vadd.f32 %v1785, %v1873
        %1875 = vmatmul.bf16.gmra.mxu0 %v1111
        %v1876 = vpop.f32.mrf.mxu0
        %v1877 = vadd.f32 %v1788, %v1876
        %v1878 = vpop.f32.mrf.mxu0
        %v1879 = vadd.f32 %v1790, %v1878
        %1880 = vmatmul.bf16.gmra.mxu0 %v1119
        %v1881 = vpop.f32.mrf.mxu0
        %v1882 = vadd.f32 %v1793, %v1881
        %v1883 = vpop.f32.mrf.mxu0
        %v1884 = vadd.f32 %v1795, %v1883
        %1885 = vmatmul.bf16.gmra.mxu0 %v1127
        %v1886 = vpop.f32.mrf.mxu0
        %v1887 = vadd.f32 %v1798, %v1886
        %v1888 = vpop.f32.mrf.mxu0
        %v1889 = vadd.f32 %v1800, %v1888
        %1890 = vmatmul.bf16.gmra.mxu0 %v1135
        %v1891 = vpop.f32.mrf.mxu0
        %v1892 = vadd.f32 %v1803, %v1891
        %v1893 = vpop.f32.mrf.mxu0
        %v1894 = vadd.f32 %v1805, %v1893
        %1895 = vmatmul.bf16.gmra.mxu0 %v1143
        %v1896 = vpop.f32.mrf.mxu0
        %v1897 = vadd.f32 %v1808, %v1896
        %v1898 = vpop.f32.mrf.mxu0
        %v1899 = vadd.f32 %v1810, %v1898
        %1900 = vmatmul.bf16.gmra.mxu0 %v1151
        %v1901 = vpop.f32.mrf.mxu0
        %v1902 = vadd.f32 %v1813, %v1901
        %v1903 = vpop.f32.mrf.mxu0
        %v1904 = vadd.f32 %v1815, %v1903
        %1905 = vmatmul.bf16.gmra.mxu0 %v1159
        %v1906 = vpop.f32.mrf.mxu0
        %v1907 = vadd.f32 %v1818, %v1906
        %v1908 = vpop.f32.mrf.mxu0
        %v1909 = vadd.f32 %v1820, %v1908
        %1910 = vmatmul.bf16.gmra.mxu0 %v1167
        %v1911 = vpop.f32.mrf.mxu0
        %v1912 = vadd.f32 %v1823, %v1911
        %v1913 = vpop.f32.mrf.mxu0
        %v1914 = vadd.f32 %v1825, %v1913
        %1915 = vmatmul.bf16.gmra.mxu0 %v1175
        %v1916 = vpop.f32.mrf.mxu0
        %v1917 = vadd.f32 %v1828, %v1916
        %v1918 = vpop.f32.mrf.mxu0
        %v1919 = vadd.f32 %v1830, %v1918
        %1920 = vmatmul.bf16.gmra.mxu0 %v1183
        %v1921 = vpop.f32.mrf.mxu0
        %v1922 = vadd.f32 %v1833, %v1921
        %v1923 = vpop.f32.mrf.mxu0
        %v1924 = vadd.f32 %v1835, %v1923
        %1925 = vmatmul.bf16.gmra.mxu0 %v1191
        %v1926 = vpop.f32.mrf.mxu0
        %v1927 = vadd.f32 %v1838, %v1926
        %v1928 = vpop.f32.mrf.mxu0
        %v1929 = vadd.f32 %v1840, %v1928
        %1930 = vmatmul.bf16.gmra.mxu0 %v1199
        %v1931 = vpop.f32.mrf.mxu0
        %v1932 = vadd.f32 %v1843, %v1931
        %v1933 = vpop.f32.mrf.mxu0
        %v1934 = vadd.f32 %v1845, %v1933
        %1935 = vmatmul.bf16.gmra.mxu0 %v1207
        %v1936 = vpop.f32.mrf.mxu0
        %v1937 = vadd.f32 %v1848, %v1936
        %v1938 = vpop.f32.mrf.mxu0
        %v1939 = vadd.f32 %v1850, %v1938
        %1940 = vdwg.mxu0
        %1941 = vmatpush.bf16.msra.mxu0 %v1658
        %1942 = vmatpush.bf16.msra.mxu0 %v1657
        %1943 = vmatpush.bf16.msra.mxu0 %v1656
        %1944 = vmatpush.bf16.msra.mxu0 %v1655
        %1945 = vmatpush.bf16.msra.mxu0 %v1654
        %1946 = vmatpush.bf16.msra.mxu0 %v1653
        %1947 = vmatpush.bf16.msra.mxu0 %v1652
        %1948 = vmatpush.bf16.msra.mxu0 %v1651
        %1949 = vmatmul.bf16.gmra.mxu0 %v1088
        %v1950 = vpop.f32.mrf.mxu0
        %v1951 = vadd.f32 %v1862, %v1950
        %v1952 = vpop.f32.mrf.mxu0
        %v1953 = vadd.f32 %v1864, %v1952
        %1954 = vmatmul.bf16.gmra.mxu0 %v1096
        %v1955 = vpop.f32.mrf.mxu0
        %v1956 = vadd.f32 %v1867, %v1955
        %v1957 = vpop.f32.mrf.mxu0
        %v1958 = vadd.f32 %v1869, %v1957
        %1959 = vmatmul.bf16.gmra.mxu0 %v1104
        %v1960 = vpop.f32.mrf.mxu0
        %v1961 = vadd.f32 %v1872, %v1960
        %v1962 = vpop.f32.mrf.mxu0
        %v1963 = vadd.f32 %v1874, %v1962
        %1964 = vmatmul.bf16.gmra.mxu0 %v1112
        %v1965 = vpop.f32.mrf.mxu0
        %v1966 = vadd.f32 %v1877, %v1965
        %v1967 = vpop.f32.mrf.mxu0
        %v1968 = vadd.f32 %v1879, %v1967
        %1969 = vmatmul.bf16.gmra.mxu0 %v1120
        %v1970 = vpop.f32.mrf.mxu0
        %v1971 = vadd.f32 %v1882, %v1970
        %v1972 = vpop.f32.mrf.mxu0
        %v1973 = vadd.f32 %v1884, %v1972
        %1974 = vmatmul.bf16.gmra.mxu0 %v1128
        %v1975 = vpop.f32.mrf.mxu0
        %v1976 = vadd.f32 %v1887, %v1975
        %v1977 = vpop.f32.mrf.mxu0
        %v1978 = vadd.f32 %v1889, %v1977
        %1979 = vmatmul.bf16.gmra.mxu0 %v1136
        %v1980 = vpop.f32.mrf.mxu0
        %v1981 = vadd.f32 %v1892, %v1980
        %v1982 = vpop.f32.mrf.mxu0
        %v1983 = vadd.f32 %v1894, %v1982
        %1984 = vmatmul.bf16.gmra.mxu0 %v1144
        %v1985 = vpop.f32.mrf.mxu0
        %v1986 = vadd.f32 %v1897, %v1985
        %v1987 = vpop.f32.mrf.mxu0
        %v1988 = vadd.f32 %v1899, %v1987
        %1989 = vmatmul.bf16.gmra.mxu0 %v1152
        %v1990 = vpop.f32.mrf.mxu0
        %v1991 = vadd.f32 %v1902, %v1990
        %v1992 = vpop.f32.mrf.mxu0
        %v1993 = vadd.f32 %v1904, %v1992
        %1994 = vmatmul.bf16.gmra.mxu0 %v1160
        %v1995 = vpop.f32.mrf.mxu0
        %v1996 = vadd.f32 %v1907, %v1995
        %v1997 = vpop.f32.mrf.mxu0
        %v1998 = vadd.f32 %v1909, %v1997
        %1999 = vmatmul.bf16.gmra.mxu0 %v1168
        %v2000 = vpop.f32.mrf.mxu0
        %v2001 = vadd.f32 %v1912, %v2000
        %v2002 = vpop.f32.mrf.mxu0
        %v2003 = vadd.f32 %v1914, %v2002
        %2004 = vmatmul.bf16.gmra.mxu0 %v1176
        %v2005 = vpop.f32.mrf.mxu0
        %v2006 = vadd.f32 %v1917, %v2005
        %v2007 = vpop.f32.mrf.mxu0
        %v2008 = vadd.f32 %v1919, %v2007
        %2009 = vmatmul.bf16.gmra.mxu0 %v1184
        %v2010 = vpop.f32.mrf.mxu0
        %v2011 = vadd.f32 %v1922, %v2010
        %v2012 = vpop.f32.mrf.mxu0
        %v2013 = vadd.f32 %v1924, %v2012
        %2014 = vmatmul.bf16.gmra.mxu0 %v1192
        %v2015 = vpop.f32.mrf.mxu0
        %v2016 = vadd.f32 %v1927, %v2015
        %v2017 = vpop.f32.mrf.mxu0
        %v2018 = vadd.f32 %v1929, %v2017
        %2019 = vmatmul.bf16.gmra.mxu0 %v1200
        %v2020 = vpop.f32.mrf.mxu0
        %v2021 = vadd.f32 %v1932, %v2020
        %v2022 = vpop.f32.mrf.mxu0
        %v2023 = vadd.f32 %v1934, %v2022
        %2024 = vmatmul.bf16.gmra.mxu0 %v1208
        %v2025 = vpop.f32.mrf.mxu0
        %v2026 = vadd.f32 %v1937, %v2025
        %v2027 = vpop.f32.mrf.mxu0
        %v2028 = vadd.f32 %v1939, %v2027
        %2029 = vdwg.mxu0
        %2030 = vmatpush.bf16.msra.mxu0 %v1666
        %2031 = vmatpush.bf16.msra.mxu0 %v1665
        %2032 = vmatpush.bf16.msra.mxu0 %v1664
        %2033 = vmatpush.bf16.msra.mxu0 %v1663
        %2034 = vmatpush.bf16.msra.mxu0 %v1662
        %2035 = vmatpush.bf16.msra.mxu0 %v1661
        %2036 = vmatpush.bf16.msra.mxu0 %v1660
        %2037 = vmatpush.bf16.msra.mxu0 %v1659
        %2038 = vmatmul.bf16.gmra.mxu0 %v1089
        %v2039 = vpop.f32.mrf.mxu0
        %v2040 = vadd.f32 %v1951, %v2039
        %v2041 = vpop.f32.mrf.mxu0
        %v2042 = vadd.f32 %v1953, %v2041
        %2043 = vmatmul.bf16.gmra.mxu0 %v1097
        %v2044 = vpop.f32.mrf.mxu0
        %v2045 = vadd.f32 %v1956, %v2044
        %v2046 = vpop.f32.mrf.mxu0
        %v2047 = vadd.f32 %v1958, %v2046
        %2048 = vmatmul.bf16.gmra.mxu0 %v1105
        %v2049 = vpop.f32.mrf.mxu0
        %v2050 = vadd.f32 %v1961, %v2049
        %v2051 = vpop.f32.mrf.mxu0
        %v2052 = vadd.f32 %v1963, %v2051
        %2053 = vmatmul.bf16.gmra.mxu0 %v1113
        %v2054 = vpop.f32.mrf.mxu0
        %v2055 = vadd.f32 %v1966, %v2054
        %v2056 = vpop.f32.mrf.mxu0
        %v2057 = vadd.f32 %v1968, %v2056
        %2058 = vmatmul.bf16.gmra.mxu0 %v1121
        %v2059 = vpop.f32.mrf.mxu0
        %v2060 = vadd.f32 %v1971, %v2059
        %v2061 = vpop.f32.mrf.mxu0
        %v2062 = vadd.f32 %v1973, %v2061
        %2063 = vmatmul.bf16.gmra.mxu0 %v1129
        %v2064 = vpop.f32.mrf.mxu0
        %v2065 = vadd.f32 %v1976, %v2064
        %v2066 = vpop.f32.mrf.mxu0
        %v2067 = vadd.f32 %v1978, %v2066
        %2068 = vmatmul.bf16.gmra.mxu0 %v1137
        %v2069 = vpop.f32.mrf.mxu0
        %v2070 = vadd.f32 %v1981, %v2069
        %v2071 = vpop.f32.mrf.mxu0
        %v2072 = vadd.f32 %v1983, %v2071
        %2073 = vmatmul.bf16.gmra.mxu0 %v1145
        %v2074 = vpop.f32.mrf.mxu0
        %v2075 = vadd.f32 %v1986, %v2074
        %v2076 = vpop.f32.mrf.mxu0
        %v2077 = vadd.f32 %v1988, %v2076
        %2078 = vmatmul.bf16.gmra.mxu0 %v1153
        %v2079 = vpop.f32.mrf.mxu0
        %v2080 = vadd.f32 %v1991, %v2079
        %v2081 = vpop.f32.mrf.mxu0
        %v2082 = vadd.f32 %v1993, %v2081
        %2083 = vmatmul.bf16.gmra.mxu0 %v1161
        %v2084 = vpop.f32.mrf.mxu0
        %v2085 = vadd.f32 %v1996, %v2084
        %v2086 = vpop.f32.mrf.mxu0
        %v2087 = vadd.f32 %v1998, %v2086
        %2088 = vmatmul.bf16.gmra.mxu0 %v1169
        %v2089 = vpop.f32.mrf.mxu0
        %v2090 = vadd.f32 %v2001, %v2089
        %v2091 = vpop.f32.mrf.mxu0
        %v2092 = vadd.f32 %v2003, %v2091
        %2093 = vmatmul.bf16.gmra.mxu0 %v1177
        %v2094 = vpop.f32.mrf.mxu0
        %v2095 = vadd.f32 %v2006, %v2094
        %v2096 = vpop.f32.mrf.mxu0
        %v2097 = vadd.f32 %v2008, %v2096
        %2098 = vmatmul.bf16.gmra.mxu0 %v1185
        %v2099 = vpop.f32.mrf.mxu0
        %v2100 = vadd.f32 %v2011, %v2099
        %v2101 = vpop.f32.mrf.mxu0
        %v2102 = vadd.f32 %v2013, %v2101
        %2103 = vmatmul.bf16.gmra.mxu0 %v1193
        %v2104 = vpop.f32.mrf.mxu0
        %v2105 = vadd.f32 %v2016, %v2104
        %v2106 = vpop.f32.mrf.mxu0
        %v2107 = vadd.f32 %v2018, %v2106
        %2108 = vmatmul.bf16.gmra.mxu0 %v1201
        %v2109 = vpop.f32.mrf.mxu0
        %v2110 = vadd.f32 %v2021, %v2109
        %v2111 = vpop.f32.mrf.mxu0
        %v2112 = vadd.f32 %v2023, %v2111
        %2113 = vmatmul.bf16.gmra.mxu0 %v1209
        %v2114 = vpop.f32.mrf.mxu0
        %v2115 = vadd.f32 %v2026, %v2114
        %v2116 = vpop.f32.mrf.mxu0
        %v2117 = vadd.f32 %v2028, %v2116
        %2118 = vdwg.mxu0
        %2119 = vmatpush.bf16.msra.mxu0 %v1674
        %2120 = vmatpush.bf16.msra.mxu0 %v1673
        %2121 = vmatpush.bf16.msra.mxu0 %v1672
        %2122 = vmatpush.bf16.msra.mxu0 %v1671
        %2123 = vmatpush.bf16.msra.mxu0 %v1670
        %2124 = vmatpush.bf16.msra.mxu0 %v1669
        %2125 = vmatpush.bf16.msra.mxu0 %v1668
        %2126 = vmatpush.bf16.msra.mxu0 %v1667
        %2127 = vmatmul.bf16.gmra.mxu0 %v1090
        %v2128 = vpop.f32.mrf.mxu0
        %v2129 = vadd.f32 %v2040, %v2128
        %v2130 = vpop.f32.mrf.mxu0
        %v2131 = vadd.f32 %v2042, %v2130
        %2132 = vmatmul.bf16.gmra.mxu0 %v1098
        %v2133 = vpop.f32.mrf.mxu0
        %v2134 = vadd.f32 %v2045, %v2133
        %v2135 = vpop.f32.mrf.mxu0
        %v2136 = vadd.f32 %v2047, %v2135
        %2137 = vmatmul.bf16.gmra.mxu0 %v1106
        %v2138 = vpop.f32.mrf.mxu0
        %v2139 = vadd.f32 %v2050, %v2138
        %v2140 = vpop.f32.mrf.mxu0
        %v2141 = vadd.f32 %v2052, %v2140
        %2142 = vmatmul.bf16.gmra.mxu0 %v1114
        %v2143 = vpop.f32.mrf.mxu0
        %v2144 = vadd.f32 %v2055, %v2143
        %v2145 = vpop.f32.mrf.mxu0
        %v2146 = vadd.f32 %v2057, %v2145
        %2147 = vmatmul.bf16.gmra.mxu0 %v1122
        %v2148 = vpop.f32.mrf.mxu0
        %v2149 = vadd.f32 %v2060, %v2148
        %v2150 = vpop.f32.mrf.mxu0
        %v2151 = vadd.f32 %v2062, %v2150
        %2152 = vmatmul.bf16.gmra.mxu0 %v1130
        %v2153 = vpop.f32.mrf.mxu0
        %v2154 = vadd.f32 %v2065, %v2153
        %v2155 = vpop.f32.mrf.mxu0
        %v2156 = vadd.f32 %v2067, %v2155
        %2157 = vmatmul.bf16.gmra.mxu0 %v1138
        %v2158 = vpop.f32.mrf.mxu0
        %v2159 = vadd.f32 %v2070, %v2158
        %v2160 = vpop.f32.mrf.mxu0
        %v2161 = vadd.f32 %v2072, %v2160
        %2162 = vmatmul.bf16.gmra.mxu0 %v1146
        %v2163 = vpop.f32.mrf.mxu0
        %v2164 = vadd.f32 %v2075, %v2163
        %v2165 = vpop.f32.mrf.mxu0
        %v2166 = vadd.f32 %v2077, %v2165
        %2167 = vmatmul.bf16.gmra.mxu0 %v1154
        %v2168 = vpop.f32.mrf.mxu0
        %v2169 = vadd.f32 %v2080, %v2168
        %v2170 = vpop.f32.mrf.mxu0
        %v2171 = vadd.f32 %v2082, %v2170
        %2172 = vmatmul.bf16.gmra.mxu0 %v1162
        %v2173 = vpop.f32.mrf.mxu0
        %v2174 = vadd.f32 %v2085, %v2173
        %v2175 = vpop.f32.mrf.mxu0
        %v2176 = vadd.f32 %v2087, %v2175
        %2177 = vmatmul.bf16.gmra.mxu0 %v1170
        %v2178 = vpop.f32.mrf.mxu0
        %v2179 = vadd.f32 %v2090, %v2178
        %v2180 = vpop.f32.mrf.mxu0
        %v2181 = vadd.f32 %v2092, %v2180
        %2182 = vmatmul.bf16.gmra.mxu0 %v1178
        %v2183 = vpop.f32.mrf.mxu0
        %v2184 = vadd.f32 %v2095, %v2183
        %v2185 = vpop.f32.mrf.mxu0
        %v2186 = vadd.f32 %v2097, %v2185
        %2187 = vmatmul.bf16.gmra.mxu0 %v1186
        %v2188 = vpop.f32.mrf.mxu0
        %v2189 = vadd.f32 %v2100, %v2188
        %v2190 = vpop.f32.mrf.mxu0
        %v2191 = vadd.f32 %v2102, %v2190
        %2192 = vmatmul.bf16.gmra.mxu0 %v1194
        %v2193 = vpop.f32.mrf.mxu0
        %v2194 = vadd.f32 %v2105, %v2193
        %v2195 = vpop.f32.mrf.mxu0
        %v2196 = vadd.f32 %v2107, %v2195
        %2197 = vmatmul.bf16.gmra.mxu0 %v1202
        %v2198 = vpop.f32.mrf.mxu0
        %v2199 = vadd.f32 %v2110, %v2198
        %v2200 = vpop.f32.mrf.mxu0
        %v2201 = vadd.f32 %v2112, %v2200
        %2202 = vmatmul.bf16.gmra.mxu0 %v1210
        %v2203 = vpop.f32.mrf.mxu0
        %v2204 = vadd.f32 %v2115, %v2203
        %v2205 = vpop.f32.mrf.mxu0
        %v2206 = vadd.f32 %v2117, %v2205
        %2207 = vdwg.mxu0
        %2208 = vmatpush.bf16.msra.mxu0 %v1682
        %2209 = vmatpush.bf16.msra.mxu0 %v1681
        %2210 = vmatpush.bf16.msra.mxu0 %v1680
        %2211 = vmatpush.bf16.msra.mxu0 %v1679
        %2212 = vmatpush.bf16.msra.mxu0 %v1678
        %2213 = vmatpush.bf16.msra.mxu0 %v1677
        %2214 = vmatpush.bf16.msra.mxu0 %v1676
        %2215 = vmatpush.bf16.msra.mxu0 %v1675
        %2216 = vmatmul.bf16.gmra.mxu0 %v1091
        %v2217 = vpop.f32.mrf.mxu0
        %v2218 = vadd.f32 %v2129, %v2217
        %v2219 = vpop.f32.mrf.mxu0
        %v2220 = vadd.f32 %v2131, %v2219
        %2221 = vmatmul.bf16.gmra.mxu0 %v1099
        %v2222 = vpop.f32.mrf.mxu0
        %v2223 = vadd.f32 %v2134, %v2222
        %v2224 = vpop.f32.mrf.mxu0
        %v2225 = vadd.f32 %v2136, %v2224
        %2226 = vmatmul.bf16.gmra.mxu0 %v1107
        %v2227 = vpop.f32.mrf.mxu0
        %v2228 = vadd.f32 %v2139, %v2227
        %v2229 = vpop.f32.mrf.mxu0
        %v2230 = vadd.f32 %v2141, %v2229
        %2231 = vmatmul.bf16.gmra.mxu0 %v1115
        %v2232 = vpop.f32.mrf.mxu0
        %v2233 = vadd.f32 %v2144, %v2232
        %v2234 = vpop.f32.mrf.mxu0
        %v2235 = vadd.f32 %v2146, %v2234
        %2236 = vmatmul.bf16.gmra.mxu0 %v1123
        %v2237 = vpop.f32.mrf.mxu0
        %v2238 = vadd.f32 %v2149, %v2237
        %v2239 = vpop.f32.mrf.mxu0
        %v2240 = vadd.f32 %v2151, %v2239
        %2241 = vmatmul.bf16.gmra.mxu0 %v1131
        %v2242 = vpop.f32.mrf.mxu0
        %v2243 = vadd.f32 %v2154, %v2242
        %v2244 = vpop.f32.mrf.mxu0
        %v2245 = vadd.f32 %v2156, %v2244
        %2246 = vmatmul.bf16.gmra.mxu0 %v1139
        %v2247 = vpop.f32.mrf.mxu0
        %v2248 = vadd.f32 %v2159, %v2247
        %v2249 = vpop.f32.mrf.mxu0
        %v2250 = vadd.f32 %v2161, %v2249
        %2251 = vmatmul.bf16.gmra.mxu0 %v1147
        %v2252 = vpop.f32.mrf.mxu0
        %v2253 = vadd.f32 %v2164, %v2252
        %v2254 = vpop.f32.mrf.mxu0
        %v2255 = vadd.f32 %v2166, %v2254
        %2256 = vmatmul.bf16.gmra.mxu0 %v1155
        %v2257 = vpop.f32.mrf.mxu0
        %v2258 = vadd.f32 %v2169, %v2257
        %v2259 = vpop.f32.mrf.mxu0
        %v2260 = vadd.f32 %v2171, %v2259
        %2261 = vmatmul.bf16.gmra.mxu0 %v1163
        %v2262 = vpop.f32.mrf.mxu0
        %v2263 = vadd.f32 %v2174, %v2262
        %v2264 = vpop.f32.mrf.mxu0
        %v2265 = vadd.f32 %v2176, %v2264
        %2266 = vmatmul.bf16.gmra.mxu0 %v1171
        %v2267 = vpop.f32.mrf.mxu0
        %v2268 = vadd.f32 %v2179, %v2267
        %v2269 = vpop.f32.mrf.mxu0
        %v2270 = vadd.f32 %v2181, %v2269
        %2271 = vmatmul.bf16.gmra.mxu0 %v1179
        %v2272 = vpop.f32.mrf.mxu0
        %v2273 = vadd.f32 %v2184, %v2272
        %v2274 = vpop.f32.mrf.mxu0
        %v2275 = vadd.f32 %v2186, %v2274
        %2276 = vmatmul.bf16.gmra.mxu0 %v1187
        %v2277 = vpop.f32.mrf.mxu0
        %v2278 = vadd.f32 %v2189, %v2277
        %v2279 = vpop.f32.mrf.mxu0
        %v2280 = vadd.f32 %v2191, %v2279
        %2281 = vmatmul.bf16.gmra.mxu0 %v1195
        %v2282 = vpop.f32.mrf.mxu0
        %v2283 = vadd.f32 %v2194, %v2282
        %v2284 = vpop.f32.mrf.mxu0
        %v2285 = vadd.f32 %v2196, %v2284
        %2286 = vmatmul.bf16.gmra.mxu0 %v1203
        %v2287 = vpop.f32.mrf.mxu0
        %v2288 = vadd.f32 %v2199, %v2287
        %v2289 = vpop.f32.mrf.mxu0
        %v2290 = vadd.f32 %v2201, %v2289
        %2291 = vmatmul.bf16.gmra.mxu0 %v1211
        %v2292 = vpop.f32.mrf.mxu0
        %v2293 = vadd.f32 %v2204, %v2292
        %v2294 = vpop.f32.mrf.mxu0
        %v2295 = vadd.f32 %v2206, %v2294
        %2296 = vdwg.mxu0
        %2297 = vmatpush.bf16.msra.mxu0 %v1690
        %2298 = vmatpush.bf16.msra.mxu0 %v1689
        %2299 = vmatpush.bf16.msra.mxu0 %v1688
        %2300 = vmatpush.bf16.msra.mxu0 %v1687
        %2301 = vmatpush.bf16.msra.mxu0 %v1686
        %2302 = vmatpush.bf16.msra.mxu0 %v1685
        %2303 = vmatpush.bf16.msra.mxu0 %v1684
        %2304 = vmatpush.bf16.msra.mxu0 %v1683
        %2305 = vmatmul.bf16.gmra.mxu0 %v1092
        %v2306 = vpop.f32.mrf.mxu0
        %v2307 = vadd.f32 %v2218, %v2306
        %v2308 = vpop.f32.mrf.mxu0
        %v2309 = vadd.f32 %v2220, %v2308
        %2310 = vmatmul.bf16.gmra.mxu0 %v1100
        %v2311 = vpop.f32.mrf.mxu0
        %v2312 = vadd.f32 %v2223, %v2311
        %v2313 = vpop.f32.mrf.mxu0
        %v2314 = vadd.f32 %v2225, %v2313
        %2315 = vmatmul.bf16.gmra.mxu0 %v1108
        %v2316 = vpop.f32.mrf.mxu0
        %v2317 = vadd.f32 %v2228, %v2316
        %v2318 = vpop.f32.mrf.mxu0
        %v2319 = vadd.f32 %v2230, %v2318
        %2320 = vmatmul.bf16.gmra.mxu0 %v1116
        %v2321 = vpop.f32.mrf.mxu0
        %v2322 = vadd.f32 %v2233, %v2321
        %v2323 = vpop.f32.mrf.mxu0
        %v2324 = vadd.f32 %v2235, %v2323
        %2325 = vmatmul.bf16.gmra.mxu0 %v1124
        %v2326 = vpop.f32.mrf.mxu0
        %v2327 = vadd.f32 %v2238, %v2326
        %v2328 = vpop.f32.mrf.mxu0
        %v2329 = vadd.f32 %v2240, %v2328
        %2330 = vmatmul.bf16.gmra.mxu0 %v1132
        %v2331 = vpop.f32.mrf.mxu0
        %v2332 = vadd.f32 %v2243, %v2331
        %v2333 = vpop.f32.mrf.mxu0
        %v2334 = vadd.f32 %v2245, %v2333
        %2335 = vmatmul.bf16.gmra.mxu0 %v1140
        %v2336 = vpop.f32.mrf.mxu0
        %v2337 = vadd.f32 %v2248, %v2336
        %v2338 = vpop.f32.mrf.mxu0
        %v2339 = vadd.f32 %v2250, %v2338
        %2340 = vmatmul.bf16.gmra.mxu0 %v1148
        %v2341 = vpop.f32.mrf.mxu0
        %v2342 = vadd.f32 %v2253, %v2341
        %v2343 = vpop.f32.mrf.mxu0
        %v2344 = vadd.f32 %v2255, %v2343
        %2345 = vmatmul.bf16.gmra.mxu0 %v1156
        %v2346 = vpop.f32.mrf.mxu0
        %v2347 = vadd.f32 %v2258, %v2346
        %v2348 = vpop.f32.mrf.mxu0
        %v2349 = vadd.f32 %v2260, %v2348
        %2350 = vmatmul.bf16.gmra.mxu0 %v1164
        %v2351 = vpop.f32.mrf.mxu0
        %v2352 = vadd.f32 %v2263, %v2351
        %v2353 = vpop.f32.mrf.mxu0
        %v2354 = vadd.f32 %v2265, %v2353
        %2355 = vmatmul.bf16.gmra.mxu0 %v1172
        %v2356 = vpop.f32.mrf.mxu0
        %v2357 = vadd.f32 %v2268, %v2356
        %v2358 = vpop.f32.mrf.mxu0
        %v2359 = vadd.f32 %v2270, %v2358
        %2360 = vmatmul.bf16.gmra.mxu0 %v1180
        %v2361 = vpop.f32.mrf.mxu0
        %v2362 = vadd.f32 %v2273, %v2361
        %v2363 = vpop.f32.mrf.mxu0
        %v2364 = vadd.f32 %v2275, %v2363
        %2365 = vmatmul.bf16.gmra.mxu0 %v1188
        %v2366 = vpop.f32.mrf.mxu0
        %v2367 = vadd.f32 %v2278, %v2366
        %v2368 = vpop.f32.mrf.mxu0
        %v2369 = vadd.f32 %v2280, %v2368
        %2370 = vmatmul.bf16.gmra.mxu0 %v1196
        %v2371 = vpop.f32.mrf.mxu0
        %v2372 = vadd.f32 %v2283, %v2371
        %v2373 = vpop.f32.mrf.mxu0
        %v2374 = vadd.f32 %v2285, %v2373
        %2375 = vmatmul.bf16.gmra.mxu0 %v1204
        %v2376 = vpop.f32.mrf.mxu0
        %v2377 = vadd.f32 %v2288, %v2376
        %v2378 = vpop.f32.mrf.mxu0
        %v2379 = vadd.f32 %v2290, %v2378
        %2380 = vmatmul.bf16.gmra.mxu0 %v1212
        %v2381 = vpop.f32.mrf.mxu0
        %v2382 = vadd.f32 %v2293, %v2381
        %v2383 = vpop.f32.mrf.mxu0
        %v2384 = vadd.f32 %v2295, %v2383
        %2385 = vdwg.mxu0
        %2386 = vmatpush.bf16.msra.mxu0 %v1698
        %2387 = vmatpush.bf16.msra.mxu0 %v1697
        %2388 = vmatpush.bf16.msra.mxu0 %v1696
        %2389 = vmatpush.bf16.msra.mxu0 %v1695
        %2390 = vmatpush.bf16.msra.mxu0 %v1694
        %2391 = vmatpush.bf16.msra.mxu0 %v1693
        %2392 = vmatpush.bf16.msra.mxu0 %v1692
        %2393 = vmatpush.bf16.msra.mxu0 %v1691
        %2394 = vmatmul.bf16.gmra.mxu0 %v1093
        %v2395 = vpop.f32.mrf.mxu0
        %v2396 = vadd.f32 %v2307, %v2395
        %v2397 = vpop.f32.mrf.mxu0
        %v2398 = vadd.f32 %v2309, %v2397
        %2399 = vmatmul.bf16.gmra.mxu0 %v1101
        %v2400 = vpop.f32.mrf.mxu0
        %v2401 = vadd.f32 %v2312, %v2400
        %v2402 = vpop.f32.mrf.mxu0
        %v2403 = vadd.f32 %v2314, %v2402
        %2404 = vmatmul.bf16.gmra.mxu0 %v1109
        %v2405 = vpop.f32.mrf.mxu0
        %v2406 = vadd.f32 %v2317, %v2405
        %v2407 = vpop.f32.mrf.mxu0
        %v2408 = vadd.f32 %v2319, %v2407
        %2409 = vmatmul.bf16.gmra.mxu0 %v1117
        %v2410 = vpop.f32.mrf.mxu0
        %v2411 = vadd.f32 %v2322, %v2410
        %v2412 = vpop.f32.mrf.mxu0
        %v2413 = vadd.f32 %v2324, %v2412
        %2414 = vmatmul.bf16.gmra.mxu0 %v1125
        %v2415 = vpop.f32.mrf.mxu0
        %v2416 = vadd.f32 %v2327, %v2415
        %v2417 = vpop.f32.mrf.mxu0
        %v2418 = vadd.f32 %v2329, %v2417
        %2419 = vmatmul.bf16.gmra.mxu0 %v1133
        %v2420 = vpop.f32.mrf.mxu0
        %v2421 = vadd.f32 %v2332, %v2420
        %v2422 = vpop.f32.mrf.mxu0
        %v2423 = vadd.f32 %v2334, %v2422
        %2424 = vmatmul.bf16.gmra.mxu0 %v1141
        %v2425 = vpop.f32.mrf.mxu0
        %v2426 = vadd.f32 %v2337, %v2425
        %v2427 = vpop.f32.mrf.mxu0
        %v2428 = vadd.f32 %v2339, %v2427
        %2429 = vmatmul.bf16.gmra.mxu0 %v1149
        %v2430 = vpop.f32.mrf.mxu0
        %v2431 = vadd.f32 %v2342, %v2430
        %v2432 = vpop.f32.mrf.mxu0
        %v2433 = vadd.f32 %v2344, %v2432
        %2434 = vmatmul.bf16.gmra.mxu0 %v1157
        %v2435 = vpop.f32.mrf.mxu0
        %v2436 = vadd.f32 %v2347, %v2435
        %v2437 = vpop.f32.mrf.mxu0
        %v2438 = vadd.f32 %v2349, %v2437
        %2439 = vmatmul.bf16.gmra.mxu0 %v1165
        %v2440 = vpop.f32.mrf.mxu0
        %v2441 = vadd.f32 %v2352, %v2440
        %v2442 = vpop.f32.mrf.mxu0
        %v2443 = vadd.f32 %v2354, %v2442
        %2444 = vmatmul.bf16.gmra.mxu0 %v1173
        %v2445 = vpop.f32.mrf.mxu0
        %v2446 = vadd.f32 %v2357, %v2445
        %v2447 = vpop.f32.mrf.mxu0
        %v2448 = vadd.f32 %v2359, %v2447
        %2449 = vmatmul.bf16.gmra.mxu0 %v1181
        %v2450 = vpop.f32.mrf.mxu0
        %v2451 = vadd.f32 %v2362, %v2450
        %v2452 = vpop.f32.mrf.mxu0
        %v2453 = vadd.f32 %v2364, %v2452
        %2454 = vmatmul.bf16.gmra.mxu0 %v1189
        %v2455 = vpop.f32.mrf.mxu0
        %v2456 = vadd.f32 %v2367, %v2455
        %v2457 = vpop.f32.mrf.mxu0
        %v2458 = vadd.f32 %v2369, %v2457
        %2459 = vmatmul.bf16.gmra.mxu0 %v1197
        %v2460 = vpop.f32.mrf.mxu0
        %v2461 = vadd.f32 %v2372, %v2460
        %v2462 = vpop.f32.mrf.mxu0
        %v2463 = vadd.f32 %v2374, %v2462
        %2464 = vmatmul.bf16.gmra.mxu0 %v1205
        %v2465 = vpop.f32.mrf.mxu0
        %v2466 = vadd.f32 %v2377, %v2465
        %v2467 = vpop.f32.mrf.mxu0
        %v2468 = vadd.f32 %v2379, %v2467
        %2469 = vmatmul.bf16.gmra.mxu0 %v1213
        %v2470 = vpop.f32.mrf.mxu0
        %v2471 = vadd.f32 %v2382, %v2470
        %v2472 = vpop.f32.mrf.mxu0
        %v2473 = vadd.f32 %v2384, %v2472
        %2474 = vdwg.mxu0
        %v2475 = vadd.f32 %v1347, %v2396
        %v2476 = vadd.f32 %v1348, %v2398
        %v2477 = vadd.f32 %v1349, %v2401
        %v2478 = vadd.f32 %v1350, %v2403
        %v2479 = vadd.f32 %v1351, %v2406
        %v2480 = vadd.f32 %v1352, %v2408
        %v2481 = vadd.f32 %v1353, %v2411
        %v2482 = vadd.f32 %v1354, %v2413
        %v2483 = vadd.f32 %v1355, %v2416
        %v2484 = vadd.f32 %v1356, %v2418
        %v2485 = vadd.f32 %v1357, %v2421
        %v2486 = vadd.f32 %v1358, %v2423
        %v2487 = vadd.f32 %v1359, %v2426
        %v2488 = vadd.f32 %v1360, %v2428
        %v2489 = vadd.f32 %v1361, %v2431
        %v2490 = vadd.f32 %v1362, %v2433
        %v2491 = vadd.f32 %v1363, %v2436
        %v2492 = vadd.f32 %v1364, %v2438
        %v2493 = vadd.f32 %v1365, %v2441
        %v2494 = vadd.f32 %v1366, %v2443
        %v2495 = vadd.f32 %v1367, %v2446
        %v2496 = vadd.f32 %v1368, %v2448
        %v2497 = vadd.f32 %v1369, %v2451
        %v2498 = vadd.f32 %v1370, %v2453
        %v2499 = vadd.f32 %v1371, %v2456
        %v2500 = vadd.f32 %v1372, %v2458
        %v2501 = vadd.f32 %v1373, %v2461
        %v2502 = vadd.f32 %v1374, %v2463
        %v2503 = vadd.f32 %v1375, %v2466
        %v2504 = vadd.f32 %v1376, %v2468
        %v2505 = vadd.f32 %v1377, %v2471
        %v2506 = vadd.f32 %v1378, %v2473
        %vm2507 = vcmask 261120
        %2508 = vst.msk [vmem:[#allocation2] sm:$0xff] %vm2507, %v2475
        %2509 = vst.msk [vmem:[#allocation2 + $0x8] sm:$0xff] %vm2507, %v2476
        %2510 = vst.msk [vmem:[#allocation2 + $0x10] sm:$0xff] %vm2507, %v2477
        %2511 = vst.msk [vmem:[#allocation2 + $0x18] sm:$0xff] %vm2507, %v2478
        %2512 = vst.msk [vmem:[#allocation2 + $0x20] sm:$0xff] %vm2507, %v2479
        %2513 = vst.msk [vmem:[#allocation2 + $0x28] sm:$0xff] %vm2507, %v2480
        %2514 = vst.msk [vmem:[#allocation2 + $0x30] sm:$0xff] %vm2507, %v2481
        %2515 = vst.msk [vmem:[#allocation2 + $0x38] sm:$0xff] %vm2507, %v2482
        %2516 = vst.msk [vmem:[#allocation2 + $0x40] sm:$0xff] %vm2507, %v2483
        %2517 = vst.msk [vmem:[#allocation2 + $0x48] sm:$0xff] %vm2507, %v2484
        %2518 = vst.msk [vmem:[#allocation2 + $0x50] sm:$0xff] %vm2507, %v2485
        %2519 = vst.msk [vmem:[#allocation2 + $0x58] sm:$0xff] %vm2507, %v2486
        %2520 = vst.msk [vmem:[#allocation2 + $0x60] sm:$0xff] %vm2507, %v2487
        %2521 = vst.msk [vmem:[#allocation2 + $0x68] sm:$0xff] %vm2507, %v2488
        %2522 = vst.msk [vmem:[#allocation2 + $0x70] sm:$0xff] %vm2507, %v2489
        %2523 = vst.msk [vmem:[#allocation2 + $0x78] sm:$0xff] %vm2507, %v2490
        %2524 = vst.msk [vmem:[#allocation2 + $0x80] sm:$0xff] %vm2507, %v2491
        %2525 = vst.msk [vmem:[#allocation2 + $0x88] sm:$0xff] %vm2507, %v2492
        %2526 = vst.msk [vmem:[#allocation2 + $0x90] sm:$0xff] %vm2507, %v2493
        %2527 = vst.msk [vmem:[#allocation2 + $0x98] sm:$0xff] %vm2507, %v2494
        %2528 = vst.msk [vmem:[#allocation2 + $0xa0] sm:$0xff] %vm2507, %v2495
        %2529 = vst.msk [vmem:[#allocation2 + $0xa8] sm:$0xff] %vm2507, %v2496
        %2530 = vst.msk [vmem:[#allocation2 + $0xb0] sm:$0xff] %vm2507, %v2497
        %2531 = vst.msk [vmem:[#allocation2 + $0xb8] sm:$0xff] %vm2507, %v2498
        %2532 = vst.msk [vmem:[#allocation2 + $0xc0] sm:$0xff] %vm2507, %v2499
        %2533 = vst.msk [vmem:[#allocation2 + $0xc8] sm:$0xff] %vm2507, %v2500
        %2534 = vst.msk [vmem:[#allocation2 + $0xd0] sm:$0xff] %vm2507, %v2501
        %2535 = vst.msk [vmem:[#allocation2 + $0xd8] sm:$0xff] %vm2507, %v2502
        %2536 = vst.msk [vmem:[#allocation2 + $0xe0] sm:$0xff] %vm2507, %v2503
        %2537 = vst.msk [vmem:[#allocation2 + $0xe8] sm:$0xff] %vm2507, %v2504
        %2538 = vst.msk [vmem:[#allocation2 + $0xf0] sm:$0xff] %vm2507, %v2505
        %2539 = vst.msk [vmem:[#allocation2 + $0xf8] sm:$0xff] %vm2507, %v2506
        %v2540 = vld [vmem:[#allocation3] sm:$0xff]
        %v2541 = vld [vmem:[#allocation3 + $0x8] sm:$0xff]
        %v2542 = vld [vmem:[#allocation3 + $0x10] sm:$0xff]
        %v2543 = vld [vmem:[#allocation3 + $0x18] sm:$0xff]
        %v2544 = vld [vmem:[#allocation3 + $0x20] sm:$0xff]
        %v2545 = vld [vmem:[#allocation3 + $0x28] sm:$0xff]
        %v2546 = vld [vmem:[#allocation3 + $0x30] sm:$0xff]
        %v2547 = vld [vmem:[#allocation3 + $0x38] sm:$0xff]
        %v2548 = vld [vmem:[#allocation3 + $0x40] sm:$0xff]
        %v2549 = vld [vmem:[#allocation3 + $0x48] sm:$0xff]
        %v2550 = vld [vmem:[#allocation3 + $0x50] sm:$0xff]
        %v2551 = vld [vmem:[#allocation3 + $0x58] sm:$0xff]
        %v2552 = vld [vmem:[#allocation3 + $0x60] sm:$0xff]
        %v2553 = vld [vmem:[#allocation3 + $0x68] sm:$0xff]
        %v2554 = vld [vmem:[#allocation3 + $0x70] sm:$0xff]
        %v2555 = vld [vmem:[#allocation3 + $0x78] sm:$0xff]
        %v2556 = vld [vmem:[#allocation3 + $0x80] sm:$0xff]
        %v2557 = vld [vmem:[#allocation3 + $0x88] sm:$0xff]
        %v2558 = vld [vmem:[#allocation3 + $0x90] sm:$0xff]
        %v2559 = vld [vmem:[#allocation3 + $0x98] sm:$0xff]
        %v2560 = vld [vmem:[#allocation3 + $0xa0] sm:$0xff]
        %v2561 = vld [vmem:[#allocation3 + $0xa8] sm:$0xff]
        %v2562 = vld [vmem:[#allocation3 + $0xb0] sm:$0xff]
        %v2563 = vld [vmem:[#allocation3 + $0xb8] sm:$0xff]
        %v2564 = vld [vmem:[#allocation3 + $0xc0] sm:$0xff]
        %v2565 = vld [vmem:[#allocation3 + $0xc8] sm:$0xff]
        %v2566 = vld [vmem:[#allocation3 + $0xd0] sm:$0xff]
        %v2567 = vld [vmem:[#allocation3 + $0xd8] sm:$0xff]
        %v2568 = vld [vmem:[#allocation3 + $0xe0] sm:$0xff]
        %v2569 = vld [vmem:[#allocation3 + $0xe8] sm:$0xff]
        %v2570 = vld [vmem:[#allocation3 + $0xf0] sm:$0xff]
        %v2571 = vld [vmem:[#allocation3 + $0xf8] sm:$0xff]
        %v2572 = vld [vmem:[%s394] sm:$0xff]
        %v2573 = vld [vmem:[%s394 + $0x8] sm:$0xff]
        %v2574 = vld [vmem:[%s394 + $0x10] sm:$0xff]
        %v2575 = vld [vmem:[%s394 + $0x18] sm:$0xff]
        %v2576 = vld [vmem:[%s394 + $0x20] sm:$0xff]
        %v2577 = vld [vmem:[%s394 + $0x28] sm:$0xff]
        %v2578 = vld [vmem:[%s394 + $0x30] sm:$0xff]
        %v2579 = vld [vmem:[%s394 + $0x38] sm:$0xff]
        %v2580 = vld [vmem:[%s394 + $0x40] sm:$0xff]
        %v2581 = vld [vmem:[%s394 + $0x48] sm:$0xff]
        %v2582 = vld [vmem:[%s394 + $0x50] sm:$0xff]
        %v2583 = vld [vmem:[%s394 + $0x58] sm:$0xff]
        %v2584 = vld [vmem:[%s394 + $0x60] sm:$0xff]
        %v2585 = vld [vmem:[%s394 + $0x68] sm:$0xff]
        %v2586 = vld [vmem:[%s394 + $0x70] sm:$0xff]
        %v2587 = vld [vmem:[%s394 + $0x78] sm:$0xff]
        %v2588 = vld [vmem:[%s394 + $0x80] sm:$0xff]
        %v2589 = vld [vmem:[%s394 + $0x88] sm:$0xff]
        %v2590 = vld [vmem:[%s394 + $0x90] sm:$0xff]
        %v2591 = vld [vmem:[%s394 + $0x98] sm:$0xff]
        %v2592 = vld [vmem:[%s394 + $0xa0] sm:$0xff]
        %v2593 = vld [vmem:[%s394 + $0xa8] sm:$0xff]
        %v2594 = vld [vmem:[%s394 + $0xb0] sm:$0xff]
        %v2595 = vld [vmem:[%s394 + $0xb8] sm:$0xff]
        %v2596 = vld [vmem:[%s394 + $0xc0] sm:$0xff]
        %v2597 = vld [vmem:[%s394 + $0xc8] sm:$0xff]
        %v2598 = vld [vmem:[%s394 + $0xd0] sm:$0xff]
        %v2599 = vld [vmem:[%s394 + $0xd8] sm:$0xff]
        %v2600 = vld [vmem:[%s394 + $0xe0] sm:$0xff]
        %v2601 = vld [vmem:[%s394 + $0xe8] sm:$0xff]
        %v2602 = vld [vmem:[%s394 + $0xf0] sm:$0xff]
        %v2603 = vld [vmem:[%s394 + $0xf8] sm:$0xff]
        %v2604 = vld [vmem:[%s394 + $0x100] sm:$0xff]
        %v2605 = vld [vmem:[%s394 + $0x108] sm:$0xff]
        %v2606 = vld [vmem:[%s394 + $0x110] sm:$0xff]
        %v2607 = vld [vmem:[%s394 + $0x118] sm:$0xff]
        %v2608 = vld [vmem:[%s394 + $0x120] sm:$0xff]
        %v2609 = vld [vmem:[%s394 + $0x128] sm:$0xff]
        %v2610 = vld [vmem:[%s394 + $0x130] sm:$0xff]
        %v2611 = vld [vmem:[%s394 + $0x138] sm:$0xff]
        %v2612 = vld [vmem:[%s394 + $0x140] sm:$0xff]
        %v2613 = vld [vmem:[%s394 + $0x148] sm:$0xff]
        %v2614 = vld [vmem:[%s394 + $0x150] sm:$0xff]
        %v2615 = vld [vmem:[%s394 + $0x158] sm:$0xff]
        %v2616 = vld [vmem:[%s394 + $0x160] sm:$0xff]
        %v2617 = vld [vmem:[%s394 + $0x168] sm:$0xff]
        %v2618 = vld [vmem:[%s394 + $0x170] sm:$0xff]
        %v2619 = vld [vmem:[%s394 + $0x178] sm:$0xff]
        %v2620 = vld [vmem:[%s394 + $0x180] sm:$0xff]
        %v2621 = vld [vmem:[%s394 + $0x188] sm:$0xff]
        %v2622 = vld [vmem:[%s394 + $0x190] sm:$0xff]
        %v2623 = vld [vmem:[%s394 + $0x198] sm:$0xff]
        %v2624 = vld [vmem:[%s394 + $0x1a0] sm:$0xff]
        %v2625 = vld [vmem:[%s394 + $0x1a8] sm:$0xff]
        %v2626 = vld [vmem:[%s394 + $0x1b0] sm:$0xff]
        %v2627 = vld [vmem:[%s394 + $0x1b8] sm:$0xff]
        %v2628 = vld [vmem:[%s394 + $0x1c0] sm:$0xff]
        %v2629 = vld [vmem:[%s394 + $0x1c8] sm:$0xff]
        %v2630 = vld [vmem:[%s394 + $0x1d0] sm:$0xff]
        %v2631 = vld [vmem:[%s394 + $0x1d8] sm:$0xff]
        %v2632 = vld [vmem:[%s394 + $0x1e0] sm:$0xff]
        %v2633 = vld [vmem:[%s394 + $0x1e8] sm:$0xff]
        %v2634 = vld [vmem:[%s394 + $0x1f0] sm:$0xff]
        %v2635 = vld [vmem:[%s394 + $0x1f8] sm:$0xff]
        %v2636 = vunpack.c.0.s8 %v2572
        %v2637 = vunpack.c.0.s8 %v2573
        %v2638 = vunpack.c.0.s8 %v2574
        %v2639 = vunpack.c.0.s8 %v2575
        %v2640 = vunpack.c.0.s8 %v2576
        %v2641 = vunpack.c.0.s8 %v2577
        %v2642 = vunpack.c.0.s8 %v2578
        %v2643 = vunpack.c.0.s8 %v2579
        %v2644 = vunpack.c.1.s8 %v2572
        %v2645 = vunpack.c.1.s8 %v2573
        %v2646 = vunpack.c.1.s8 %v2574
        %v2647 = vunpack.c.1.s8 %v2575
        %v2648 = vunpack.c.1.s8 %v2576
        %v2649 = vunpack.c.1.s8 %v2577
        %v2650 = vunpack.c.1.s8 %v2578
        %v2651 = vunpack.c.1.s8 %v2579
        %v2652 = vunpack.c.2.s8 %v2572
        %v2653 = vunpack.c.2.s8 %v2573
        %v2654 = vunpack.c.2.s8 %v2574
        %v2655 = vunpack.c.2.s8 %v2575
        %v2656 = vunpack.c.2.s8 %v2576
        %v2657 = vunpack.c.2.s8 %v2577
        %v2658 = vunpack.c.2.s8 %v2578
        %v2659 = vunpack.c.2.s8 %v2579
        %v2660 = vunpack.c.3.s8 %v2572
        %v2661 = vunpack.c.3.s8 %v2573
        %v2662 = vunpack.c.3.s8 %v2574
        %v2663 = vunpack.c.3.s8 %v2575
        %v2664 = vunpack.c.3.s8 %v2576
        %v2665 = vunpack.c.3.s8 %v2577
        %v2666 = vunpack.c.3.s8 %v2578
        %v2667 = vunpack.c.3.s8 %v2579
        %v2668 = vunpack.c.0.s8 %v2580
        %v2669 = vunpack.c.0.s8 %v2581
        %v2670 = vunpack.c.0.s8 %v2582
        %v2671 = vunpack.c.0.s8 %v2583
        %v2672 = vunpack.c.0.s8 %v2584
        %v2673 = vunpack.c.0.s8 %v2585
        %v2674 = vunpack.c.0.s8 %v2586
        %v2675 = vunpack.c.0.s8 %v2587
        %v2676 = vunpack.c.1.s8 %v2580
        %v2677 = vunpack.c.1.s8 %v2581
        %v2678 = vunpack.c.1.s8 %v2582
        %v2679 = vunpack.c.1.s8 %v2583
        %v2680 = vunpack.c.1.s8 %v2584
        %v2681 = vunpack.c.1.s8 %v2585
        %v2682 = vunpack.c.1.s8 %v2586
        %v2683 = vunpack.c.1.s8 %v2587
        %v2684 = vunpack.c.2.s8 %v2580
        %v2685 = vunpack.c.2.s8 %v2581
        %v2686 = vunpack.c.2.s8 %v2582
        %v2687 = vunpack.c.2.s8 %v2583
        %v2688 = vunpack.c.2.s8 %v2584
        %v2689 = vunpack.c.2.s8 %v2585
        %v2690 = vunpack.c.2.s8 %v2586
        %v2691 = vunpack.c.2.s8 %v2587
        %v2692 = vunpack.c.3.s8 %v2580
        %v2693 = vunpack.c.3.s8 %v2581
        %v2694 = vunpack.c.3.s8 %v2582
        %v2695 = vunpack.c.3.s8 %v2583
        %v2696 = vunpack.c.3.s8 %v2584
        %v2697 = vunpack.c.3.s8 %v2585
        %v2698 = vunpack.c.3.s8 %v2586
        %v2699 = vunpack.c.3.s8 %v2587
        %v2700 = vunpack.c.0.s8 %v2588
        %v2701 = vunpack.c.0.s8 %v2589
        %v2702 = vunpack.c.0.s8 %v2590
        %v2703 = vunpack.c.0.s8 %v2591
        %v2704 = vunpack.c.0.s8 %v2592
        %v2705 = vunpack.c.0.s8 %v2593
        %v2706 = vunpack.c.0.s8 %v2594
        %v2707 = vunpack.c.0.s8 %v2595
        %v2708 = vunpack.c.1.s8 %v2588
        %v2709 = vunpack.c.1.s8 %v2589
        %v2710 = vunpack.c.1.s8 %v2590
        %v2711 = vunpack.c.1.s8 %v2591
        %v2712 = vunpack.c.1.s8 %v2592
        %v2713 = vunpack.c.1.s8 %v2593
        %v2714 = vunpack.c.1.s8 %v2594
        %v2715 = vunpack.c.1.s8 %v2595
        %v2716 = vunpack.c.2.s8 %v2588
        %v2717 = vunpack.c.2.s8 %v2589
        %v2718 = vunpack.c.2.s8 %v2590
        %v2719 = vunpack.c.2.s8 %v2591
        %v2720 = vunpack.c.2.s8 %v2592
        %v2721 = vunpack.c.2.s8 %v2593
        %v2722 = vunpack.c.2.s8 %v2594
        %v2723 = vunpack.c.2.s8 %v2595
        %v2724 = vunpack.c.3.s8 %v2588
        %v2725 = vunpack.c.3.s8 %v2589
        %v2726 = vunpack.c.3.s8 %v2590
        %v2727 = vunpack.c.3.s8 %v2591
        %v2728 = vunpack.c.3.s8 %v2592
        %v2729 = vunpack.c.3.s8 %v2593
        %v2730 = vunpack.c.3.s8 %v2594
        %v2731 = vunpack.c.3.s8 %v2595
        %v2732 = vunpack.c.0.s8 %v2596
        %v2733 = vunpack.c.0.s8 %v2597
        %v2734 = vunpack.c.0.s8 %v2598
        %v2735 = vunpack.c.0.s8 %v2599
        %v2736 = vunpack.c.0.s8 %v2600
        %v2737 = vunpack.c.0.s8 %v2601
        %v2738 = vunpack.c.0.s8 %v2602
        %v2739 = vunpack.c.0.s8 %v2603
        %v2740 = vunpack.c.1.s8 %v2596
        %v2741 = vunpack.c.1.s8 %v2597
        %v2742 = vunpack.c.1.s8 %v2598
        %v2743 = vunpack.c.1.s8 %v2599
        %v2744 = vunpack.c.1.s8 %v2600
        %v2745 = vunpack.c.1.s8 %v2601
        %v2746 = vunpack.c.1.s8 %v2602
        %v2747 = vunpack.c.1.s8 %v2603
        %v2748 = vunpack.c.2.s8 %v2596
        %v2749 = vunpack.c.2.s8 %v2597
        %v2750 = vunpack.c.2.s8 %v2598
        %v2751 = vunpack.c.2.s8 %v2599
        %v2752 = vunpack.c.2.s8 %v2600
        %v2753 = vunpack.c.2.s8 %v2601
        %v2754 = vunpack.c.2.s8 %v2602
        %v2755 = vunpack.c.2.s8 %v2603
        %v2756 = vunpack.c.3.s8 %v2596
        %v2757 = vunpack.c.3.s8 %v2597
        %v2758 = vunpack.c.3.s8 %v2598
        %v2759 = vunpack.c.3.s8 %v2599
        %v2760 = vunpack.c.3.s8 %v2600
        %v2761 = vunpack.c.3.s8 %v2601
        %v2762 = vunpack.c.3.s8 %v2602
        %v2763 = vunpack.c.3.s8 %v2603
        %v2764 = vunpack.c.0.s8 %v2604
        %v2765 = vunpack.c.0.s8 %v2605
        %v2766 = vunpack.c.0.s8 %v2606
        %v2767 = vunpack.c.0.s8 %v2607
        %v2768 = vunpack.c.0.s8 %v2608
        %v2769 = vunpack.c.0.s8 %v2609
        %v2770 = vunpack.c.0.s8 %v2610
        %v2771 = vunpack.c.0.s8 %v2611
        %v2772 = vunpack.c.1.s8 %v2604
        %v2773 = vunpack.c.1.s8 %v2605
        %v2774 = vunpack.c.1.s8 %v2606
        %v2775 = vunpack.c.1.s8 %v2607
        %v2776 = vunpack.c.1.s8 %v2608
        %v2777 = vunpack.c.1.s8 %v2609
        %v2778 = vunpack.c.1.s8 %v2610
        %v2779 = vunpack.c.1.s8 %v2611
        %v2780 = vunpack.c.2.s8 %v2604
        %v2781 = vunpack.c.2.s8 %v2605
        %v2782 = vunpack.c.2.s8 %v2606
        %v2783 = vunpack.c.2.s8 %v2607
        %v2784 = vunpack.c.2.s8 %v2608
        %v2785 = vunpack.c.2.s8 %v2609
        %v2786 = vunpack.c.2.s8 %v2610
        %v2787 = vunpack.c.2.s8 %v2611
        %v2788 = vunpack.c.3.s8 %v2604
        %v2789 = vunpack.c.3.s8 %v2605
        %v2790 = vunpack.c.3.s8 %v2606
        %v2791 = vunpack.c.3.s8 %v2607
        %v2792 = vunpack.c.3.s8 %v2608
        %v2793 = vunpack.c.3.s8 %v2609
        %v2794 = vunpack.c.3.s8 %v2610
        %v2795 = vunpack.c.3.s8 %v2611
        %v2796 = vunpack.c.0.s8 %v2612
        %v2797 = vunpack.c.0.s8 %v2613
        %v2798 = vunpack.c.0.s8 %v2614
        %v2799 = vunpack.c.0.s8 %v2615
        %v2800 = vunpack.c.0.s8 %v2616
        %v2801 = vunpack.c.0.s8 %v2617
        %v2802 = vunpack.c.0.s8 %v2618
        %v2803 = vunpack.c.0.s8 %v2619
        %v2804 = vunpack.c.1.s8 %v2612
        %v2805 = vunpack.c.1.s8 %v2613
        %v2806 = vunpack.c.1.s8 %v2614
        %v2807 = vunpack.c.1.s8 %v2615
        %v2808 = vunpack.c.1.s8 %v2616
        %v2809 = vunpack.c.1.s8 %v2617
        %v2810 = vunpack.c.1.s8 %v2618
        %v2811 = vunpack.c.1.s8 %v2619
        %v2812 = vunpack.c.2.s8 %v2612
        %v2813 = vunpack.c.2.s8 %v2613
        %v2814 = vunpack.c.2.s8 %v2614
        %v2815 = vunpack.c.2.s8 %v2615
        %v2816 = vunpack.c.2.s8 %v2616
        %v2817 = vunpack.c.2.s8 %v2617
        %v2818 = vunpack.c.2.s8 %v2618
        %v2819 = vunpack.c.2.s8 %v2619
        %v2820 = vunpack.c.3.s8 %v2612
        %v2821 = vunpack.c.3.s8 %v2613
        %v2822 = vunpack.c.3.s8 %v2614
        %v2823 = vunpack.c.3.s8 %v2615
        %v2824 = vunpack.c.3.s8 %v2616
        %v2825 = vunpack.c.3.s8 %v2617
        %v2826 = vunpack.c.3.s8 %v2618
        %v2827 = vunpack.c.3.s8 %v2619
        %v2828 = vunpack.c.0.s8 %v2620
        %v2829 = vunpack.c.0.s8 %v2621
        %v2830 = vunpack.c.0.s8 %v2622
        %v2831 = vunpack.c.0.s8 %v2623
        %v2832 = vunpack.c.0.s8 %v2624
        %v2833 = vunpack.c.0.s8 %v2625
        %v2834 = vunpack.c.0.s8 %v2626
        %v2835 = vunpack.c.0.s8 %v2627
        %v2836 = vunpack.c.1.s8 %v2620
        %v2837 = vunpack.c.1.s8 %v2621
        %v2838 = vunpack.c.1.s8 %v2622
        %v2839 = vunpack.c.1.s8 %v2623
        %v2840 = vunpack.c.1.s8 %v2624
        %v2841 = vunpack.c.1.s8 %v2625
        %v2842 = vunpack.c.1.s8 %v2626
        %v2843 = vunpack.c.1.s8 %v2627
        %v2844 = vunpack.c.2.s8 %v2620
        %v2845 = vunpack.c.2.s8 %v2621
        %v2846 = vunpack.c.2.s8 %v2622
        %v2847 = vunpack.c.2.s8 %v2623
        %v2848 = vunpack.c.2.s8 %v2624
        %v2849 = vunpack.c.2.s8 %v2625
        %v2850 = vunpack.c.2.s8 %v2626
        %v2851 = vunpack.c.2.s8 %v2627
        %v2852 = vunpack.c.3.s8 %v2620
        %v2853 = vunpack.c.3.s8 %v2621
        %v2854 = vunpack.c.3.s8 %v2622
        %v2855 = vunpack.c.3.s8 %v2623
        %v2856 = vunpack.c.3.s8 %v2624
        %v2857 = vunpack.c.3.s8 %v2625
        %v2858 = vunpack.c.3.s8 %v2626
        %v2859 = vunpack.c.3.s8 %v2627
        %v2860 = vunpack.c.0.s8 %v2628
        %v2861 = vunpack.c.0.s8 %v2629
        %v2862 = vunpack.c.0.s8 %v2630
        %v2863 = vunpack.c.0.s8 %v2631
        %v2864 = vunpack.c.0.s8 %v2632
        %v2865 = vunpack.c.0.s8 %v2633
        %v2866 = vunpack.c.0.s8 %v2634
        %v2867 = vunpack.c.0.s8 %v2635
        %v2868 = vunpack.c.1.s8 %v2628
        %v2869 = vunpack.c.1.s8 %v2629
        %v2870 = vunpack.c.1.s8 %v2630
        %v2871 = vunpack.c.1.s8 %v2631
        %v2872 = vunpack.c.1.s8 %v2632
        %v2873 = vunpack.c.1.s8 %v2633
        %v2874 = vunpack.c.1.s8 %v2634
        %v2875 = vunpack.c.1.s8 %v2635
        %v2876 = vunpack.c.2.s8 %v2628
        %v2877 = vunpack.c.2.s8 %v2629
        %v2878 = vunpack.c.2.s8 %v2630
        %v2879 = vunpack.c.2.s8 %v2631
        %v2880 = vunpack.c.2.s8 %v2632
        %v2881 = vunpack.c.2.s8 %v2633
        %v2882 = vunpack.c.2.s8 %v2634
        %v2883 = vunpack.c.2.s8 %v2635
        %v2884 = vunpack.c.3.s8 %v2628
        %v2885 = vunpack.c.3.s8 %v2629
        %v2886 = vunpack.c.3.s8 %v2630
        %v2887 = vunpack.c.3.s8 %v2631
        %v2888 = vunpack.c.3.s8 %v2632
        %v2889 = vunpack.c.3.s8 %v2633
        %v2890 = vunpack.c.3.s8 %v2634
        %v2891 = vunpack.c.3.s8 %v2635
        %v2892 = vcvt.s32.f32 %v2636
        %v2893 = vcvt.s32.f32 %v2637
        %v2894 = vcvt.s32.f32 %v2638
        %v2895 = vcvt.s32.f32 %v2639
        %v2896 = vcvt.s32.f32 %v2640
        %v2897 = vcvt.s32.f32 %v2641
        %v2898 = vcvt.s32.f32 %v2642
        %v2899 = vcvt.s32.f32 %v2643
        %v2900 = vcvt.s32.f32 %v2644
        %v2901 = vcvt.s32.f32 %v2645
        %v2902 = vcvt.s32.f32 %v2646
        %v2903 = vcvt.s32.f32 %v2647
        %v2904 = vcvt.s32.f32 %v2648
        %v2905 = vcvt.s32.f32 %v2649
        %v2906 = vcvt.s32.f32 %v2650
        %v2907 = vcvt.s32.f32 %v2651
        %v2908 = vcvt.s32.f32 %v2652
        %v2909 = vcvt.s32.f32 %v2653
        %v2910 = vcvt.s32.f32 %v2654
        %v2911 = vcvt.s32.f32 %v2655
        %v2912 = vcvt.s32.f32 %v2656
        %v2913 = vcvt.s32.f32 %v2657
        %v2914 = vcvt.s32.f32 %v2658
        %v2915 = vcvt.s32.f32 %v2659
        %v2916 = vcvt.s32.f32 %v2660
        %v2917 = vcvt.s32.f32 %v2661
        %v2918 = vcvt.s32.f32 %v2662
        %v2919 = vcvt.s32.f32 %v2663
        %v2920 = vcvt.s32.f32 %v2664
        %v2921 = vcvt.s32.f32 %v2665
        %v2922 = vcvt.s32.f32 %v2666
        %v2923 = vcvt.s32.f32 %v2667
        %v2924 = vcvt.s32.f32 %v2668
        %v2925 = vcvt.s32.f32 %v2669
        %v2926 = vcvt.s32.f32 %v2670
        %v2927 = vcvt.s32.f32 %v2671
        %v2928 = vcvt.s32.f32 %v2672
        %v2929 = vcvt.s32.f32 %v2673
        %v2930 = vcvt.s32.f32 %v2674
        %v2931 = vcvt.s32.f32 %v2675
        %v2932 = vcvt.s32.f32 %v2676
        %v2933 = vcvt.s32.f32 %v2677
        %v2934 = vcvt.s32.f32 %v2678
        %v2935 = vcvt.s32.f32 %v2679
        %v2936 = vcvt.s32.f32 %v2680
        %v2937 = vcvt.s32.f32 %v2681
        %v2938 = vcvt.s32.f32 %v2682
        %v2939 = vcvt.s32.f32 %v2683
        %v2940 = vcvt.s32.f32 %v2684
        %v2941 = vcvt.s32.f32 %v2685
        %v2942 = vcvt.s32.f32 %v2686
        %v2943 = vcvt.s32.f32 %v2687
        %v2944 = vcvt.s32.f32 %v2688
        %v2945 = vcvt.s32.f32 %v2689
        %v2946 = vcvt.s32.f32 %v2690
        %v2947 = vcvt.s32.f32 %v2691
        %v2948 = vcvt.s32.f32 %v2692
        %v2949 = vcvt.s32.f32 %v2693
        %v2950 = vcvt.s32.f32 %v2694
        %v2951 = vcvt.s32.f32 %v2695
        %v2952 = vcvt.s32.f32 %v2696
        %v2953 = vcvt.s32.f32 %v2697
        %v2954 = vcvt.s32.f32 %v2698
        %v2955 = vcvt.s32.f32 %v2699
        %v2956 = vcvt.s32.f32 %v2700
        %v2957 = vcvt.s32.f32 %v2701
        %v2958 = vcvt.s32.f32 %v2702
        %v2959 = vcvt.s32.f32 %v2703
        %v2960 = vcvt.s32.f32 %v2704
        %v2961 = vcvt.s32.f32 %v2705
        %v2962 = vcvt.s32.f32 %v2706
        %v2963 = vcvt.s32.f32 %v2707
        %v2964 = vcvt.s32.f32 %v2708
        %v2965 = vcvt.s32.f32 %v2709
        %v2966 = vcvt.s32.f32 %v2710
        %v2967 = vcvt.s32.f32 %v2711
        %v2968 = vcvt.s32.f32 %v2712
        %v2969 = vcvt.s32.f32 %v2713
        %v2970 = vcvt.s32.f32 %v2714
        %v2971 = vcvt.s32.f32 %v2715
        %v2972 = vcvt.s32.f32 %v2716
        %v2973 = vcvt.s32.f32 %v2717
        %v2974 = vcvt.s32.f32 %v2718
        %v2975 = vcvt.s32.f32 %v2719
        %v2976 = vcvt.s32.f32 %v2720
        %v2977 = vcvt.s32.f32 %v2721
        %v2978 = vcvt.s32.f32 %v2722
        %v2979 = vcvt.s32.f32 %v2723
        %v2980 = vcvt.s32.f32 %v2724
        %v2981 = vcvt.s32.f32 %v2725
        %v2982 = vcvt.s32.f32 %v2726
        %v2983 = vcvt.s32.f32 %v2727
        %v2984 = vcvt.s32.f32 %v2728
        %v2985 = vcvt.s32.f32 %v2729
        %v2986 = vcvt.s32.f32 %v2730
        %v2987 = vcvt.s32.f32 %v2731
        %v2988 = vcvt.s32.f32 %v2732
        %v2989 = vcvt.s32.f32 %v2733
        %v2990 = vcvt.s32.f32 %v2734
        %v2991 = vcvt.s32.f32 %v2735
        %v2992 = vcvt.s32.f32 %v2736
        %v2993 = vcvt.s32.f32 %v2737
        %v2994 = vcvt.s32.f32 %v2738
        %v2995 = vcvt.s32.f32 %v2739
        %v2996 = vcvt.s32.f32 %v2740
        %v2997 = vcvt.s32.f32 %v2741
        %v2998 = vcvt.s32.f32 %v2742
        %v2999 = vcvt.s32.f32 %v2743
        %v3000 = vcvt.s32.f32 %v2744
        %v3001 = vcvt.s32.f32 %v2745
        %v3002 = vcvt.s32.f32 %v2746
        %v3003 = vcvt.s32.f32 %v2747
        %v3004 = vcvt.s32.f32 %v2748
        %v3005 = vcvt.s32.f32 %v2749
        %v3006 = vcvt.s32.f32 %v2750
        %v3007 = vcvt.s32.f32 %v2751
        %v3008 = vcvt.s32.f32 %v2752
        %v3009 = vcvt.s32.f32 %v2753
        %v3010 = vcvt.s32.f32 %v2754
        %v3011 = vcvt.s32.f32 %v2755
        %v3012 = vcvt.s32.f32 %v2756
        %v3013 = vcvt.s32.f32 %v2757
        %v3014 = vcvt.s32.f32 %v2758
        %v3015 = vcvt.s32.f32 %v2759
        %v3016 = vcvt.s32.f32 %v2760
        %v3017 = vcvt.s32.f32 %v2761
        %v3018 = vcvt.s32.f32 %v2762
        %v3019 = vcvt.s32.f32 %v2763
        %v3020 = vcvt.s32.f32 %v2764
        %v3021 = vcvt.s32.f32 %v2765
        %v3022 = vcvt.s32.f32 %v2766
        %v3023 = vcvt.s32.f32 %v2767
        %v3024 = vcvt.s32.f32 %v2768
        %v3025 = vcvt.s32.f32 %v2769
        %v3026 = vcvt.s32.f32 %v2770
        %v3027 = vcvt.s32.f32 %v2771
        %v3028 = vcvt.s32.f32 %v2772
        %v3029 = vcvt.s32.f32 %v2773
        %v3030 = vcvt.s32.f32 %v2774
        %v3031 = vcvt.s32.f32 %v2775
        %v3032 = vcvt.s32.f32 %v2776
        %v3033 = vcvt.s32.f32 %v2777
        %v3034 = vcvt.s32.f32 %v2778
        %v3035 = vcvt.s32.f32 %v2779
        %v3036 = vcvt.s32.f32 %v2780
        %v3037 = vcvt.s32.f32 %v2781
        %v3038 = vcvt.s32.f32 %v2782
        %v3039 = vcvt.s32.f32 %v2783
        %v3040 = vcvt.s32.f32 %v2784
        %v3041 = vcvt.s32.f32 %v2785
        %v3042 = vcvt.s32.f32 %v2786
        %v3043 = vcvt.s32.f32 %v2787
        %v3044 = vcvt.s32.f32 %v2788
        %v3045 = vcvt.s32.f32 %v2789
        %v3046 = vcvt.s32.f32 %v2790
        %v3047 = vcvt.s32.f32 %v2791
        %v3048 = vcvt.s32.f32 %v2792
        %v3049 = vcvt.s32.f32 %v2793
        %v3050 = vcvt.s32.f32 %v2794
        %v3051 = vcvt.s32.f32 %v2795
        %v3052 = vcvt.s32.f32 %v2796
        %v3053 = vcvt.s32.f32 %v2797
        %v3054 = vcvt.s32.f32 %v2798
        %v3055 = vcvt.s32.f32 %v2799
        %v3056 = vcvt.s32.f32 %v2800
        %v3057 = vcvt.s32.f32 %v2801
        %v3058 = vcvt.s32.f32 %v2802
        %v3059 = vcvt.s32.f32 %v2803
        %v3060 = vcvt.s32.f32 %v2804
        %v3061 = vcvt.s32.f32 %v2805
        %v3062 = vcvt.s32.f32 %v2806
        %v3063 = vcvt.s32.f32 %v2807
        %v3064 = vcvt.s32.f32 %v2808
        %v3065 = vcvt.s32.f32 %v2809
        %v3066 = vcvt.s32.f32 %v2810
        %v3067 = vcvt.s32.f32 %v2811
        %v3068 = vcvt.s32.f32 %v2812
        %v3069 = vcvt.s32.f32 %v2813
        %v3070 = vcvt.s32.f32 %v2814
        %v3071 = vcvt.s32.f32 %v2815
        %v3072 = vcvt.s32.f32 %v2816
        %v3073 = vcvt.s32.f32 %v2817
        %v3074 = vcvt.s32.f32 %v2818
        %v3075 = vcvt.s32.f32 %v2819
        %v3076 = vcvt.s32.f32 %v2820
        %v3077 = vcvt.s32.f32 %v2821
        %v3078 = vcvt.s32.f32 %v2822
        %v3079 = vcvt.s32.f32 %v2823
        %v3080 = vcvt.s32.f32 %v2824
        %v3081 = vcvt.s32.f32 %v2825
        %v3082 = vcvt.s32.f32 %v2826
        %v3083 = vcvt.s32.f32 %v2827
        %v3084 = vcvt.s32.f32 %v2828
        %v3085 = vcvt.s32.f32 %v2829
        %v3086 = vcvt.s32.f32 %v2830
        %v3087 = vcvt.s32.f32 %v2831
        %v3088 = vcvt.s32.f32 %v2832
        %v3089 = vcvt.s32.f32 %v2833
        %v3090 = vcvt.s32.f32 %v2834
        %v3091 = vcvt.s32.f32 %v2835
        %v3092 = vcvt.s32.f32 %v2836
        %v3093 = vcvt.s32.f32 %v2837
        %v3094 = vcvt.s32.f32 %v2838
        %v3095 = vcvt.s32.f32 %v2839
        %v3096 = vcvt.s32.f32 %v2840
        %v3097 = vcvt.s32.f32 %v2841
        %v3098 = vcvt.s32.f32 %v2842
        %v3099 = vcvt.s32.f32 %v2843
        %v3100 = vcvt.s32.f32 %v2844
        %v3101 = vcvt.s32.f32 %v2845
        %v3102 = vcvt.s32.f32 %v2846
        %v3103 = vcvt.s32.f32 %v2847
        %v3104 = vcvt.s32.f32 %v2848
        %v3105 = vcvt.s32.f32 %v2849
        %v3106 = vcvt.s32.f32 %v2850
        %v3107 = vcvt.s32.f32 %v2851
        %v3108 = vcvt.s32.f32 %v2852
        %v3109 = vcvt.s32.f32 %v2853
        %v3110 = vcvt.s32.f32 %v2854
        %v3111 = vcvt.s32.f32 %v2855
        %v3112 = vcvt.s32.f32 %v2856
        %v3113 = vcvt.s32.f32 %v2857
        %v3114 = vcvt.s32.f32 %v2858
        %v3115 = vcvt.s32.f32 %v2859
        %v3116 = vcvt.s32.f32 %v2860
        %v3117 = vcvt.s32.f32 %v2861
        %v3118 = vcvt.s32.f32 %v2862
        %v3119 = vcvt.s32.f32 %v2863
        %v3120 = vcvt.s32.f32 %v2864
        %v3121 = vcvt.s32.f32 %v2865
        %v3122 = vcvt.s32.f32 %v2866
        %v3123 = vcvt.s32.f32 %v2867
        %v3124 = vcvt.s32.f32 %v2868
        %v3125 = vcvt.s32.f32 %v2869
        %v3126 = vcvt.s32.f32 %v2870
        %v3127 = vcvt.s32.f32 %v2871
        %v3128 = vcvt.s32.f32 %v2872
        %v3129 = vcvt.s32.f32 %v2873
        %v3130 = vcvt.s32.f32 %v2874
        %v3131 = vcvt.s32.f32 %v2875
        %v3132 = vcvt.s32.f32 %v2876
        %v3133 = vcvt.s32.f32 %v2877
        %v3134 = vcvt.s32.f32 %v2878
        %v3135 = vcvt.s32.f32 %v2879
        %v3136 = vcvt.s32.f32 %v2880
        %v3137 = vcvt.s32.f32 %v2881
        %v3138 = vcvt.s32.f32 %v2882
        %v3139 = vcvt.s32.f32 %v2883
        %v3140 = vcvt.s32.f32 %v2884
        %v3141 = vcvt.s32.f32 %v2885
        %v3142 = vcvt.s32.f32 %v2886
        %v3143 = vcvt.s32.f32 %v2887
        %v3144 = vcvt.s32.f32 %v2888
        %v3145 = vcvt.s32.f32 %v2889
        %v3146 = vcvt.s32.f32 %v2890
        %v3147 = vcvt.s32.f32 %v2891
        %v3148 = vadd.f32 %v2892, %v2893
        %v3149 = vadd.f32 %v3148, %v2894
        %v3150 = vadd.f32 %v3149, %v2895
        %v3151 = vadd.f32 %v3150, %v2896
        %v3152 = vadd.f32 %v3151, %v2897
        %v3153 = vadd.f32 %v3152, %v2898
        %v3154 = vadd.f32 %v3153, %v2899
        %3155 = vadd.xlane.f32.xlu0 %v3154
        %v3156 = vpop.xlane.xlu0 %3155
        %v3157 = vadd.f32 %v2900, %v2901
        %v3158 = vadd.f32 %v3157, %v2902
        %v3159 = vadd.f32 %v3158, %v2903
        %v3160 = vadd.f32 %v3159, %v2904
        %v3161 = vadd.f32 %v3160, %v2905
        %v3162 = vadd.f32 %v3161, %v2906
        %v3163 = vadd.f32 %v3162, %v2907
        %3164 = vadd.xlane.f32.xlu0 %v3163
        %v3165 = vpop.xlane.xlu0 %3164
        %v3166 = vadd.f32 %v2908, %v2909
        %v3167 = vadd.f32 %v3166, %v2910
        %v3168 = vadd.f32 %v3167, %v2911
        %v3169 = vadd.f32 %v3168, %v2912
        %v3170 = vadd.f32 %v3169, %v2913
        %v3171 = vadd.f32 %v3170, %v2914
        %v3172 = vadd.f32 %v3171, %v2915
        %3173 = vadd.xlane.f32.xlu0 %v3172
        %v3174 = vpop.xlane.xlu0 %3173
        %v3175 = vadd.f32 %v2916, %v2917
        %v3176 = vadd.f32 %v3175, %v2918
        %v3177 = vadd.f32 %v3176, %v2919
        %v3178 = vadd.f32 %v3177, %v2920
        %v3179 = vadd.f32 %v3178, %v2921
        %v3180 = vadd.f32 %v3179, %v2922
        %v3181 = vadd.f32 %v3180, %v2923
        %3182 = vadd.xlane.f32.xlu0 %v3181
        %v3183 = vpop.xlane.xlu0 %3182
        %v3184 = vadd.f32 %v2924, %v2925
        %v3185 = vadd.f32 %v3184, %v2926
        %v3186 = vadd.f32 %v3185, %v2927
        %v3187 = vadd.f32 %v3186, %v2928
        %v3188 = vadd.f32 %v3187, %v2929
        %v3189 = vadd.f32 %v3188, %v2930
        %v3190 = vadd.f32 %v3189, %v2931
        %3191 = vadd.xlane.f32.xlu0 %v3190
        %v3192 = vpop.xlane.xlu0 %3191
        %v3193 = vadd.f32 %v2932, %v2933
        %v3194 = vadd.f32 %v3193, %v2934
        %v3195 = vadd.f32 %v3194, %v2935
        %v3196 = vadd.f32 %v3195, %v2936
        %v3197 = vadd.f32 %v3196, %v2937
        %v3198 = vadd.f32 %v3197, %v2938
        %v3199 = vadd.f32 %v3198, %v2939
        %3200 = vadd.xlane.f32.xlu0 %v3199
        %v3201 = vpop.xlane.xlu0 %3200
        %v3202 = vadd.f32 %v2940, %v2941
        %v3203 = vadd.f32 %v3202, %v2942
        %v3204 = vadd.f32 %v3203, %v2943
        %v3205 = vadd.f32 %v3204, %v2944
        %v3206 = vadd.f32 %v3205, %v2945
        %v3207 = vadd.f32 %v3206, %v2946
        %v3208 = vadd.f32 %v3207, %v2947
        %3209 = vadd.xlane.f32.xlu0 %v3208
        %v3210 = vpop.xlane.xlu0 %3209
        %v3211 = vadd.f32 %v2948, %v2949
        %v3212 = vadd.f32 %v3211, %v2950
        %v3213 = vadd.f32 %v3212, %v2951
        %v3214 = vadd.f32 %v3213, %v2952
        %v3215 = vadd.f32 %v3214, %v2953
        %v3216 = vadd.f32 %v3215, %v2954
        %v3217 = vadd.f32 %v3216, %v2955
        %3218 = vadd.xlane.f32.xlu0 %v3217
        %v3219 = vpop.xlane.xlu0 %3218
        %v3220 = vadd.f32 %v2956, %v2957
        %v3221 = vadd.f32 %v3220, %v2958
        %v3222 = vadd.f32 %v3221, %v2959
        %v3223 = vadd.f32 %v3222, %v2960
        %v3224 = vadd.f32 %v3223, %v2961
        %v3225 = vadd.f32 %v3224, %v2962
        %v3226 = vadd.f32 %v3225, %v2963
        %3227 = vadd.xlane.f32.xlu0 %v3226
        %v3228 = vpop.xlane.xlu0 %3227
        %v3229 = vadd.f32 %v2964, %v2965
        %v3230 = vadd.f32 %v3229, %v2966
        %v3231 = vadd.f32 %v3230, %v2967
        %v3232 = vadd.f32 %v3231, %v2968
        %v3233 = vadd.f32 %v3232, %v2969
        %v3234 = vadd.f32 %v3233, %v2970
        %v3235 = vadd.f32 %v3234, %v2971
        %3236 = vadd.xlane.f32.xlu0 %v3235
        %v3237 = vpop.xlane.xlu0 %3236
        %v3238 = vadd.f32 %v2972, %v2973
        %v3239 = vadd.f32 %v3238, %v2974
        %v3240 = vadd.f32 %v3239, %v2975
        %v3241 = vadd.f32 %v3240, %v2976
        %v3242 = vadd.f32 %v3241, %v2977
        %v3243 = vadd.f32 %v3242, %v2978
        %v3244 = vadd.f32 %v3243, %v2979
        %3245 = vadd.xlane.f32.xlu0 %v3244
        %v3246 = vpop.xlane.xlu0 %3245
        %v3247 = vadd.f32 %v2980, %v2981
        %v3248 = vadd.f32 %v3247, %v2982
        %v3249 = vadd.f32 %v3248, %v2983
        %v3250 = vadd.f32 %v3249, %v2984
        %v3251 = vadd.f32 %v3250, %v2985
        %v3252 = vadd.f32 %v3251, %v2986
        %v3253 = vadd.f32 %v3252, %v2987
        %3254 = vadd.xlane.f32.xlu0 %v3253
        %v3255 = vpop.xlane.xlu0 %3254
        %v3256 = vadd.f32 %v2988, %v2989
        %v3257 = vadd.f32 %v3256, %v2990
        %v3258 = vadd.f32 %v3257, %v2991
        %v3259 = vadd.f32 %v3258, %v2992
        %v3260 = vadd.f32 %v3259, %v2993
        %v3261 = vadd.f32 %v3260, %v2994
        %v3262 = vadd.f32 %v3261, %v2995
        %3263 = vadd.xlane.f32.xlu0 %v3262
        %v3264 = vpop.xlane.xlu0 %3263
        %v3265 = vadd.f32 %v2996, %v2997
        %v3266 = vadd.f32 %v3265, %v2998
        %v3267 = vadd.f32 %v3266, %v2999
        %v3268 = vadd.f32 %v3267, %v3000
        %v3269 = vadd.f32 %v3268, %v3001
        %v3270 = vadd.f32 %v3269, %v3002
        %v3271 = vadd.f32 %v3270, %v3003
        %3272 = vadd.xlane.f32.xlu0 %v3271
        %v3273 = vpop.xlane.xlu0 %3272
        %v3274 = vadd.f32 %v3004, %v3005
        %v3275 = vadd.f32 %v3274, %v3006
        %v3276 = vadd.f32 %v3275, %v3007
        %v3277 = vadd.f32 %v3276, %v3008
        %v3278 = vadd.f32 %v3277, %v3009
        %v3279 = vadd.f32 %v3278, %v3010
        %v3280 = vadd.f32 %v3279, %v3011
        %3281 = vadd.xlane.f32.xlu0 %v3280
        %v3282 = vpop.xlane.xlu0 %3281
        %v3283 = vadd.f32 %v3012, %v3013
        %v3284 = vadd.f32 %v3283, %v3014
        %v3285 = vadd.f32 %v3284, %v3015
        %v3286 = vadd.f32 %v3285, %v3016
        %v3287 = vadd.f32 %v3286, %v3017
        %v3288 = vadd.f32 %v3287, %v3018
        %v3289 = vadd.f32 %v3288, %v3019
        %3290 = vadd.xlane.f32.xlu0 %v3289
        %v3291 = vpop.xlane.xlu0 %3290
        %v3292 = vadd.f32 %v3020, %v3021
        %v3293 = vadd.f32 %v3292, %v3022
        %v3294 = vadd.f32 %v3293, %v3023
        %v3295 = vadd.f32 %v3294, %v3024
        %v3296 = vadd.f32 %v3295, %v3025
        %v3297 = vadd.f32 %v3296, %v3026
        %v3298 = vadd.f32 %v3297, %v3027
        %3299 = vadd.xlane.f32.xlu0 %v3298
        %v3300 = vpop.xlane.xlu0 %3299
        %v3301 = vadd.f32 %v3028, %v3029
        %v3302 = vadd.f32 %v3301, %v3030
        %v3303 = vadd.f32 %v3302, %v3031
        %v3304 = vadd.f32 %v3303, %v3032
        %v3305 = vadd.f32 %v3304, %v3033
        %v3306 = vadd.f32 %v3305, %v3034
        %v3307 = vadd.f32 %v3306, %v3035
        %3308 = vadd.xlane.f32.xlu0 %v3307
        %v3309 = vpop.xlane.xlu0 %3308
        %v3310 = vadd.f32 %v3036, %v3037
        %v3311 = vadd.f32 %v3310, %v3038
        %v3312 = vadd.f32 %v3311, %v3039
        %v3313 = vadd.f32 %v3312, %v3040
        %v3314 = vadd.f32 %v3313, %v3041
        %v3315 = vadd.f32 %v3314, %v3042
        %v3316 = vadd.f32 %v3315, %v3043
        %3317 = vadd.xlane.f32.xlu0 %v3316
        %v3318 = vpop.xlane.xlu0 %3317
        %v3319 = vadd.f32 %v3044, %v3045
        %v3320 = vadd.f32 %v3319, %v3046
        %v3321 = vadd.f32 %v3320, %v3047
        %v3322 = vadd.f32 %v3321, %v3048
        %v3323 = vadd.f32 %v3322, %v3049
        %v3324 = vadd.f32 %v3323, %v3050
        %v3325 = vadd.f32 %v3324, %v3051
        %3326 = vadd.xlane.f32.xlu0 %v3325
        %v3327 = vpop.xlane.xlu0 %3326
        %v3328 = vadd.f32 %v3052, %v3053
        %v3329 = vadd.f32 %v3328, %v3054
        %v3330 = vadd.f32 %v3329, %v3055
        %v3331 = vadd.f32 %v3330, %v3056
        %v3332 = vadd.f32 %v3331, %v3057
        %v3333 = vadd.f32 %v3332, %v3058
        %v3334 = vadd.f32 %v3333, %v3059
        %3335 = vadd.xlane.f32.xlu0 %v3334
        %v3336 = vpop.xlane.xlu0 %3335
        %v3337 = vadd.f32 %v3060, %v3061
        %v3338 = vadd.f32 %v3337, %v3062
        %v3339 = vadd.f32 %v3338, %v3063
        %v3340 = vadd.f32 %v3339, %v3064
        %v3341 = vadd.f32 %v3340, %v3065
        %v3342 = vadd.f32 %v3341, %v3066
        %v3343 = vadd.f32 %v3342, %v3067
        %3344 = vadd.xlane.f32.xlu0 %v3343
        %v3345 = vpop.xlane.xlu0 %3344
        %v3346 = vadd.f32 %v3068, %v3069
        %v3347 = vadd.f32 %v3346, %v3070
        %v3348 = vadd.f32 %v3347, %v3071
        %v3349 = vadd.f32 %v3348, %v3072
        %v3350 = vadd.f32 %v3349, %v3073
        %v3351 = vadd.f32 %v3350, %v3074
        %v3352 = vadd.f32 %v3351, %v3075
        %3353 = vadd.xlane.f32.xlu0 %v3352
        %v3354 = vpop.xlane.xlu0 %3353
        %v3355 = vadd.f32 %v3076, %v3077
        %v3356 = vadd.f32 %v3355, %v3078
        %v3357 = vadd.f32 %v3356, %v3079
        %v3358 = vadd.f32 %v3357, %v3080
        %v3359 = vadd.f32 %v3358, %v3081
        %v3360 = vadd.f32 %v3359, %v3082
        %v3361 = vadd.f32 %v3360, %v3083
        %3362 = vadd.xlane.f32.xlu0 %v3361
        %v3363 = vpop.xlane.xlu0 %3362
        %v3364 = vadd.f32 %v3084, %v3085
        %v3365 = vadd.f32 %v3364, %v3086
        %v3366 = vadd.f32 %v3365, %v3087
        %v3367 = vadd.f32 %v3366, %v3088
        %v3368 = vadd.f32 %v3367, %v3089
        %v3369 = vadd.f32 %v3368, %v3090
        %v3370 = vadd.f32 %v3369, %v3091
        %3371 = vadd.xlane.f32.xlu0 %v3370
        %v3372 = vpop.xlane.xlu0 %3371
        %v3373 = vadd.f32 %v3092, %v3093
        %v3374 = vadd.f32 %v3373, %v3094
        %v3375 = vadd.f32 %v3374, %v3095
        %v3376 = vadd.f32 %v3375, %v3096
        %v3377 = vadd.f32 %v3376, %v3097
        %v3378 = vadd.f32 %v3377, %v3098
        %v3379 = vadd.f32 %v3378, %v3099
        %3380 = vadd.xlane.f32.xlu0 %v3379
        %v3381 = vpop.xlane.xlu0 %3380
        %v3382 = vadd.f32 %v3100, %v3101
        %v3383 = vadd.f32 %v3382, %v3102
        %v3384 = vadd.f32 %v3383, %v3103
        %v3385 = vadd.f32 %v3384, %v3104
        %v3386 = vadd.f32 %v3385, %v3105
        %v3387 = vadd.f32 %v3386, %v3106
        %v3388 = vadd.f32 %v3387, %v3107
        %3389 = vadd.xlane.f32.xlu0 %v3388
        %v3390 = vpop.xlane.xlu0 %3389
        %v3391 = vadd.f32 %v3108, %v3109
        %v3392 = vadd.f32 %v3391, %v3110
        %v3393 = vadd.f32 %v3392, %v3111
        %v3394 = vadd.f32 %v3393, %v3112
        %v3395 = vadd.f32 %v3394, %v3113
        %v3396 = vadd.f32 %v3395, %v3114
        %v3397 = vadd.f32 %v3396, %v3115
        %3398 = vadd.xlane.f32.xlu0 %v3397
        %v3399 = vpop.xlane.xlu0 %3398
        %v3400 = vadd.f32 %v3116, %v3117
        %v3401 = vadd.f32 %v3400, %v3118
        %v3402 = vadd.f32 %v3401, %v3119
        %v3403 = vadd.f32 %v3402, %v3120
        %v3404 = vadd.f32 %v3403, %v3121
        %v3405 = vadd.f32 %v3404, %v3122
        %v3406 = vadd.f32 %v3405, %v3123
        %3407 = vadd.xlane.f32.xlu0 %v3406
        %v3408 = vpop.xlane.xlu0 %3407
        %v3409 = vadd.f32 %v3124, %v3125
        %v3410 = vadd.f32 %v3409, %v3126
        %v3411 = vadd.f32 %v3410, %v3127
        %v3412 = vadd.f32 %v3411, %v3128
        %v3413 = vadd.f32 %v3412, %v3129
        %v3414 = vadd.f32 %v3413, %v3130
        %v3415 = vadd.f32 %v3414, %v3131
        %3416 = vadd.xlane.f32.xlu0 %v3415
        %v3417 = vpop.xlane.xlu0 %3416
        %v3418 = vadd.f32 %v3132, %v3133
        %v3419 = vadd.f32 %v3418, %v3134
        %v3420 = vadd.f32 %v3419, %v3135
        %v3421 = vadd.f32 %v3420, %v3136
        %v3422 = vadd.f32 %v3421, %v3137
        %v3423 = vadd.f32 %v3422, %v3138
        %v3424 = vadd.f32 %v3423, %v3139
        %3425 = vadd.xlane.f32.xlu0 %v3424
        %v3426 = vpop.xlane.xlu0 %3425
        %v3427 = vadd.f32 %v3140, %v3141
        %v3428 = vadd.f32 %v3427, %v3142
        %v3429 = vadd.f32 %v3428, %v3143
        %v3430 = vadd.f32 %v3429, %v3144
        %v3431 = vadd.f32 %v3430, %v3145
        %v3432 = vadd.f32 %v3431, %v3146
        %v3433 = vadd.f32 %v3432, %v3147
        %3434 = vadd.xlane.f32.xlu0 %v3433
        %v3435 = vpop.xlane.xlu0 %3434
        %v3436 = vadd.f32 %v2540, %v3156
        %v3437 = vadd.f32 %v2541, %v3165
        %v3438 = vadd.f32 %v2542, %v3174
        %v3439 = vadd.f32 %v2543, %v3183
        %v3440 = vadd.f32 %v2544, %v3192
        %v3441 = vadd.f32 %v2545, %v3201
        %v3442 = vadd.f32 %v2546, %v3210
        %v3443 = vadd.f32 %v2547, %v3219
        %v3444 = vadd.f32 %v2548, %v3228
        %v3445 = vadd.f32 %v2549, %v3237
        %v3446 = vadd.f32 %v2550, %v3246
        %v3447 = vadd.f32 %v2551, %v3255
        %v3448 = vadd.f32 %v2552, %v3264
        %v3449 = vadd.f32 %v2553, %v3273
        %v3450 = vadd.f32 %v2554, %v3282
        %v3451 = vadd.f32 %v2555, %v3291
        %v3452 = vadd.f32 %v2556, %v3300
        %v3453 = vadd.f32 %v2557, %v3309
        %v3454 = vadd.f32 %v2558, %v3318
        %v3455 = vadd.f32 %v2559, %v3327
        %v3456 = vadd.f32 %v2560, %v3336
        %v3457 = vadd.f32 %v2561, %v3345
        %v3458 = vadd.f32 %v2562, %v3354
        %v3459 = vadd.f32 %v2563, %v3363
        %v3460 = vadd.f32 %v2564, %v3372
        %v3461 = vadd.f32 %v2565, %v3381
        %v3462 = vadd.f32 %v2566, %v3390
        %v3463 = vadd.f32 %v2567, %v3399
        %v3464 = vadd.f32 %v2568, %v3408
        %v3465 = vadd.f32 %v2569, %v3417
        %v3466 = vadd.f32 %v2570, %v3426
        %v3467 = vadd.f32 %v2571, %v3435
        %vm3468 = vcmask 7168
        %3469 = vst.msk [vmem:[#allocation3] sm:$0xff] %vm3468, %v3436
        %3470 = vst.msk [vmem:[#allocation3 + $0x8] sm:$0xff] %vm3468, %v3437
        %3471 = vst.msk [vmem:[#allocation3 + $0x10] sm:$0xff] %vm3468, %v3438
        %3472 = vst.msk [vmem:[#allocation3 + $0x18] sm:$0xff] %vm3468, %v3439
        %3473 = vst.msk [vmem:[#allocation3 + $0x20] sm:$0xff] %vm3468, %v3440
        %3474 = vst.msk [vmem:[#allocation3 + $0x28] sm:$0xff] %vm3468, %v3441
        %3475 = vst.msk [vmem:[#allocation3 + $0x30] sm:$0xff] %vm3468, %v3442
        %3476 = vst.msk [vmem:[#allocation3 + $0x38] sm:$0xff] %vm3468, %v3443
        %3477 = vst.msk [vmem:[#allocation3 + $0x40] sm:$0xff] %vm3468, %v3444
        %3478 = vst.msk [vmem:[#allocation3 + $0x48] sm:$0xff] %vm3468, %v3445
        %3479 = vst.msk [vmem:[#allocation3 + $0x50] sm:$0xff] %vm3468, %v3446
        %3480 = vst.msk [vmem:[#allocation3 + $0x58] sm:$0xff] %vm3468, %v3447
        %3481 = vst.msk [vmem:[#allocation3 + $0x60] sm:$0xff] %vm3468, %v3448
        %3482 = vst.msk [vmem:[#allocation3 + $0x68] sm:$0xff] %vm3468, %v3449
        %3483 = vst.msk [vmem:[#allocation3 + $0x70] sm:$0xff] %vm3468, %v3450
        %3484 = vst.msk [vmem:[#allocation3 + $0x78] sm:$0xff] %vm3468, %v3451
        %3485 = vst.msk [vmem:[#allocation3 + $0x80] sm:$0xff] %vm3468, %v3452
        %3486 = vst.msk [vmem:[#allocation3 + $0x88] sm:$0xff] %vm3468, %v3453
        %3487 = vst.msk [vmem:[#allocation3 + $0x90] sm:$0xff] %vm3468, %v3454
        %3488 = vst.msk [vmem:[#allocation3 + $0x98] sm:$0xff] %vm3468, %v3455
        %3489 = vst.msk [vmem:[#allocation3 + $0xa0] sm:$0xff] %vm3468, %v3456
        %3490 = vst.msk [vmem:[#allocation3 + $0xa8] sm:$0xff] %vm3468, %v3457
        %3491 = vst.msk [vmem:[#allocation3 + $0xb0] sm:$0xff] %vm3468, %v3458
        %3492 = vst.msk [vmem:[#allocation3 + $0xb8] sm:$0xff] %vm3468, %v3459
        %3493 = vst.msk [vmem:[#allocation3 + $0xc0] sm:$0xff] %vm3468, %v3460
        %3494 = vst.msk [vmem:[#allocation3 + $0xc8] sm:$0xff] %vm3468, %v3461
        %3495 = vst.msk [vmem:[#allocation3 + $0xd0] sm:$0xff] %vm3468, %v3462
        %3496 = vst.msk [vmem:[#allocation3 + $0xd8] sm:$0xff] %vm3468, %v3463
        %3497 = vst.msk [vmem:[#allocation3 + $0xe0] sm:$0xff] %vm3468, %v3464
        %3498 = vst.msk [vmem:[#allocation3 + $0xe8] sm:$0xff] %vm3468, %v3465
        %3499 = vst.msk [vmem:[#allocation3 + $0xf0] sm:$0xff] %vm3468, %v3466
        %3500 = vst.msk [vmem:[#allocation3 + $0xf8] sm:$0xff] %vm3468, %v3467
        %p3501 = scmp.eq.s32.totalorder %s22, 1
        // Predicated region
        $region72: #{gcn_layer.1} parent=62 // pred_check
          %p3502 = pneg %p3501
        $region73: #{gcn_layer.1} parent=62 // pred_check_branch
          %3504 = sbr.rel (%p3502) target = $region75
        $region74: #{gcn_layer.1} parent=62 // pred_region
          %v3505 = vld [vmem:[#allocation3] sm:$0xff]
          %v3506 = vld [vmem:[#allocation3 + $0x8] sm:$0xff]
          %v3507 = vld [vmem:[#allocation3 + $0x10] sm:$0xff]
          %v3508 = vld [vmem:[#allocation3 + $0x18] sm:$0xff]
          %v3509 = vld [vmem:[#allocation3 + $0x20] sm:$0xff]
          %v3510 = vld [vmem:[#allocation3 + $0x28] sm:$0xff]
          %v3511 = vld [vmem:[#allocation3 + $0x30] sm:$0xff]
          %v3512 = vld [vmem:[#allocation3 + $0x38] sm:$0xff]
          %v3513 = vld [vmem:[#allocation3 + $0x40] sm:$0xff]
          %v3514 = vld [vmem:[#allocation3 + $0x48] sm:$0xff]
          %v3515 = vld [vmem:[#allocation3 + $0x50] sm:$0xff]
          %v3516 = vld [vmem:[#allocation3 + $0x58] sm:$0xff]
          %v3517 = vld [vmem:[#allocation3 + $0x60] sm:$0xff]
          %v3518 = vld [vmem:[#allocation3 + $0x68] sm:$0xff]
          %v3519 = vld [vmem:[#allocation3 + $0x70] sm:$0xff]
          %v3520 = vld [vmem:[#allocation3 + $0x78] sm:$0xff]
          %v3521 = vld [vmem:[#allocation3 + $0x80] sm:$0xff]
          %v3522 = vld [vmem:[#allocation3 + $0x88] sm:$0xff]
          %v3523 = vld [vmem:[#allocation3 + $0x90] sm:$0xff]
          %v3524 = vld [vmem:[#allocation3 + $0x98] sm:$0xff]
          %v3525 = vld [vmem:[#allocation3 + $0xa0] sm:$0xff]
          %v3526 = vld [vmem:[#allocation3 + $0xa8] sm:$0xff]
          %v3527 = vld [vmem:[#allocation3 + $0xb0] sm:$0xff]
          %v3528 = vld [vmem:[#allocation3 + $0xb8] sm:$0xff]
          %v3529 = vld [vmem:[#allocation3 + $0xc0] sm:$0xff]
          %v3530 = vld [vmem:[#allocation3 + $0xc8] sm:$0xff]
          %v3531 = vld [vmem:[#allocation3 + $0xd0] sm:$0xff]
          %v3532 = vld [vmem:[#allocation3 + $0xd8] sm:$0xff]
          %v3533 = vld [vmem:[#allocation3 + $0xe0] sm:$0xff]
          %v3534 = vld [vmem:[#allocation3 + $0xe8] sm:$0xff]
          %v3535 = vld [vmem:[#allocation3 + $0xf0] sm:$0xff]
          %v3536 = vld [vmem:[#allocation3 + $0xf8] sm:$0xff]
          %v3537 = vmax.f32 %v3505, 1.0
          %v3538 = vmax.f32 %v3506, 1.0
          %v3539 = vmax.f32 %v3507, 1.0
          %v3540 = vmax.f32 %v3508, 1.0
          %v3541 = vmax.f32 %v3509, 1.0
          %v3542 = vmax.f32 %v3510, 1.0
          %v3543 = vmax.f32 %v3511, 1.0
          %v3544 = vmax.f32 %v3512, 1.0
          %v3545 = vmax.f32 %v3513, 1.0
          %v3546 = vmax.f32 %v3514, 1.0
          %v3547 = vmax.f32 %v3515, 1.0
          %v3548 = vmax.f32 %v3516, 1.0
          %v3549 = vmax.f32 %v3517, 1.0
          %v3550 = vmax.f32 %v3518, 1.0
          %v3551 = vmax.f32 %v3519, 1.0
          %v3552 = vmax.f32 %v3520, 1.0
          %v3553 = vmax.f32 %v3521, 1.0
          %v3554 = vmax.f32 %v3522, 1.0
          %v3555 = vmax.f32 %v3523, 1.0
          %v3556 = vmax.f32 %v3524, 1.0
          %v3557 = vmax.f32 %v3525, 1.0
          %v3558 = vmax.f32 %v3526, 1.0
          %v3559 = vmax.f32 %v3527, 1.0
          %v3560 = vmax.f32 %v3528, 1.0
          %v3561 = vmax.f32 %v3529, 1.0
          %v3562 = vmax.f32 %v3530, 1.0
          %v3563 = vmax.f32 %v3531, 1.0
          %v3564 = vmax.f32 %v3532, 1.0
          %v3565 = vmax.f32 %v3533, 1.0
          %v3566 = vmax.f32 %v3534, 1.0
          %v3567 = vmax.f32 %v3535, 1.0
          %v3568 = vmax.f32 %v3536, 1.0
          %v3569 = vrcp.pop %v3537
          %v3570 = vrcp.pop %v3538
          %v3571 = vrcp.pop %v3539
          %v3572 = vrcp.pop %v3540
          %v3573 = vrcp.pop %v3541
          %v3574 = vrcp.pop %v3542
          %v3575 = vrcp.pop %v3543
          %v3576 = vrcp.pop %v3544
          %v3577 = vrcp.pop %v3545
          %v3578 = vrcp.pop %v3546
          %v3579 = vrcp.pop %v3547
          %v3580 = vrcp.pop %v3548
          %v3581 = vrcp.pop %v3549
          %v3582 = vrcp.pop %v3550
          %v3583 = vrcp.pop %v3551
          %v3584 = vrcp.pop %v3552
          %v3585 = vrcp.pop %v3553
          %v3586 = vrcp.pop %v3554
          %v3587 = vrcp.pop %v3555
          %v3588 = vrcp.pop %v3556
          %v3589 = vrcp.pop %v3557
          %v3590 = vrcp.pop %v3558
          %v3591 = vrcp.pop %v3559
          %v3592 = vrcp.pop %v3560
          %v3593 = vrcp.pop %v3561
          %v3594 = vrcp.pop %v3562
          %v3595 = vrcp.pop %v3563
          %v3596 = vrcp.pop %v3564
          %v3597 = vrcp.pop %v3565
          %v3598 = vrcp.pop %v3566
          %v3599 = vrcp.pop %v3567
          %v3600 = vrcp.pop %v3568
          %v3601 = vld [vmem:[#allocation2] sm:$0xff]
          %v3602 = vld [vmem:[#allocation2 + $0x8] sm:$0xff]
          %v3603 = vld [vmem:[#allocation2 + $0x10] sm:$0xff]
          %v3604 = vld [vmem:[#allocation2 + $0x18] sm:$0xff]
          %v3605 = vld [vmem:[#allocation2 + $0x20] sm:$0xff]
          %v3606 = vld [vmem:[#allocation2 + $0x28] sm:$0xff]
          %v3607 = vld [vmem:[#allocation2 + $0x30] sm:$0xff]
          %v3608 = vld [vmem:[#allocation2 + $0x38] sm:$0xff]
          %v3609 = vld [vmem:[#allocation2 + $0x40] sm:$0xff]
          %v3610 = vld [vmem:[#allocation2 + $0x48] sm:$0xff]
          %v3611 = vld [vmem:[#allocation2 + $0x50] sm:$0xff]
          %v3612 = vld [vmem:[#allocation2 + $0x58] sm:$0xff]
          %v3613 = vld [vmem:[#allocation2 + $0x60] sm:$0xff]
          %v3614 = vld [vmem:[#allocation2 + $0x68] sm:$0xff]
          %v3615 = vld [vmem:[#allocation2 + $0x70] sm:$0xff]
          %v3616 = vld [vmem:[#allocation2 + $0x78] sm:$0xff]
          %v3617 = vld [vmem:[#allocation2 + $0x80] sm:$0xff]
          %v3618 = vld [vmem:[#allocation2 + $0x88] sm:$0xff]
          %v3619 = vld [vmem:[#allocation2 + $0x90] sm:$0xff]
          %v3620 = vld [vmem:[#allocation2 + $0x98] sm:$0xff]
          %v3621 = vld [vmem:[#allocation2 + $0xa0] sm:$0xff]
          %v3622 = vld [vmem:[#allocation2 + $0xa8] sm:$0xff]
          %v3623 = vld [vmem:[#allocation2 + $0xb0] sm:$0xff]
          %v3624 = vld [vmem:[#allocation2 + $0xb8] sm:$0xff]
          %v3625 = vld [vmem:[#allocation2 + $0xc0] sm:$0xff]
          %v3626 = vld [vmem:[#allocation2 + $0xc8] sm:$0xff]
          %v3627 = vld [vmem:[#allocation2 + $0xd0] sm:$0xff]
          %v3628 = vld [vmem:[#allocation2 + $0xd8] sm:$0xff]
          %v3629 = vld [vmem:[#allocation2 + $0xe0] sm:$0xff]
          %v3630 = vld [vmem:[#allocation2 + $0xe8] sm:$0xff]
          %v3631 = vld [vmem:[#allocation2 + $0xf0] sm:$0xff]
          %v3632 = vld [vmem:[#allocation2 + $0xf8] sm:$0xff]
          %3634 = vset.pattern.permute.xlu0 0
          %3635 = vperm.xlu0 %3634, %v3569
          %v3636 = vpop.permute.xlu0 %3635
          %3639 = vset.pattern.permute.xlu0 0
          %3640 = vperm.xlu0 %3639, %v3570
          %v3641 = vpop.permute.xlu0 %3640
          %3644 = vset.pattern.permute.xlu0 0
          %3645 = vperm.xlu0 %3644, %v3571
          %v3646 = vpop.permute.xlu0 %3645
          %3649 = vset.pattern.permute.xlu0 0
          %3650 = vperm.xlu0 %3649, %v3572
          %v3651 = vpop.permute.xlu0 %3650
          %3654 = vset.pattern.permute.xlu0 0
          %3655 = vperm.xlu0 %3654, %v3573
          %v3656 = vpop.permute.xlu0 %3655
          %3659 = vset.pattern.permute.xlu0 0
          %3660 = vperm.xlu0 %3659, %v3574
          %v3661 = vpop.permute.xlu0 %3660
          %3664 = vset.pattern.permute.xlu0 0
          %3665 = vperm.xlu0 %3664, %v3575
          %v3666 = vpop.permute.xlu0 %3665
          %3669 = vset.pattern.permute.xlu0 0
          %3670 = vperm.xlu0 %3669, %v3576
          %v3671 = vpop.permute.xlu0 %3670
          %3674 = vset.pattern.permute.xlu0 0
          %3675 = vperm.xlu0 %3674, %v3577
          %v3676 = vpop.permute.xlu0 %3675
          %3679 = vset.pattern.permute.xlu0 0
          %3680 = vperm.xlu0 %3679, %v3578
          %v3681 = vpop.permute.xlu0 %3680
          %3684 = vset.pattern.permute.xlu0 0
          %3685 = vperm.xlu0 %3684, %v3579
          %v3686 = vpop.permute.xlu0 %3685
          %3689 = vset.pattern.permute.xlu0 0
          %3690 = vperm.xlu0 %3689, %v3580
          %v3691 = vpop.permute.xlu0 %3690
          %3694 = vset.pattern.permute.xlu0 0
          %3695 = vperm.xlu0 %3694, %v3581
          %v3696 = vpop.permute.xlu0 %3695
          %3699 = vset.pattern.permute.xlu0 0
          %3700 = vperm.xlu0 %3699, %v3582
          %v3701 = vpop.permute.xlu0 %3700
          %3704 = vset.pattern.permute.xlu0 0
          %3705 = vperm.xlu0 %3704, %v3583
          %v3706 = vpop.permute.xlu0 %3705
          %3709 = vset.pattern.permute.xlu0 0
          %3710 = vperm.xlu0 %3709, %v3584
          %v3711 = vpop.permute.xlu0 %3710
          %3714 = vset.pattern.permute.xlu0 0
          %3715 = vperm.xlu0 %3714, %v3585
          %v3716 = vpop.permute.xlu0 %3715
          %3719 = vset.pattern.permute.xlu0 0
          %3720 = vperm.xlu0 %3719, %v3586
          %v3721 = vpop.permute.xlu0 %3720
          %3724 = vset.pattern.permute.xlu0 0
          %3725 = vperm.xlu0 %3724, %v3587
          %v3726 = vpop.permute.xlu0 %3725
          %3729 = vset.pattern.permute.xlu0 0
          %3730 = vperm.xlu0 %3729, %v3588
          %v3731 = vpop.permute.xlu0 %3730
          %3734 = vset.pattern.permute.xlu0 0
          %3735 = vperm.xlu0 %3734, %v3589
          %v3736 = vpop.permute.xlu0 %3735
          %3739 = vset.pattern.permute.xlu0 0
          %3740 = vperm.xlu0 %3739, %v3590
          %v3741 = vpop.permute.xlu0 %3740
          %3744 = vset.pattern.permute.xlu0 0
          %3745 = vperm.xlu0 %3744, %v3591
          %v3746 = vpop.permute.xlu0 %3745
          %3749 = vset.pattern.permute.xlu0 0
          %3750 = vperm.xlu0 %3749, %v3592
          %v3751 = vpop.permute.xlu0 %3750
          %3754 = vset.pattern.permute.xlu0 0
          %3755 = vperm.xlu0 %3754, %v3593
          %v3756 = vpop.permute.xlu0 %3755
          %3759 = vset.pattern.permute.xlu0 0
          %3760 = vperm.xlu0 %3759, %v3594
          %v3761 = vpop.permute.xlu0 %3760
          %3764 = vset.pattern.permute.xlu0 0
          %3765 = vperm.xlu0 %3764, %v3595
          %v3766 = vpop.permute.xlu0 %3765
          %3769 = vset.pattern.permute.xlu0 0
          %3770 = vperm.xlu0 %3769, %v3596
          %v3771 = vpop.permute.xlu0 %3770
          %3774 = vset.pattern.permute.xlu0 0
          %3775 = vperm.xlu0 %3774, %v3597
          %v3776 = vpop.permute.xlu0 %3775
          %3779 = vset.pattern.permute.xlu0 0
          %3780 = vperm.xlu0 %3779, %v3598
          %v3781 = vpop.permute.xlu0 %3780
          %3784 = vset.pattern.permute.xlu0 0
          %3785 = vperm.xlu0 %3784, %v3599
          %v3786 = vpop.permute.xlu0 %3785
          %3789 = vset.pattern.permute.xlu0 0
          %3790 = vperm.xlu0 %3789, %v3600
          %v3791 = vpop.permute.xlu0 %3790
          %v3793 = vmul.f32 %v3601, %v3636
          %v3794 = vmul.f32 %v3602, %v3641
          %v3795 = vmul.f32 %v3603, %v3646
          %v3796 = vmul.f32 %v3604, %v3651
          %v3797 = vmul.f32 %v3605, %v3656
          %v3798 = vmul.f32 %v3606, %v3661
          %v3799 = vmul.f32 %v3607, %v3666
          %v3800 = vmul.f32 %v3608, %v3671
          %v3801 = vmul.f32 %v3609, %v3676
          %v3802 = vmul.f32 %v3610, %v3681
          %v3803 = vmul.f32 %v3611, %v3686
          %v3804 = vmul.f32 %v3612, %v3691
          %v3805 = vmul.f32 %v3613, %v3696
          %v3806 = vmul.f32 %v3614, %v3701
          %v3807 = vmul.f32 %v3615, %v3706
          %v3808 = vmul.f32 %v3616, %v3711
          %v3809 = vmul.f32 %v3617, %v3716
          %v3810 = vmul.f32 %v3618, %v3721
          %v3811 = vmul.f32 %v3619, %v3726
          %v3812 = vmul.f32 %v3620, %v3731
          %v3813 = vmul.f32 %v3621, %v3736
          %v3814 = vmul.f32 %v3622, %v3741
          %v3815 = vmul.f32 %v3623, %v3746
          %v3816 = vmul.f32 %v3624, %v3751
          %v3817 = vmul.f32 %v3625, %v3756
          %v3818 = vmul.f32 %v3626, %v3761
          %v3819 = vmul.f32 %v3627, %v3766
          %v3820 = vmul.f32 %v3628, %v3771
          %v3821 = vmul.f32 %v3629, %v3776
          %v3822 = vmul.f32 %v3630, %v3781
          %v3823 = vmul.f32 %v3631, %v3786
          %v3824 = vmul.f32 %v3632, %v3791
          %v3825 = vld [vmem:[%s432] sm:$0xff]
          %v3826 = vld [vmem:[%s432 + $0x8] sm:$0xff]
          %v3827 = vld [vmem:[%s432 + $0x10] sm:$0xff]
          %v3828 = vld [vmem:[%s432 + $0x18] sm:$0xff]
          %v3829 = vld [vmem:[%s432 + $0x20] sm:$0xff]
          %v3830 = vld [vmem:[%s432 + $0x28] sm:$0xff]
          %v3831 = vld [vmem:[%s432 + $0x30] sm:$0xff]
          %v3832 = vld [vmem:[%s432 + $0x38] sm:$0xff]
          %v3833 = vld [vmem:[%s432 + $0x40] sm:$0xff]
          %v3834 = vld [vmem:[%s432 + $0x48] sm:$0xff]
          %v3835 = vld [vmem:[%s432 + $0x50] sm:$0xff]
          %v3836 = vld [vmem:[%s432 + $0x58] sm:$0xff]
          %v3837 = vld [vmem:[%s432 + $0x60] sm:$0xff]
          %v3838 = vld [vmem:[%s432 + $0x68] sm:$0xff]
          %v3839 = vld [vmem:[%s432 + $0x70] sm:$0xff]
          %v3840 = vld [vmem:[%s432 + $0x78] sm:$0xff]
          %v3841 = vld [vmem:[%s432 + $0x80] sm:$0xff]
          %v3842 = vld [vmem:[%s432 + $0x88] sm:$0xff]
          %v3843 = vld [vmem:[%s432 + $0x90] sm:$0xff]
          %v3844 = vld [vmem:[%s432 + $0x98] sm:$0xff]
          %v3845 = vld [vmem:[%s432 + $0xa0] sm:$0xff]
          %v3846 = vld [vmem:[%s432 + $0xa8] sm:$0xff]
          %v3847 = vld [vmem:[%s432 + $0xb0] sm:$0xff]
          %v3848 = vld [vmem:[%s432 + $0xb8] sm:$0xff]
          %v3849 = vld [vmem:[%s432 + $0xc0] sm:$0xff]
          %v3850 = vld [vmem:[%s432 + $0xc8] sm:$0xff]
          %v3851 = vld [vmem:[%s432 + $0xd0] sm:$0xff]
          %v3852 = vld [vmem:[%s432 + $0xd8] sm:$0xff]
          %v3853 = vld [vmem:[%s432 + $0xe0] sm:$0xff]
          %v3854 = vld [vmem:[%s432 + $0xe8] sm:$0xff]
          %v3855 = vld [vmem:[%s432 + $0xf0] sm:$0xff]
          %v3856 = vld [vmem:[%s432 + $0xf8] sm:$0xff]
          %v3857 = vld [vmem:[%s3] sm:$0xff]
          %v3858 = vld [vmem:[%s3 + $0x8] sm:$0xff]
          %v3859 = vld [vmem:[%s3 + $0x10] sm:$0xff]
          %v3860 = vld [vmem:[%s3 + $0x18] sm:$0xff]
          %v3861 = vld [vmem:[%s4] sm:$0xff]
          %v3862 = vld [vmem:[%s4 + $0x8] sm:$0xff]
          %v3863 = vld [vmem:[%s4 + $0x10] sm:$0xff]
          %v3864 = vld [vmem:[%s4 + $0x18] sm:$0xff]
          %v3866 = vsel %vm2507, %v3793, 0
          %v3869 = vsel %vm2507, %v3794, 0
          %v3872 = vsel %vm2507, %v3795, 0
          %v3875 = vsel %vm2507, %v3796, 0
          %v3878 = vsel %vm2507, %v3797, 0
          %v3881 = vsel %vm2507, %v3798, 0
          %v3884 = vsel %vm2507, %v3799, 0
          %v3887 = vsel %vm2507, %v3800, 0
          %v3890 = vsel %vm2507, %v3801, 0
          %v3893 = vsel %vm2507, %v3802, 0
          %v3896 = vsel %vm2507, %v3803, 0
          %v3899 = vsel %vm2507, %v3804, 0
          %v3902 = vsel %vm2507, %v3805, 0
          %v3905 = vsel %vm2507, %v3806, 0
          %v3908 = vsel %vm2507, %v3807, 0
          %v3911 = vsel %vm2507, %v3808, 0
          %v3914 = vsel %vm2507, %v3809, 0
          %v3917 = vsel %vm2507, %v3810, 0
          %v3920 = vsel %vm2507, %v3811, 0
          %v3923 = vsel %vm2507, %v3812, 0
          %v3926 = vsel %vm2507, %v3813, 0
          %v3929 = vsel %vm2507, %v3814, 0
          %v3932 = vsel %vm2507, %v3815, 0
          %v3935 = vsel %vm2507, %v3816, 0
          %v3938 = vsel %vm2507, %v3817, 0
          %v3941 = vsel %vm2507, %v3818, 0
          %v3944 = vsel %vm2507, %v3819, 0
          %v3947 = vsel %vm2507, %v3820, 0
          %v3950 = vsel %vm2507, %v3821, 0
          %v3953 = vsel %vm2507, %v3822, 0
          %v3956 = vsel %vm2507, %v3823, 0
          %v3959 = vsel %vm2507, %v3824, 0
          %3961 = vmatpush.msra.mxu0 0.0
          %3962 = vmatpush.msra.mxu0 0.0
          %3963 = vmatpush.msra.mxu0 0.0
          %3964 = vmatpush.msra.mxu0 0.0
          %3965 = vmatpush.msra.mxu0 0.0
          %3966 = vmatpush.msra.mxu0 0.0
          %3967 = vmatpush.msra.mxu0 0.0
          %3968 = vmatpush.msra.mxu0 0.0
          %3969 = vmatpush.msra.mxu0 0.0
          %3970 = vmatpush.msra.mxu0 0.0
          %3971 = vmatpush.msra.mxu0 0.0
          %3972 = vmatpush.msra.mxu0 0.0
          %3973 = vmatpush.msra.mxu0 %v3864
          %3974 = vmatpush.msra.mxu0 %v3863
          %3975 = vmatpush.msra.mxu0 %v3862
          %3976 = vmatpush.msra.mxu0 %v3861
          %3977 = vmatmul.f32.gmra.mxu0 %v3866
          %v3978 = vpop.f32.mrf.mxu0
          %v3979 = vadd.f32 0.0, %v3978
          %3980 = vmatmul.f32.gmra.mxu0 %v3869
          %v3981 = vpop.f32.mrf.mxu0
          %v3982 = vadd.f32 0.0, %v3981
          %3983 = vmatmul.f32.gmra.mxu0 %v3872
          %v3984 = vpop.f32.mrf.mxu0
          %v3985 = vadd.f32 0.0, %v3984
          %3986 = vmatmul.f32.gmra.mxu0 %v3875
          %v3987 = vpop.f32.mrf.mxu0
          %v3988 = vadd.f32 0.0, %v3987
          %3989 = vmatmul.f32.gmra.mxu0 %v3878
          %v3990 = vpop.f32.mrf.mxu0
          %v3991 = vadd.f32 0.0, %v3990
          %3992 = vmatmul.f32.gmra.mxu0 %v3881
          %v3993 = vpop.f32.mrf.mxu0
          %v3994 = vadd.f32 0.0, %v3993
          %3995 = vmatmul.f32.gmra.mxu0 %v3884
          %v3996 = vpop.f32.mrf.mxu0
          %v3997 = vadd.f32 0.0, %v3996
          %3998 = vmatmul.f32.gmra.mxu0 %v3887
          %v3999 = vpop.f32.mrf.mxu0
          %v4000 = vadd.f32 0.0, %v3999
          %4001 = vmatmul.f32.gmra.mxu0 %v3890
          %v4002 = vpop.f32.mrf.mxu0
          %v4003 = vadd.f32 0.0, %v4002
          %4004 = vmatmul.f32.gmra.mxu0 %v3893
          %v4005 = vpop.f32.mrf.mxu0
          %v4006 = vadd.f32 0.0, %v4005
          %4007 = vmatmul.f32.gmra.mxu0 %v3896
          %v4008 = vpop.f32.mrf.mxu0
          %v4009 = vadd.f32 0.0, %v4008
          %4010 = vmatmul.f32.gmra.mxu0 %v3899
          %v4011 = vpop.f32.mrf.mxu0
          %v4012 = vadd.f32 0.0, %v4011
          %4013 = vmatmul.f32.gmra.mxu0 %v3902
          %v4014 = vpop.f32.mrf.mxu0
          %v4015 = vadd.f32 0.0, %v4014
          %4016 = vmatmul.f32.gmra.mxu0 %v3905
          %v4017 = vpop.f32.mrf.mxu0
          %v4018 = vadd.f32 0.0, %v4017
          %4019 = vmatmul.f32.gmra.mxu0 %v3908
          %v4020 = vpop.f32.mrf.mxu0
          %v4021 = vadd.f32 0.0, %v4020
          %4022 = vmatmul.f32.gmra.mxu0 %v3911
          %v4023 = vpop.f32.mrf.mxu0
          %v4024 = vadd.f32 0.0, %v4023
          %4025 = vmatmul.f32.gmra.mxu0 %v3914
          %v4026 = vpop.f32.mrf.mxu0
          %v4027 = vadd.f32 0.0, %v4026
          %4028 = vmatmul.f32.gmra.mxu0 %v3917
          %v4029 = vpop.f32.mrf.mxu0
          %v4030 = vadd.f32 0.0, %v4029
          %4031 = vmatmul.f32.gmra.mxu0 %v3920
          %v4032 = vpop.f32.mrf.mxu0
          %v4033 = vadd.f32 0.0, %v4032
          %4034 = vmatmul.f32.gmra.mxu0 %v3923
          %v4035 = vpop.f32.mrf.mxu0
          %v4036 = vadd.f32 0.0, %v4035
          %4037 = vmatmul.f32.gmra.mxu0 %v3926
          %v4038 = vpop.f32.mrf.mxu0
          %v4039 = vadd.f32 0.0, %v4038
          %4040 = vmatmul.f32.gmra.mxu0 %v3929
          %v4041 = vpop.f32.mrf.mxu0
          %v4042 = vadd.f32 0.0, %v4041
          %4043 = vmatmul.f32.gmra.mxu0 %v3932
          %v4044 = vpop.f32.mrf.mxu0
          %v4045 = vadd.f32 0.0, %v4044
          %4046 = vmatmul.f32.gmra.mxu0 %v3935
          %v4047 = vpop.f32.mrf.mxu0
          %v4048 = vadd.f32 0.0, %v4047
          %4049 = vmatmul.f32.gmra.mxu0 %v3938
          %v4050 = vpop.f32.mrf.mxu0
          %v4051 = vadd.f32 0.0, %v4050
          %4052 = vmatmul.f32.gmra.mxu0 %v3941
          %v4053 = vpop.f32.mrf.mxu0
          %v4054 = vadd.f32 0.0, %v4053
          %4055 = vmatmul.f32.gmra.mxu0 %v3944
          %v4056 = vpop.f32.mrf.mxu0
          %v4057 = vadd.f32 0.0, %v4056
          %4058 = vmatmul.f32.gmra.mxu0 %v3947
          %v4059 = vpop.f32.mrf.mxu0
          %v4060 = vadd.f32 0.0, %v4059
          %4061 = vmatmul.f32.gmra.mxu0 %v3950
          %v4062 = vpop.f32.mrf.mxu0
          %v4063 = vadd.f32 0.0, %v4062
          %4064 = vmatmul.f32.gmra.mxu0 %v3953
          %v4065 = vpop.f32.mrf.mxu0
          %v4066 = vadd.f32 0.0, %v4065
          %4067 = vmatmul.f32.gmra.mxu0 %v3956
          %v4068 = vpop.f32.mrf.mxu0
          %v4069 = vadd.f32 0.0, %v4068
          %4070 = vmatmul.f32.gmra.mxu0 %v3959
          %v4071 = vpop.f32.mrf.mxu0
          %v4072 = vadd.f32 0.0, %v4071
          %4073 = vdwg.mxu0
          %v4075 = vsel %vm2507, %v3825, 0
          %v4078 = vsel %vm2507, %v3826, 0
          %v4081 = vsel %vm2507, %v3827, 0
          %v4084 = vsel %vm2507, %v3828, 0
          %v4087 = vsel %vm2507, %v3829, 0
          %v4090 = vsel %vm2507, %v3830, 0
          %v4093 = vsel %vm2507, %v3831, 0
          %v4096 = vsel %vm2507, %v3832, 0
          %v4099 = vsel %vm2507, %v3833, 0
          %v4102 = vsel %vm2507, %v3834, 0
          %v4105 = vsel %vm2507, %v3835, 0
          %v4108 = vsel %vm2507, %v3836, 0
          %v4111 = vsel %vm2507, %v3837, 0
          %v4114 = vsel %vm2507, %v3838, 0
          %v4117 = vsel %vm2507, %v3839, 0
          %v4120 = vsel %vm2507, %v3840, 0
          %v4123 = vsel %vm2507, %v3841, 0
          %v4126 = vsel %vm2507, %v3842, 0
          %v4129 = vsel %vm2507, %v3843, 0
          %v4132 = vsel %vm2507, %v3844, 0
          %v4135 = vsel %vm2507, %v3845, 0
          %v4138 = vsel %vm2507, %v3846, 0
          %v4141 = vsel %vm2507, %v3847, 0
          %v4144 = vsel %vm2507, %v3848, 0
          %v4147 = vsel %vm2507, %v3849, 0
          %v4150 = vsel %vm2507, %v3850, 0
          %v4153 = vsel %vm2507, %v3851, 0
          %v4156 = vsel %vm2507, %v3852, 0
          %v4159 = vsel %vm2507, %v3853, 0
          %v4162 = vsel %vm2507, %v3854, 0
          %v4165 = vsel %vm2507, %v3855, 0
          %v4168 = vsel %vm2507, %v3856, 0
          %4170 = vmatpush.msra.mxu0 0.0
          %4171 = vmatpush.msra.mxu0 0.0
          %4172 = vmatpush.msra.mxu0 0.0
          %4173 = vmatpush.msra.mxu0 0.0
          %4174 = vmatpush.msra.mxu0 0.0
          %4175 = vmatpush.msra.mxu0 0.0
          %4176 = vmatpush.msra.mxu0 0.0
          %4177 = vmatpush.msra.mxu0 0.0
          %4178 = vmatpush.msra.mxu0 0.0
          %4179 = vmatpush.msra.mxu0 0.0
          %4180 = vmatpush.msra.mxu0 0.0
          %4181 = vmatpush.msra.mxu0 0.0
          %4182 = vmatpush.msra.mxu0 %v3860
          %4183 = vmatpush.msra.mxu0 %v3859
          %4184 = vmatpush.msra.mxu0 %v3858
          %4185 = vmatpush.msra.mxu0 %v3857
          %4186 = vmatmul.f32.gmra.mxu0 %v4075
          %v4187 = vpop.f32.mrf.mxu0
          %v4188 = vadd.f32 %v3979, %v4187
          %4189 = vmatmul.f32.gmra.mxu0 %v4078
          %v4190 = vpop.f32.mrf.mxu0
          %v4191 = vadd.f32 %v3982, %v4190
          %4192 = vmatmul.f32.gmra.mxu0 %v4081
          %v4193 = vpop.f32.mrf.mxu0
          %v4194 = vadd.f32 %v3985, %v4193
          %4195 = vmatmul.f32.gmra.mxu0 %v4084
          %v4196 = vpop.f32.mrf.mxu0
          %v4197 = vadd.f32 %v3988, %v4196
          %4198 = vmatmul.f32.gmra.mxu0 %v4087
          %v4199 = vpop.f32.mrf.mxu0
          %v4200 = vadd.f32 %v3991, %v4199
          %4201 = vmatmul.f32.gmra.mxu0 %v4090
          %v4202 = vpop.f32.mrf.mxu0
          %v4203 = vadd.f32 %v3994, %v4202
          %4204 = vmatmul.f32.gmra.mxu0 %v4093
          %v4205 = vpop.f32.mrf.mxu0
          %v4206 = vadd.f32 %v3997, %v4205
          %4207 = vmatmul.f32.gmra.mxu0 %v4096
          %v4208 = vpop.f32.mrf.mxu0
          %v4209 = vadd.f32 %v4000, %v4208
          %4210 = vmatmul.f32.gmra.mxu0 %v4099
          %v4211 = vpop.f32.mrf.mxu0
          %v4212 = vadd.f32 %v4003, %v4211
          %4213 = vmatmul.f32.gmra.mxu0 %v4102
          %v4214 = vpop.f32.mrf.mxu0
          %v4215 = vadd.f32 %v4006, %v4214
          %4216 = vmatmul.f32.gmra.mxu0 %v4105
          %v4217 = vpop.f32.mrf.mxu0
          %v4218 = vadd.f32 %v4009, %v4217
          %4219 = vmatmul.f32.gmra.mxu0 %v4108
          %v4220 = vpop.f32.mrf.mxu0
          %v4221 = vadd.f32 %v4012, %v4220
          %4222 = vmatmul.f32.gmra.mxu0 %v4111
          %v4223 = vpop.f32.mrf.mxu0
          %v4224 = vadd.f32 %v4015, %v4223
          %4225 = vmatmul.f32.gmra.mxu0 %v4114
          %v4226 = vpop.f32.mrf.mxu0
          %v4227 = vadd.f32 %v4018, %v4226
          %4228 = vmatmul.f32.gmra.mxu0 %v4117
          %v4229 = vpop.f32.mrf.mxu0
          %v4230 = vadd.f32 %v4021, %v4229
          %4231 = vmatmul.f32.gmra.mxu0 %v4120
          %v4232 = vpop.f32.mrf.mxu0
          %v4233 = vadd.f32 %v4024, %v4232
          %4234 = vmatmul.f32.gmra.mxu0 %v4123
          %v4235 = vpop.f32.mrf.mxu0
          %v4236 = vadd.f32 %v4027, %v4235
          %4237 = vmatmul.f32.gmra.mxu0 %v4126
          %v4238 = vpop.f32.mrf.mxu0
          %v4239 = vadd.f32 %v4030, %v4238
          %4240 = vmatmul.f32.gmra.mxu0 %v4129
          %v4241 = vpop.f32.mrf.mxu0
          %v4242 = vadd.f32 %v4033, %v4241
          %4243 = vmatmul.f32.gmra.mxu0 %v4132
          %v4244 = vpop.f32.mrf.mxu0
          %v4245 = vadd.f32 %v4036, %v4244
          %4246 = vmatmul.f32.gmra.mxu0 %v4135
          %v4247 = vpop.f32.mrf.mxu0
          %v4248 = vadd.f32 %v4039, %v4247
          %4249 = vmatmul.f32.gmra.mxu0 %v4138
          %v4250 = vpop.f32.mrf.mxu0
          %v4251 = vadd.f32 %v4042, %v4250
          %4252 = vmatmul.f32.gmra.mxu0 %v4141
          %v4253 = vpop.f32.mrf.mxu0
          %v4254 = vadd.f32 %v4045, %v4253
          %4255 = vmatmul.f32.gmra.mxu0 %v4144
          %v4256 = vpop.f32.mrf.mxu0
          %v4257 = vadd.f32 %v4048, %v4256
          %4258 = vmatmul.f32.gmra.mxu0 %v4147
          %v4259 = vpop.f32.mrf.mxu0
          %v4260 = vadd.f32 %v4051, %v4259
          %4261 = vmatmul.f32.gmra.mxu0 %v4150
          %v4262 = vpop.f32.mrf.mxu0
          %v4263 = vadd.f32 %v4054, %v4262
          %4264 = vmatmul.f32.gmra.mxu0 %v4153
          %v4265 = vpop.f32.mrf.mxu0
          %v4266 = vadd.f32 %v4057, %v4265
          %4267 = vmatmul.f32.gmra.mxu0 %v4156
          %v4268 = vpop.f32.mrf.mxu0
          %v4269 = vadd.f32 %v4060, %v4268
          %4270 = vmatmul.f32.gmra.mxu0 %v4159
          %v4271 = vpop.f32.mrf.mxu0
          %v4272 = vadd.f32 %v4063, %v4271
          %4273 = vmatmul.f32.gmra.mxu0 %v4162
          %v4274 = vpop.f32.mrf.mxu0
          %v4275 = vadd.f32 %v4066, %v4274
          %4276 = vmatmul.f32.gmra.mxu0 %v4165
          %v4277 = vpop.f32.mrf.mxu0
          %v4278 = vadd.f32 %v4069, %v4277
          %4279 = vmatmul.f32.gmra.mxu0 %v4168
          %v4280 = vpop.f32.mrf.mxu0
          %v4281 = vadd.f32 %v4072, %v4280
          %4282 = vdwg.mxu0
          %v4283 = vld [vmem:[%s5] sm:$0x1]
          %v4285 = vperm.slane %v4283, 0
          %v4287 = vadd.f32 %v4188, %v4285
          %v4288 = vadd.f32 %v4191, %v4285
          %v4289 = vadd.f32 %v4194, %v4285
          %v4290 = vadd.f32 %v4197, %v4285
          %v4291 = vadd.f32 %v4200, %v4285
          %v4292 = vadd.f32 %v4203, %v4285
          %v4293 = vadd.f32 %v4206, %v4285
          %v4294 = vadd.f32 %v4209, %v4285
          %v4295 = vadd.f32 %v4212, %v4285
          %v4296 = vadd.f32 %v4215, %v4285
          %v4297 = vadd.f32 %v4218, %v4285
          %v4298 = vadd.f32 %v4221, %v4285
          %v4299 = vadd.f32 %v4224, %v4285
          %v4300 = vadd.f32 %v4227, %v4285
          %v4301 = vadd.f32 %v4230, %v4285
          %v4302 = vadd.f32 %v4233, %v4285
          %v4303 = vadd.f32 %v4236, %v4285
          %v4304 = vadd.f32 %v4239, %v4285
          %v4305 = vadd.f32 %v4242, %v4285
          %v4306 = vadd.f32 %v4245, %v4285
          %v4307 = vadd.f32 %v4248, %v4285
          %v4308 = vadd.f32 %v4251, %v4285
          %v4309 = vadd.f32 %v4254, %v4285
          %v4310 = vadd.f32 %v4257, %v4285
          %v4311 = vadd.f32 %v4260, %v4285
          %v4312 = vadd.f32 %v4263, %v4285
          %v4313 = vadd.f32 %v4266, %v4285
          %v4314 = vadd.f32 %v4269, %v4285
          %v4315 = vadd.f32 %v4272, %v4285
          %v4316 = vadd.f32 %v4275, %v4285
          %v4317 = vadd.f32 %v4278, %v4285
          %v4318 = vadd.f32 %v4281, %v4285
          %4319 = vst [vmem:[%s438] sm:$0xff] %v4287
          %4320 = vst [vmem:[%s438 + $0x8] sm:$0xff] %v4288
          %4321 = vst [vmem:[%s438 + $0x10] sm:$0xff] %v4289
          %4322 = vst [vmem:[%s438 + $0x18] sm:$0xff] %v4290
          %4323 = vst [vmem:[%s438 + $0x20] sm:$0xff] %v4291
          %4324 = vst [vmem:[%s438 + $0x28] sm:$0xff] %v4292
          %4325 = vst [vmem:[%s438 + $0x30] sm:$0xff] %v4293
          %4326 = vst [vmem:[%s438 + $0x38] sm:$0xff] %v4294
          %4327 = vst [vmem:[%s438 + $0x40] sm:$0xff] %v4295
          %4328 = vst [vmem:[%s438 + $0x48] sm:$0xff] %v4296
          %4329 = vst [vmem:[%s438 + $0x50] sm:$0xff] %v4297
          %4330 = vst [vmem:[%s438 + $0x58] sm:$0xff] %v4298
          %4331 = vst [vmem:[%s438 + $0x60] sm:$0xff] %v4299
          %4332 = vst [vmem:[%s438 + $0x68] sm:$0xff] %v4300
          %4333 = vst [vmem:[%s438 + $0x70] sm:$0xff] %v4301
          %4334 = vst [vmem:[%s438 + $0x78] sm:$0xff] %v4302
          %4335 = vst [vmem:[%s438 + $0x80] sm:$0xff] %v4303
          %4336 = vst [vmem:[%s438 + $0x88] sm:$0xff] %v4304
          %4337 = vst [vmem:[%s438 + $0x90] sm:$0xff] %v4305
          %4338 = vst [vmem:[%s438 + $0x98] sm:$0xff] %v4306
          %4339 = vst [vmem:[%s438 + $0xa0] sm:$0xff] %v4307
          %4340 = vst [vmem:[%s438 + $0xa8] sm:$0xff] %v4308
          %4341 = vst [vmem:[%s438 + $0xb0] sm:$0xff] %v4309
          %4342 = vst [vmem:[%s438 + $0xb8] sm:$0xff] %v4310
          %4343 = vst [vmem:[%s438 + $0xc0] sm:$0xff] %v4311
          %4344 = vst [vmem:[%s438 + $0xc8] sm:$0xff] %v4312
          %4345 = vst [vmem:[%s438 + $0xd0] sm:$0xff] %v4313
          %4346 = vst [vmem:[%s438 + $0xd8] sm:$0xff] %v4314
          %4347 = vst [vmem:[%s438 + $0xe0] sm:$0xff] %v4315
          %4348 = vst [vmem:[%s438 + $0xe8] sm:$0xff] %v4316
          %4349 = vst [vmem:[%s438 + $0xf0] sm:$0xff] %v4317
          %4350 = vst [vmem:[%s438 + $0xf8] sm:$0xff] %v4318
        $region75: #{gcn_layer.1} parent=62 // pred_fallthru
          _
        %s4351 = smul.u32 32, %s21
        %p4352 = scmp.lt.s32.totalorder %s4351, 63
        %s4353 = scalar_select %p4352, %s4351, 63
        %s4354 = smul.addr %s4353, 8
        %s4355 = scalar_lea.vmem %s6, %s4354
        // Predicated region
        $region76: #{gcn_layer.1} parent=62 // pred_check
          %p4356 = pneg %p185
        $region77: #{gcn_layer.1} parent=62 // pred_check_branch
          %4358 = sbr.rel (%p4356) target = $region79
        $region78: #{gcn_layer.1} parent=62 // pred_region
          %s4359 = smul.u32 32, %s21
        $region79: #{gcn_layer.1} parent=62 // pred_fallthru
          _
      $region63: #{gcn_layer.1} parent=5 // pred_fallthru
        _
      %p4360 = scmp.le.s32.totalorder 2, %s12
      // Predicated region
      $region80: #{gcn_layer.1} parent=5 // pred_check
        %p4361 = pneg %p4360
      $region81: #{gcn_layer.1} parent=5 // pred_check_branch
        %4363 = sbr.rel (%p4361) target = $region83
      $region82: #{gcn_layer.1} parent=5 // pred_region
        %s4364 = ssub.s32 %s12, 2
        // Predicated region
        $region84: #{gcn_layer.1} parent=82 // pred_check
          %p4365 = pneg %p191
        $region85: #{gcn_layer.1} parent=82 // pred_check_branch
          %4367 = sbr.rel (%p4365) target = $region87
        $region86: #{gcn_layer.1} parent=82 // pred_region
          %s4368 = smul.u32 32, %s23
          %p4369 = scmp.lt.s32.totalorder %s4368, 63
          %s4370 = scalar_select %p4369, %s4368, 63
          %s4371 = smul.addr %s4370, 8
          %s4372 = scalar_lea.vmem %s6, %s4371
        $region87: #{gcn_layer.1} parent=82 // pred_fallthru
          _
      $region83: #{gcn_layer.1} parent=5 // pred_fallthru
        _
    $region6: #{gcn_layer.1} parent=1 // loop_footer
      %s16 = sadd.s32 1, %s12
    $region7: #{gcn_layer.1} parent=1 // loop_footer_branch
      %11 = sbr.rel target = $region3
    $region8: #{gcn_layer.1} parent=1 // loop_exit
      _

</llo_original>
